<compile_context>
chip_gen: v7x
topology: tpu7x:2x2x1
jax: 0.10.0
libtpu: 0.0.40
codegen_flags: <defaults>
</compile_context>

<pallas_src>
import functools

import numpy as np
import jax
import jax.numpy as jnp
from jax.experimental import pallas as pl
from jax.experimental.pallas import tpu as pltpu


# ----------------------------------------------------------------------------
# Fused forward kernel (one batch tile per grid step; everything in VMEM).
# ----------------------------------------------------------------------------
def _simple_cnn_kernel(x_ref, w1_ref, b1_ref, s1_ref,
                       w2_ref, b2_ref, s2_ref,
                       wf1_ref, bf1_ref, wf2_ref, bf2_ref, wf3_ref, bf3_ref,
                       out_ref, *, tb):
    f32, bf16 = jnp.float32, jnp.bfloat16
    x = x_ref[...]                                            # (tb, 28, 32) f32; cols 28..31 = 0

    # ---- conv1: ONE wide-K banded matmul (K = 5*32 = 160), bf16 operands, f32 acc ------
    lhs1 = jnp.concatenate([x[:, i:i + 24, :] for i in range(5)], axis=-1)   # (tb, 24, 160)
    lhs1 = lhs1.reshape(tb * 24, 160).astype(bf16)
    z = jnp.dot(lhs1, w1_ref[...], preferred_element_type=f32) + b1_ref[...]
    z = jnp.maximum(z, 0.0)                                   # (tb*24, 256); lanes >=144 are 0

    # ---- pool1 width: symmetric XLU lane-rolls + max, then ONE selection matmul --------
    # zm[j] = max(z[j-3], z[j+3]); S1 selects j = 12*pw + c + 3  ->  max over ow = 2pw, 2pw+1
    zm = jnp.maximum(pltpu.roll(z, shift=3, axis=1),
                     pltpu.roll(z, shift=256 - 3, axis=1))
    zw = jnp.dot(zm.astype(bf16), s1_ref[...], preferred_element_type=f32)   # (tb*24, 80)

    # ---- pool1 height: max over sublane row pairs (contiguous slices; lowers cleanly) --
    zw = zw.reshape(tb, 24, 80)
    p1 = jnp.concatenate(
        [jnp.maximum(zw[:, 2 * r:2 * r + 1, :], zw[:, 2 * r + 1:2 * r + 2, :])
         for r in range(12)], axis=1)                         # (tb, 12, 80)

    # ---- conv2: ONE wide-K banded matmul (K = 5*80 = 400) -------------------------------
    lhs2 = jnp.concatenate([p1[:, i:i + 8, :] for i in range(5)], axis=-1)   # (tb, 8, 400)
    lhs2 = lhs2.reshape(tb * 8, 400).astype(bf16)
    y = jnp.dot(lhs2, w2_ref[...], preferred_element_type=f32) + b2_ref[...]
    y = jnp.maximum(y, 0.0)                                   # (tb*8, 128) - lane dense

    # ---- pool2 width: rolls + max + one selection matmul --------------------------------
    # ym[j] = max(y[j-8], y[j+8]); S2 selects j = 32*pw + c + 8  ->  max over ow2 = 2pw, 2pw+1
    ym = jnp.maximum(pltpu.roll(y, shift=8, axis=1),
                     pltpu.roll(y, shift=128 - 8, axis=1))
    yw = jnp.dot(ym.astype(bf16), s2_ref[...], preferred_element_type=f32)   # (tb*8, 64)
    yw = yw.reshape(tb, 8, 64)

    # ---- pool2 height + flatten: lane-concat the 4 pooled rows (fc1 rows pre-permuted) --
    flat = jnp.concatenate(
        [jnp.maximum(yw[:, 2 * r:2 * r + 1, :], yw[:, 2 * r + 1:2 * r + 2, :])
         for r in range(4)], axis=2)                          # (tb, 1, 256)
    flat = flat.reshape(tb, 256).astype(bf16)

    # ---- fc1 / fc2 / fc3 (N padded to lane-dense 128; pads are zero) --------------------
    h = jnp.maximum(jnp.dot(flat, wf1_ref[...], preferred_element_type=f32) + bf1_ref[...], 0.0)
    h = jnp.maximum(jnp.dot(h.astype(bf16), wf2_ref[...],
                            preferred_element_type=f32) + bf2_ref[...], 0.0)
    o = jnp.dot(h.astype(bf16), wf3_ref[...], preferred_element_type=f32) + bf3_ref[...]
    out_ref[...] = o.astype(out_ref.dtype)                    # (tb, 128) lane-dense store


# ----------------------------------------------------------------------------
# Host-side weight packing (done once, outside jit).  Params are PyTorch layout.
# Matmul weights / selection matrices are stored bf16; biases stay f32.
# ----------------------------------------------------------------------------
def pack_params(p):
    f32 = np.float32
    w1 = np.asarray(p["conv1_w"], f32)      # (6, 1, 5, 5)
    b1 = np.asarray(p["conv1_b"], f32)      # (6,)
    w2 = np.asarray(p["conv2_w"], f32)      # (16, 6, 5, 5)
    b2 = np.asarray(p["conv2_b"], f32)      # (16,)
    f1w = np.asarray(p["fc1_w"], f32)       # (120, 256)  PyTorch (out, in)
    f1b = np.asarray(p["fc1_b"], f32)
    f2w = np.asarray(p["fc2_w"], f32)       # (84, 120)
    f2b = np.asarray(p["fc2_b"], f32)
    f3w = np.asarray(p["fc3_w"], f32)       # (10, 84)
    f3b = np.asarray(p["fc3_b"], f32)

    # conv1 merged banded matrix: W1[i*32 + w, ow*6 + co] = w1[co,0,i,w-ow], N padded to 256
    W1 = np.zeros((5 * 32, 256), f32)
    for i in range(5):
        for kw in range(5):
            for ow in range(24):
                W1[i * 32 + ow + kw, ow * 6:(ow + 1) * 6] = w1[:, 0, i, kw]
    b1row = np.zeros((1, 256), f32)
    b1row[0, :144] = np.tile(b1, 24)

    # pool1 width-selection (after symmetric +/-3 lane roll): S1[12*pw + c + 3, pw*6 + c] = 1
    S1 = np.zeros((256, 80), f32)
    for pw in range(12):
        for c in range(6):
            S1[12 * pw + c + 3, pw * 6 + c] = 1.0

    # conv2 merged banded matrix: W2[i*80 + pw*6 + ci, ow*16 + co] = w2[co,ci,i,pw-ow]
    W2 = np.zeros((5 * 80, 128), f32)
    for i in range(5):
        for kw in range(5):
            for ow in range(8):
                pw = ow + kw
                W2[i * 80 + pw * 6:i * 80 + (pw + 1) * 6,
                   ow * 16:(ow + 1) * 16] = w2[:, :, i, kw].T
    b2row = np.tile(b2, 8).reshape(1, 128)

    # pool2 width-selection (after symmetric +/-8 lane roll): S2[32*pw + c + 8, pw*16 + c] = 1
    S2 = np.zeros((128, 64), f32)
    for pw in range(4):
        for c in range(16):
            S2[32 * pw + c + 8, pw * 16 + c] = 1.0

    # fc1: permute rows from PyTorch feature order (co*16 + ph*4 + pw) to the kernel's
    # flatten order (ph*64 + pw*16 + co); pad N 120 -> 128 with zero columns.
    WF1 = np.zeros((256, 128), f32)
    f1wt = f1w.T                                    # (256, 120), row = PyTorch feature idx
    for s in range(4):
        for pw in range(4):
            for c in range(16):
                WF1[s * 64 + pw * 16 + c, :120] = f1wt[c * 16 + s * 4 + pw, :]
    BF1 = np.zeros((1, 128), f32); BF1[0, :120] = f1b

    WF2 = np.zeros((128, 128), f32); WF2[:120, :84] = f2w.T
    BF2 = np.zeros((1, 128), f32);   BF2[0, :84] = f2b
    WF3 = np.zeros((128, 128), f32); WF3[:84, :10] = f3w.T
    BF3 = np.zeros((1, 128), f32);   BF3[0, :10] = f3b

    bf16 = jnp.bfloat16
    return {
        "W1": jnp.asarray(W1, bf16), "b1row": jnp.asarray(b1row),
        "S1": jnp.asarray(S1, bf16),
        "W2": jnp.asarray(W2, bf16), "b2row": jnp.asarray(b2row),
        "S2": jnp.asarray(S2, bf16),
        "WF1": jnp.asarray(WF1, bf16), "BF1": jnp.asarray(BF1),
        "WF2": jnp.asarray(WF2, bf16), "BF2": jnp.asarray(BF2),
        "WF3": jnp.asarray(WF3, bf16), "BF3": jnp.asarray(BF3),
    }


def _round_up(n, m):
    return (n + m - 1) // m * m


@functools.partial(jax.jit, static_argnames=("block_b",))
def simple_cnn_forward(packed, x_nchw, block_b=128):
    x = x_nchw.astype(jnp.float32)
    B = x.shape[0]
    assert x.shape[1:] == (1, 28, 28), x.shape

    # Batch-tile selection: as large as block_b (amortizes per-step overhead), multiple of
    # 8, but keep >= 2 grid steps when the batch allows it so v7x's 2nd TensorCore is used.
    b8 = _round_up(B, 8)
    tb = min(block_b, b8)
    if b8 // tb < 2 and b8 >= 16:
        tb = _round_up(b8 // 2, 8)
    pb = _round_up(B, tb)

    x = x.reshape(B, 28, 28)
    x = jnp.pad(x, ((0, pb - B), (0, 0), (0, 4)))          # pad batch + W 28->32 (K align)

    def full(shape):
        return pl.BlockSpec(shape, lambda i, _s=shape: (0,) * len(_s))

    out = pl.pallas_call(
        functools.partial(_simple_cnn_kernel, tb=tb),
        out_shape=jax.ShapeDtypeStruct((pb, 128), jnp.float32),
        grid=(pb // tb,),
        in_specs=[
            pl.BlockSpec((tb, 28, 32), lambda i: (i, 0, 0)),
            full((160, 256)), full((1, 256)),
            full((256, 80)),
            full((400, 128)), full((1, 128)),
            full((128, 64)),
            full((256, 128)), full((1, 128)),
            full((128, 128)), full((1, 128)),
            full((128, 128)), full((1, 128)),
        ],
        out_specs=pl.BlockSpec((tb, 128), lambda i: (i, 0)),
        compiler_params=pltpu.CompilerParams(
            dimension_semantics=("parallel",),
            vmem_limit_bytes=32 * 1024 * 1024,
        ),
    )(x, packed["W1"], packed["b1row"], packed["S1"],
      packed["W2"], packed["b2row"], packed["S2"],
      packed["WF1"], packed["BF1"], packed["WF2"], packed["BF2"],
      packed["WF3"], packed["BF3"])
    return out[:B, :10]


# ----------------------------------------------------------------------------
# Parameter init (PyTorch layout, PyTorch-like uniform(-1/sqrt(fan_in), +)).
# ----------------------------------------------------------------------------
def init_params(seed=42):
    ks = jax.random.split(jax.random.PRNGKey(seed), 10)

    def u(k, shape, fan_in):
        b = 1.0 / np.sqrt(fan_in)
        return jax.random.uniform(k, shape, jnp.float32, -b, b)

    return {
        "conv1_w": u(ks[0], (6, 1, 5, 5), 25),   "conv1_b": u(ks[1], (6,), 25),
        "conv2_w": u(ks[2], (16, 6, 5, 5), 150), "conv2_b": u(ks[3], (16,), 150),
        "fc1_w":   u(ks[4], (120, 256), 256),    "fc1_b":   u(ks[5], (120,), 256),
        "fc2_w":   u(ks[6], (84, 120), 120),     "fc2_b":   u(ks[7], (84,), 120),
        "fc3_w":   u(ks[8], (10, 84), 84),       "fc3_b":   u(ks[9], (10,), 84),
    }


# Pure-JAX f32 reference (mirrors SimpleCNN.forward exactly) for a correctness check.
def _reference_forward(p, x_nchw):
    hi = jax.lax.Precision.HIGHEST
    x = x_nchw.astype(jnp.float32)

    def conv(v, w, b):
        o = jax.lax.conv_general_dilated(v, w, (1, 1), "VALID",
                                         dimension_numbers=("NCHW", "OIHW", "NCHW"),
                                         precision=hi)
        return o + b[None, :, None, None]

    def pool(v):
        B, C, H, W = v.shape
        return jnp.max(v.reshape(B, C, H // 2, 2, W // 2, 2), axis=(3, 5))

    x = pool(jax.nn.relu(conv(x, p["conv1_w"], p["conv1_b"])))
    x = pool(jax.nn.relu(conv(x, p["conv2_w"], p["conv2_b"])))
    x = x.reshape(x.shape[0], 256)                              # NCHW flatten = view(-1, 256)
    x = jax.nn.relu(jnp.dot(x, p["fc1_w"].T, precision=hi) + p["fc1_b"])
    x = jax.nn.relu(jnp.dot(x, p["fc2_w"].T, precision=hi) + p["fc2_b"])
    return jnp.dot(x, p["fc3_w"].T, precision=hi) + p["fc3_b"]


if __name__ == "__main__":
    params = init_params(seed=42)
    packed = pack_params(params)
    x = jax.random.normal(jax.random.PRNGKey(0), (2, 1, 28, 28), jnp.float32)

    out = jax.block_until_ready(simple_cnn_forward(packed, x))
    assert out.shape == (2, 10), out.shape
    assert out.dtype == jnp.float32

    ref = jax.block_until_ready(_reference_forward(params, x))
    max_err = float(jnp.max(jnp.abs(out - ref)))
    # Tolerance relaxed vs the all-f32 version: matmul operands are bf16 (f32 accumulate).
    assert max_err < 5e-2, f"kernel/reference mismatch: max|diff| = {max_err}"
    print("KERNEL_OK")
</pallas_src>

<mosaic_0001>
module attributes {stable_mosaic.version = 11 : i64} {
  func.func @_simple_cnn_kernel(%arg0: i32, %arg1: memref<8x28x32xf32, #tpu.memory_space<vmem>>, %arg2: memref<160x256xbf16, #tpu.memory_space<vmem>>, %arg3: memref<1x256xf32, #tpu.memory_space<vmem>>, %arg4: memref<256x80xbf16, #tpu.memory_space<vmem>>, %arg5: memref<400x128xbf16, #tpu.memory_space<vmem>>, %arg6: memref<1x128xf32, #tpu.memory_space<vmem>>, %arg7: memref<128x64xbf16, #tpu.memory_space<vmem>>, %arg8: memref<256x128xbf16, #tpu.memory_space<vmem>>, %arg9: memref<1x128xf32, #tpu.memory_space<vmem>>, %arg10: memref<128x128xbf16, #tpu.memory_space<vmem>>, %arg11: memref<1x128xf32, #tpu.memory_space<vmem>>, %arg12: memref<128x128xbf16, #tpu.memory_space<vmem>>, %arg13: memref<1x128xf32, #tpu.memory_space<vmem>>, %arg14: memref<8x128xf32, #tpu.memory_space<vmem>>) attributes {dimension_semantics = [#tpu.dimension_semantics<parallel>], iteration_bounds = array<i64: 1>, scalar_prefetch = 0 : i64, scratch_operands = 0 : i64, tpu.core_type = #tpu.core_type<tc>, window_params = [{transform_indices = @transform_0, window_bounds = array<i64: 8, 28, 32>}, {pipeline_mode = #tpu.pipeline_mode<synchronous>, transform_indices = @transform_1, window_bounds = array<i64: 160, 256>}, {pipeline_mode = #tpu.pipeline_mode<synchronous>, transform_indices = @transform_2, window_bounds = array<i64: 1, 256>}, {pipeline_mode = #tpu.pipeline_mode<synchronous>, transform_indices = @transform_3, window_bounds = array<i64: 256, 80>}, {pipeline_mode = #tpu.pipeline_mode<synchronous>, transform_indices = @transform_4, window_bounds = array<i64: 400, 128>}, {pipeline_mode = #tpu.pipeline_mode<synchronous>, transform_indices = @transform_5, window_bounds = array<i64: 1, 128>}, {pipeline_mode = #tpu.pipeline_mode<synchronous>, transform_indices = @transform_6, window_bounds = array<i64: 128, 64>}, {pipeline_mode = #tpu.pipeline_mode<synchronous>, transform_indices = @transform_7, window_bounds = array<i64: 256, 128>}, {pipeline_mode = #tpu.pipeline_mode<synchronous>, transform_indices = @transform_8, window_bounds = array<i64: 1, 128>}, {pipeline_mode = #tpu.pipeline_mode<synchronous>, transform_indices = @transform_9, window_bounds = array<i64: 128, 128>}, {pipeline_mode = #tpu.pipeline_mode<synchronous>, transform_indices = @transform_10, window_bounds = array<i64: 1, 128>}, {pipeline_mode = #tpu.pipeline_mode<synchronous>, transform_indices = @transform_11, window_bounds = array<i64: 128, 128>}, {pipeline_mode = #tpu.pipeline_mode<synchronous>, transform_indices = @transform_12, window_bounds = array<i64: 1, 128>}, {transform_indices = @transform_13, window_bounds = array<i64: 8, 128>}]} {
    %c0 = arith.constant 0 : index
    %c0_0 = arith.constant 0 : index
    %c0_1 = arith.constant 0 : index
    %0 = vector.load %arg1[%c0, %c0_0, %c0_1] : memref<8x28x32xf32, #tpu.memory_space<vmem>>, vector<8x28x32xf32>
    %1 = vector.extract_strided_slice %0 {offsets = [0, 0, 0], sizes = [8, 24, 32], strides = [1, 1, 1]} : vector<8x28x32xf32> to vector<8x24x32xf32>
    %2 = vector.extract_strided_slice %0 {offsets = [0, 1, 0], sizes = [8, 24, 32], strides = [1, 1, 1]} : vector<8x28x32xf32> to vector<8x24x32xf32>
    %3 = vector.extract_strided_slice %0 {offsets = [0, 2, 0], sizes = [8, 24, 32], strides = [1, 1, 1]} : vector<8x28x32xf32> to vector<8x24x32xf32>
    %4 = vector.extract_strided_slice %0 {offsets = [0, 3, 0], sizes = [8, 24, 32], strides = [1, 1, 1]} : vector<8x28x32xf32> to vector<8x24x32xf32>
    %5 = vector.extract_strided_slice %0 {offsets = [0, 4, 0], sizes = [8, 24, 32], strides = [1, 1, 1]} : vector<8x28x32xf32> to vector<8x24x32xf32>
    %6 = tpu.concatenate %1, %2, %3, %4, %5 in 2 : vector<8x24x32xf32>, vector<8x24x32xf32>, vector<8x24x32xf32>, vector<8x24x32xf32>, vector<8x24x32xf32> -> vector<8x24x160xf32>
    %7 = vector.shape_cast %6 : vector<8x24x160xf32> to vector<192x160xf32>
    %8 = arith.truncf %7 : vector<192x160xf32> to vector<192x160xbf16>
    %c0_2 = arith.constant 0 : index
    %c0_3 = arith.constant 0 : index
    %9 = vector.load %arg2[%c0_2, %c0_3] : memref<160x256xbf16, #tpu.memory_space<vmem>>, vector<160x256xbf16>
    %cst = arith.constant dense<0.000000e+00> : vector<192x256xf32>
    %10 = tpu.matmul %8, %9, %cst {dimension_numbers = #tpu.dot_dimension_numbers<[1], [0], [0], [1], [0, 0, 1, 1], [], []>} : vector<192x160xbf16>, vector<160x256xbf16>, vector<192x256xf32> -> vector<192x256xf32>
    %c0_4 = arith.constant 0 : index
    %c0_5 = arith.constant 0 : index
    %11 = vector.load %arg3[%c0_4, %c0_5] : memref<1x256xf32, #tpu.memory_space<vmem>>, vector<1x256xf32>
    %12 = vector.broadcast %11 : vector<1x256xf32> to vector<192x256xf32>
    %13 = arith.addf %10, %12 : vector<192x256xf32>
    %cst_6 = arith.constant 0.000000e+00 : f32
    %14 = vector.broadcast %cst_6 : f32 to vector<192x256xf32>
    %15 = arith.maximumf %13, %14 : vector<192x256xf32>
    %c3_i32 = arith.constant 3 : i32
    %16 = tpu.dynamic_rotate %15 by %c3_i32 dim 1 : vector<192x256xf32>, i32 -> vector<192x256xf32>
    %c253_i32 = arith.constant 253 : i32
    %17 = tpu.dynamic_rotate %15 by %c253_i32 dim 1 : vector<192x256xf32>, i32 -> vector<192x256xf32>
    %18 = arith.maximumf %16, %17 : vector<192x256xf32>
    %19 = arith.truncf %18 : vector<192x256xf32> to vector<192x256xbf16>
    %c0_7 = arith.constant 0 : index
    %c0_8 = arith.constant 0 : index
    %20 = vector.load %arg4[%c0_7, %c0_8] : memref<256x80xbf16, #tpu.memory_space<vmem>>, vector<256x80xbf16>
    %cst_9 = arith.constant dense<0.000000e+00> : vector<192x80xf32>
    %21 = tpu.matmul %19, %20, %cst_9 {dimension_numbers = #tpu.dot_dimension_numbers<[1], [0], [0], [1], [0, 0, 1, 1], [], []>} : vector<192x256xbf16>, vector<256x80xbf16>, vector<192x80xf32> -> vector<192x80xf32>
    %22 = vector.shape_cast %21 : vector<192x80xf32> to vector<8x24x80xf32>
    %23 = vector.extract_strided_slice %22 {offsets = [0, 0, 0], sizes = [8, 1, 80], strides = [1, 1, 1]} : vector<8x24x80xf32> to vector<8x1x80xf32>
    %24 = vector.extract_strided_slice %22 {offsets = [0, 1, 0], sizes = [8, 1, 80], strides = [1, 1, 1]} : vector<8x24x80xf32> to vector<8x1x80xf32>
    %25 = arith.maximumf %23, %24 : vector<8x1x80xf32>
    %26 = vector.extract_strided_slice %22 {offsets = [0, 2, 0], sizes = [8, 1, 80], strides = [1, 1, 1]} : vector<8x24x80xf32> to vector<8x1x80xf32>
    %27 = vector.extract_strided_slice %22 {offsets = [0, 3, 0], sizes = [8, 1, 80], strides = [1, 1, 1]} : vector<8x24x80xf32> to vector<8x1x80xf32>
    %28 = arith.maximumf %26, %27 : vector<8x1x80xf32>
    %29 = vector.extract_strided_slice %22 {offsets = [0, 4, 0], sizes = [8, 1, 80], strides = [1, 1, 1]} : vector<8x24x80xf32> to vector<8x1x80xf32>
    %30 = vector.extract_strided_slice %22 {offsets = [0, 5, 0], sizes = [8, 1, 80], strides = [1, 1, 1]} : vector<8x24x80xf32> to vector<8x1x80xf32>
    %31 = arith.maximumf %29, %30 : vector<8x1x80xf32>
    %32 = vector.extract_strided_slice %22 {offsets = [0, 6, 0], sizes = [8, 1, 80], strides = [1, 1, 1]} : vector<8x24x80xf32> to vector<8x1x80xf32>
    %33 = vector.extract_strided_slice %22 {offsets = [0, 7, 0], sizes = [8, 1, 80], strides = [1, 1, 1]} : vector<8x24x80xf32> to vector<8x1x80xf32>
    %34 = arith.maximumf %32, %33 : vector<8x1x80xf32>
    %35 = vector.extract_strided_slice %22 {offsets = [0, 8, 0], sizes = [8, 1, 80], strides = [1, 1, 1]} : vector<8x24x80xf32> to vector<8x1x80xf32>
    %36 = vector.extract_strided_slice %22 {offsets = [0, 9, 0], sizes = [8, 1, 80], strides = [1, 1, 1]} : vector<8x24x80xf32> to vector<8x1x80xf32>
    %37 = arith.maximumf %35, %36 : vector<8x1x80xf32>
    %38 = vector.extract_strided_slice %22 {offsets = [0, 10, 0], sizes = [8, 1, 80], strides = [1, 1, 1]} : vector<8x24x80xf32> to vector<8x1x80xf32>
    %39 = vector.extract_strided_slice %22 {offsets = [0, 11, 0], sizes = [8, 1, 80], strides = [1, 1, 1]} : vector<8x24x80xf32> to vector<8x1x80xf32>
    %40 = arith.maximumf %38, %39 : vector<8x1x80xf32>
    %41 = vector.extract_strided_slice %22 {offsets = [0, 12, 0], sizes = [8, 1, 80], strides = [1, 1, 1]} : vector<8x24x80xf32> to vector<8x1x80xf32>
    %42 = vector.extract_strided_slice %22 {offsets = [0, 13, 0], sizes = [8, 1, 80], strides = [1, 1, 1]} : vector<8x24x80xf32> to vector<8x1x80xf32>
    %43 = arith.maximumf %41, %42 : vector<8x1x80xf32>
    %44 = vector.extract_strided_slice %22 {offsets = [0, 14, 0], sizes = [8, 1, 80], strides = [1, 1, 1]} : vector<8x24x80xf32> to vector<8x1x80xf32>
    %45 = vector.extract_strided_slice %22 {offsets = [0, 15, 0], sizes = [8, 1, 80], strides = [1, 1, 1]} : vector<8x24x80xf32> to vector<8x1x80xf32>
    %46 = arith.maximumf %44, %45 : vector<8x1x80xf32>
    %47 = vector.extract_strided_slice %22 {offsets = [0, 16, 0], sizes = [8, 1, 80], strides = [1, 1, 1]} : vector<8x24x80xf32> to vector<8x1x80xf32>
    %48 = vector.extract_strided_slice %22 {offsets = [0, 17, 0], sizes = [8, 1, 80], strides = [1, 1, 1]} : vector<8x24x80xf32> to vector<8x1x80xf32>
    %49 = arith.maximumf %47, %48 : vector<8x1x80xf32>
    %50 = vector.extract_strided_slice %22 {offsets = [0, 18, 0], sizes = [8, 1, 80], strides = [1, 1, 1]} : vector<8x24x80xf32> to vector<8x1x80xf32>
    %51 = vector.extract_strided_slice %22 {offsets = [0, 19, 0], sizes = [8, 1, 80], strides = [1, 1, 1]} : vector<8x24x80xf32> to vector<8x1x80xf32>
    %52 = arith.maximumf %50, %51 : vector<8x1x80xf32>
    %53 = vector.extract_strided_slice %22 {offsets = [0, 20, 0], sizes = [8, 1, 80], strides = [1, 1, 1]} : vector<8x24x80xf32> to vector<8x1x80xf32>
    %54 = vector.extract_strided_slice %22 {offsets = [0, 21, 0], sizes = [8, 1, 80], strides = [1, 1, 1]} : vector<8x24x80xf32> to vector<8x1x80xf32>
    %55 = arith.maximumf %53, %54 : vector<8x1x80xf32>
    %56 = vector.extract_strided_slice %22 {offsets = [0, 22, 0], sizes = [8, 1, 80], strides = [1, 1, 1]} : vector<8x24x80xf32> to vector<8x1x80xf32>
    %57 = vector.extract_strided_slice %22 {offsets = [0, 23, 0], sizes = [8, 1, 80], strides = [1, 1, 1]} : vector<8x24x80xf32> to vector<8x1x80xf32>
    %58 = arith.maximumf %56, %57 : vector<8x1x80xf32>
    %59 = tpu.concatenate %25, %28, %31, %34, %37, %40, %43, %46, %49, %52, %55, %58 in 1 : vector<8x1x80xf32>, vector<8x1x80xf32>, vector<8x1x80xf32>, vector<8x1x80xf32>, vector<8x1x80xf32>, vector<8x1x80xf32>, vector<8x1x80xf32>, vector<8x1x80xf32>, vector<8x1x80xf32>, vector<8x1x80xf32>, vector<8x1x80xf32>, vector<8x1x80xf32> -> vector<8x12x80xf32>
    %60 = vector.extract_strided_slice %59 {offsets = [0, 0, 0], sizes = [8, 8, 80], strides = [1, 1, 1]} : vector<8x12x80xf32> to vector<8x8x80xf32>
    %61 = vector.extract_strided_slice %59 {offsets = [0, 1, 0], sizes = [8, 8, 80], strides = [1, 1, 1]} : vector<8x12x80xf32> to vector<8x8x80xf32>
    %62 = vector.extract_strided_slice %59 {offsets = [0, 2, 0], sizes = [8, 8, 80], strides = [1, 1, 1]} : vector<8x12x80xf32> to vector<8x8x80xf32>
    %63 = vector.extract_strided_slice %59 {offsets = [0, 3, 0], sizes = [8, 8, 80], strides = [1, 1, 1]} : vector<8x12x80xf32> to vector<8x8x80xf32>
    %64 = vector.extract_strided_slice %59 {offsets = [0, 4, 0], sizes = [8, 8, 80], strides = [1, 1, 1]} : vector<8x12x80xf32> to vector<8x8x80xf32>
    %65 = tpu.concatenate %60, %61, %62, %63, %64 in 2 : vector<8x8x80xf32>, vector<8x8x80xf32>, vector<8x8x80xf32>, vector<8x8x80xf32>, vector<8x8x80xf32> -> vector<8x8x400xf32>
    %66 = vector.shape_cast %65 : vector<8x8x400xf32> to vector<64x400xf32>
    %67 = arith.truncf %66 : vector<64x400xf32> to vector<64x400xbf16>
    %c0_10 = arith.constant 0 : index
    %c0_11 = arith.constant 0 : index
    %68 = vector.load %arg5[%c0_10, %c0_11] : memref<400x128xbf16, #tpu.memory_space<vmem>>, vector<400x128xbf16>
    %cst_12 = arith.constant dense<0.000000e+00> : vector<64x128xf32>
    %69 = tpu.matmul %67, %68, %cst_12 {dimension_numbers = #tpu.dot_dimension_numbers<[1], [0], [0], [1], [0, 0, 1, 1], [], []>} : vector<64x400xbf16>, vector<400x128xbf16>, vector<64x128xf32> -> vector<64x128xf32>
    %c0_13 = arith.constant 0 : index
    %c0_14 = arith.constant 0 : index
    %70 = vector.load %arg6[%c0_13, %c0_14] : memref<1x128xf32, #tpu.memory_space<vmem>>, vector<1x128xf32>
    %71 = vector.broadcast %70 : vector<1x128xf32> to vector<64x128xf32>
    %72 = arith.addf %69, %71 : vector<64x128xf32>
    %cst_15 = arith.constant 0.000000e+00 : f32
    %73 = vector.broadcast %cst_15 : f32 to vector<64x128xf32>
    %74 = arith.maximumf %72, %73 : vector<64x128xf32>
    %c8_i32 = arith.constant 8 : i32
    %75 = tpu.dynamic_rotate %74 by %c8_i32 dim 1 : vector<64x128xf32>, i32 -> vector<64x128xf32>
    %c120_i32 = arith.constant 120 : i32
    %76 = tpu.dynamic_rotate %74 by %c120_i32 dim 1 : vector<64x128xf32>, i32 -> vector<64x128xf32>
    %77 = arith.maximumf %75, %76 : vector<64x128xf32>
    %78 = arith.truncf %77 : vector<64x128xf32> to vector<64x128xbf16>
    %c0_16 = arith.constant 0 : index
    %c0_17 = arith.constant 0 : index
    %79 = vector.load %arg7[%c0_16, %c0_17] : memref<128x64xbf16, #tpu.memory_space<vmem>>, vector<128x64xbf16>
    %cst_18 = arith.constant dense<0.000000e+00> : vector<64x64xf32>
    %80 = tpu.matmul %78, %79, %cst_18 {dimension_numbers = #tpu.dot_dimension_numbers<[1], [0], [0], [1], [0, 0, 1, 1], [], []>} : vector<64x128xbf16>, vector<128x64xbf16>, vector<64x64xf32> -> vector<64x64xf32>
    %81 = vector.shape_cast %80 : vector<64x64xf32> to vector<8x8x64xf32>
    %82 = vector.extract_strided_slice %81 {offsets = [0, 0, 0], sizes = [8, 1, 64], strides = [1, 1, 1]} : vector<8x8x64xf32> to vector<8x1x64xf32>
    %83 = vector.extract_strided_slice %81 {offsets = [0, 1, 0], sizes = [8, 1, 64], strides = [1, 1, 1]} : vector<8x8x64xf32> to vector<8x1x64xf32>
    %84 = arith.maximumf %82, %83 : vector<8x1x64xf32>
    %85 = vector.extract_strided_slice %81 {offsets = [0, 2, 0], sizes = [8, 1, 64], strides = [1, 1, 1]} : vector<8x8x64xf32> to vector<8x1x64xf32>
    %86 = vector.extract_strided_slice %81 {offsets = [0, 3, 0], sizes = [8, 1, 64], strides = [1, 1, 1]} : vector<8x8x64xf32> to vector<8x1x64xf32>
    %87 = arith.maximumf %85, %86 : vector<8x1x64xf32>
    %88 = vector.extract_strided_slice %81 {offsets = [0, 4, 0], sizes = [8, 1, 64], strides = [1, 1, 1]} : vector<8x8x64xf32> to vector<8x1x64xf32>
    %89 = vector.extract_strided_slice %81 {offsets = [0, 5, 0], sizes = [8, 1, 64], strides = [1, 1, 1]} : vector<8x8x64xf32> to vector<8x1x64xf32>
    %90 = arith.maximumf %88, %89 : vector<8x1x64xf32>
    %91 = vector.extract_strided_slice %81 {offsets = [0, 6, 0], sizes = [8, 1, 64], strides = [1, 1, 1]} : vector<8x8x64xf32> to vector<8x1x64xf32>
    %92 = vector.extract_strided_slice %81 {offsets = [0, 7, 0], sizes = [8, 1, 64], strides = [1, 1, 1]} : vector<8x8x64xf32> to vector<8x1x64xf32>
    %93 = arith.maximumf %91, %92 : vector<8x1x64xf32>
    %94 = tpu.concatenate %84, %87, %90, %93 in 2 : vector<8x1x64xf32>, vector<8x1x64xf32>, vector<8x1x64xf32>, vector<8x1x64xf32> -> vector<8x1x256xf32>
    %95 = vector.shape_cast %94 : vector<8x1x256xf32> to vector<8x256xf32>
    %96 = arith.truncf %95 : vector<8x256xf32> to vector<8x256xbf16>
    %c0_19 = arith.constant 0 : index
    %c0_20 = arith.constant 0 : index
    %97 = vector.load %arg8[%c0_19, %c0_20] : memref<256x128xbf16, #tpu.memory_space<vmem>>, vector<256x128xbf16>
    %cst_21 = arith.constant dense<0.000000e+00> : vector<8x128xf32>
    %98 = tpu.matmul %96, %97, %cst_21 {dimension_numbers = #tpu.dot_dimension_numbers<[1], [0], [0], [1], [0, 0, 1, 1], [], []>} : vector<8x256xbf16>, vector<256x128xbf16>, vector<8x128xf32> -> vector<8x128xf32>
    %c0_22 = arith.constant 0 : index
    %c0_23 = arith.constant 0 : index
    %99 = vector.load %arg9[%c0_22, %c0_23] : memref<1x128xf32, #tpu.memory_space<vmem>>, vector<1x128xf32>
    %100 = vector.broadcast %99 : vector<1x128xf32> to vector<8x128xf32>
    %101 = arith.addf %98, %100 : vector<8x128xf32>
    %cst_24 = arith.constant 0.000000e+00 : f32
    %102 = vector.broadcast %cst_24 : f32 to vector<8x128xf32>
    %103 = arith.maximumf %101, %102 : vector<8x128xf32>
    %104 = arith.truncf %103 : vector<8x128xf32> to vector<8x128xbf16>
    %c0_25 = arith.constant 0 : index
    %c0_26 = arith.constant 0 : index
    %105 = vector.load %arg10[%c0_25, %c0_26] : memref<128x128xbf16, #tpu.memory_space<vmem>>, vector<128x128xbf16>
    %cst_27 = arith.constant dense<0.000000e+00> : vector<8x128xf32>
    %106 = tpu.matmul %104, %105, %cst_27 {dimension_numbers = #tpu.dot_dimension_numbers<[1], [0], [0], [1], [0, 0, 1, 1], [], []>} : vector<8x128xbf16>, vector<128x128xbf16>, vector<8x128xf32> -> vector<8x128xf32>
    %c0_28 = arith.constant 0 : index
    %c0_29 = arith.constant 0 : index
    %107 = vector.load %arg11[%c0_28, %c0_29] : memref<1x128xf32, #tpu.memory_space<vmem>>, vector<1x128xf32>
    %108 = vector.broadcast %107 : vector<1x128xf32> to vector<8x128xf32>
    %109 = arith.addf %106, %108 : vector<8x128xf32>
    %cst_30 = arith.constant 0.000000e+00 : f32
    %110 = vector.broadcast %cst_30 : f32 to vector<8x128xf32>
    %111 = arith.maximumf %109, %110 : vector<8x128xf32>
    %112 = arith.truncf %111 : vector<8x128xf32> to vector<8x128xbf16>
    %c0_31 = arith.constant 0 : index
    %c0_32 = arith.constant 0 : index
    %113 = vector.load %arg12[%c0_31, %c0_32] : memref<128x128xbf16, #tpu.memory_space<vmem>>, vector<128x128xbf16>
    %cst_33 = arith.constant dense<0.000000e+00> : vector<8x128xf32>
    %114 = tpu.matmul %112, %113, %cst_33 {dimension_numbers = #tpu.dot_dimension_numbers<[1], [0], [0], [1], [0, 0, 1, 1], [], []>} : vector<8x128xbf16>, vector<128x128xbf16>, vector<8x128xf32> -> vector<8x128xf32>
    %c0_34 = arith.constant 0 : index
    %c0_35 = arith.constant 0 : index
    %115 = vector.load %arg13[%c0_34, %c0_35] : memref<1x128xf32, #tpu.memory_space<vmem>>, vector<1x128xf32>
    %116 = vector.broadcast %115 : vector<1x128xf32> to vector<8x128xf32>
    %117 = arith.addf %114, %116 : vector<8x128xf32>
    %c0_36 = arith.constant 0 : index
    %c0_37 = arith.constant 0 : index
    %118 = vector.load %arg14[%c0_36, %c0_37] : memref<8x128xf32, #tpu.memory_space<vmem>>, vector<8x128xf32>
    tpu.vector_store %arg14[%c0_36, %c0_37], %117 {strides = array<i32>} : memref<8x128xf32, #tpu.memory_space<vmem>>, vector<8x128xf32>,
    return
  }
  func.func @transform_0(%arg0: i32) -> (i32, i32, i32) {
    %c0_i32 = arith.constant 0 : i32
    %c0_i32_0 = arith.constant 0 : i32
    %c0_i32_1 = arith.constant 0 : i32
    return %arg0, %c0_i32, %c0_i32_0 : i32, i32, i32
  }
  func.func @transform_1(%arg0: i32) -> (i32, i32) {
    %c0_i32 = arith.constant 0 : i32
    %c0_i32_0 = arith.constant 0 : i32
    %c0_i32_1 = arith.constant 0 : i32
    return %c0_i32, %c0_i32_0 : i32, i32
  }
  func.func @transform_2(%arg0: i32) -> (i32, i32) {
    %c0_i32 = arith.constant 0 : i32
    %c0_i32_0 = arith.constant 0 : i32
    %c0_i32_1 = arith.constant 0 : i32
    return %c0_i32, %c0_i32_0 : i32, i32
  }
  func.func @transform_3(%arg0: i32) -> (i32, i32) {
    %c0_i32 = arith.constant 0 : i32
    %c0_i32_0 = arith.constant 0 : i32
    %c0_i32_1 = arith.constant 0 : i32
    return %c0_i32, %c0_i32_0 : i32, i32
  }
  func.func @transform_4(%arg0: i32) -> (i32, i32) {
    %c0_i32 = arith.constant 0 : i32
    %c0_i32_0 = arith.constant 0 : i32
    %c0_i32_1 = arith.constant 0 : i32
    return %c0_i32, %c0_i32_0 : i32, i32
  }
  func.func @transform_5(%arg0: i32) -> (i32, i32) {
    %c0_i32 = arith.constant 0 : i32
    %c0_i32_0 = arith.constant 0 : i32
    %c0_i32_1 = arith.constant 0 : i32
    return %c0_i32, %c0_i32_0 : i32, i32
  }
  func.func @transform_6(%arg0: i32) -> (i32, i32) {
    %c0_i32 = arith.constant 0 : i32
    %c0_i32_0 = arith.constant 0 : i32
    %c0_i32_1 = arith.constant 0 : i32
    return %c0_i32, %c0_i32_0 : i32, i32
  }
  func.func @transform_7(%arg0: i32) -> (i32, i32) {
    %c0_i32 = arith.constant 0 : i32
    %c0_i32_0 = arith.constant 0 : i32
    %c0_i32_1 = arith.constant 0 : i32
    return %c0_i32, %c0_i32_0 : i32, i32
  }
  func.func @transform_8(%arg0: i32) -> (i32, i32) {
    %c0_i32 = arith.constant 0 : i32
    %c0_i32_0 = arith.constant 0 : i32
    %c0_i32_1 = arith.constant 0 : i32
    return %c0_i32, %c0_i32_0 : i32, i32
  }
  func.func @transform_9(%arg0: i32) -> (i32, i32) {
    %c0_i32 = arith.constant 0 : i32
    %c0_i32_0 = arith.constant 0 : i32
    %c0_i32_1 = arith.constant 0 : i32
    return %c0_i32, %c0_i32_0 : i32, i32
  }
  func.func @transform_10(%arg0: i32) -> (i32, i32) {
    %c0_i32 = arith.constant 0 : i32
    %c0_i32_0 = arith.constant 0 : i32
    %c0_i32_1 = arith.constant 0 : i32
    return %c0_i32, %c0_i32_0 : i32, i32
  }
  func.func @transform_11(%arg0: i32) -> (i32, i32) {
    %c0_i32 = arith.constant 0 : i32
    %c0_i32_0 = arith.constant 0 : i32
    %c0_i32_1 = arith.constant 0 : i32
    return %c0_i32, %c0_i32_0 : i32, i32
  }
  func.func @transform_12(%arg0: i32) -> (i32, i32) {
    %c0_i32 = arith.constant 0 : i32
    %c0_i32_0 = arith.constant 0 : i32
    %c0_i32_1 = arith.constant 0 : i32
    return %c0_i32, %c0_i32_0 : i32, i32
  }
  func.func @transform_13(%arg0: i32) -> (i32, i32) {
    %c0_i32 = arith.constant 0 : i32
    %c0_i32_0 = arith.constant 0 : i32
    return %arg0, %c0_i32 : i32, i32
  }
}

</mosaic_0001>

<llo_original>
// kernel: simple_cnn_forward.1
$region0: #{simple_cnn_forward.1}
  #allocation0 [shape = 'u32[]', space=smem, size = 0x4, offset = 0x4, fixed_abs, tag = 'smem constant byte address 0x4 - core index']
  #allocation1 [shape = 'u32[144,128]{1,0:T(1,128)}', space=vmem, size = 0x12000, scoped, tag = 'internal scratch']
  %s0 = inlined_call_operand.vmem [shape: f32[8,28,32], index: 0, kind: input, shape index: {}]
  %s1 = inlined_call_operand.vmem [shape: bf16[160,256], index: 1, kind: input, shape index: {}]
  %s2 = inlined_call_operand.vmem [shape: f32[1,256], index: 2, kind: input, shape index: {}]
  %s3 = inlined_call_operand.vmem [shape: bf16[256,80], index: 3, kind: input, shape index: {}]
  %s4 = inlined_call_operand.vmem [shape: bf16[400,128], index: 4, kind: input, shape index: {}]
  %s5 = inlined_call_operand.vmem [shape: f32[1,128], index: 5, kind: input, shape index: {}]
  %s6 = inlined_call_operand.vmem [shape: bf16[128,64], index: 6, kind: input, shape index: {}]
  %s7 = inlined_call_operand.vmem [shape: bf16[256,128], index: 7, kind: input, shape index: {}]
  %s8 = inlined_call_operand.vmem [shape: f32[1,128], index: 8, kind: input, shape index: {}]
  %s9 = inlined_call_operand.vmem [shape: bf16[128,128], index: 9, kind: input, shape index: {}]
  %s10 = inlined_call_operand.vmem [shape: f32[1,128], index: 10, kind: input, shape index: {}]
  %s11 = inlined_call_operand.vmem [shape: bf16[128,128], index: 11, kind: input, shape index: {}]
  %s12 = inlined_call_operand.vmem [shape: f32[1,128], index: 12, kind: input, shape index: {}]
  %s13 = inlined_call_operand.vmem [shape: f32[8,128], index: 13, kind: output, shape index: {}]
  %s14 = sld [smem:[#allocation0]]
  $region62: #{simple_cnn_forward.1} parent=0
    _
  %s16 = ssub.s32 1, %s14
  %s17 = scalar_select 0, %s16, %s14
  // Predicated region
  $region2: #{simple_cnn_forward.1} parent=0 // pred_check
    _
  $region3: #{simple_cnn_forward.1} parent=0 // pred_check_branch
    %19 = sbr.rel (0) target = $region5
  $region4: #{simple_cnn_forward.1} parent=0 // pred_region
    _
  $region5: #{simple_cnn_forward.1} parent=0 // pred_fallthru
    _
  // Predicated region
  $region6: #{simple_cnn_forward.1} parent=0 // pred_check
    _
  $region7: #{simple_cnn_forward.1} parent=0 // pred_check_branch
    %21 = sbr.rel (0) target = $region9
  $region8: #{simple_cnn_forward.1} parent=0 // pred_region
    _
  $region9: #{simple_cnn_forward.1} parent=0 // pred_fallthru
    _
  // Predicated region
  $region10: #{simple_cnn_forward.1} parent=0 // pred_check
    _
  $region11: #{simple_cnn_forward.1} parent=0 // pred_check_branch
    %23 = sbr.rel (0) target = $region13
  $region12: #{simple_cnn_forward.1} parent=0 // pred_region
    _
  $region13: #{simple_cnn_forward.1} parent=0 // pred_fallthru
    _
  // Predicated region
  $region14: #{simple_cnn_forward.1} parent=0 // pred_check
    _
  $region15: #{simple_cnn_forward.1} parent=0 // pred_check_branch
    %25 = sbr.rel (0) target = $region17
  $region16: #{simple_cnn_forward.1} parent=0 // pred_region
    _
  $region17: #{simple_cnn_forward.1} parent=0 // pred_fallthru
    _
  // Predicated region
  $region18: #{simple_cnn_forward.1} parent=0 // pred_check
    _
  $region19: #{simple_cnn_forward.1} parent=0 // pred_check_branch
    %27 = sbr.rel (0) target = $region21
  $region20: #{simple_cnn_forward.1} parent=0 // pred_region
    _
  $region21: #{simple_cnn_forward.1} parent=0 // pred_fallthru
    _
  // Predicated region
  $region22: #{simple_cnn_forward.1} parent=0 // pred_check
    _
  $region23: #{simple_cnn_forward.1} parent=0 // pred_check_branch
    %29 = sbr.rel (0) target = $region25
  $region24: #{simple_cnn_forward.1} parent=0 // pred_region
    _
  $region25: #{simple_cnn_forward.1} parent=0 // pred_fallthru
    _
  // Predicated region
  $region26: #{simple_cnn_forward.1} parent=0 // pred_check
    _
  $region27: #{simple_cnn_forward.1} parent=0 // pred_check_branch
    %31 = sbr.rel (0) target = $region29
  $region28: #{simple_cnn_forward.1} parent=0 // pred_region
    _
  $region29: #{simple_cnn_forward.1} parent=0 // pred_fallthru
    _
  // Predicated region
  $region30: #{simple_cnn_forward.1} parent=0 // pred_check
    _
  $region31: #{simple_cnn_forward.1} parent=0 // pred_check_branch
    %33 = sbr.rel (0) target = $region33
  $region32: #{simple_cnn_forward.1} parent=0 // pred_region
    _
  $region33: #{simple_cnn_forward.1} parent=0 // pred_fallthru
    _
  // Predicated region
  $region34: #{simple_cnn_forward.1} parent=0 // pred_check
    _
  $region35: #{simple_cnn_forward.1} parent=0 // pred_check_branch
    %35 = sbr.rel (0) target = $region37
  $region36: #{simple_cnn_forward.1} parent=0 // pred_region
    _
  $region37: #{simple_cnn_forward.1} parent=0 // pred_fallthru
    _
  // Predicated region
  $region38: #{simple_cnn_forward.1} parent=0 // pred_check
    _
  $region39: #{simple_cnn_forward.1} parent=0 // pred_check_branch
    %37 = sbr.rel (0) target = $region41
  $region40: #{simple_cnn_forward.1} parent=0 // pred_region
    _
  $region41: #{simple_cnn_forward.1} parent=0 // pred_fallthru
    _
  // Predicated region
  $region42: #{simple_cnn_forward.1} parent=0 // pred_check
    _
  $region43: #{simple_cnn_forward.1} parent=0 // pred_check_branch
    %39 = sbr.rel (0) target = $region45
  $region44: #{simple_cnn_forward.1} parent=0 // pred_region
    _
  $region45: #{simple_cnn_forward.1} parent=0 // pred_fallthru
    _
  // Predicated region
  $region46: #{simple_cnn_forward.1} parent=0 // pred_check
    _
  $region47: #{simple_cnn_forward.1} parent=0 // pred_check_branch
    %41 = sbr.rel (0) target = $region49
  $region48: #{simple_cnn_forward.1} parent=0 // pred_region
    _
  $region49: #{simple_cnn_forward.1} parent=0 // pred_fallthru
    _
  // Predicated region
  $region50: #{simple_cnn_forward.1} parent=0 // pred_check
    _
  $region51: #{simple_cnn_forward.1} parent=0 // pred_check_branch
    %43 = sbr.rel (0) target = $region53
  $region52: #{simple_cnn_forward.1} parent=0 // pred_region
    _
  $region53: #{simple_cnn_forward.1} parent=0 // pred_fallthru
    _
  %v45 = vld [vmem:[%s0] sm:$0xff]
  %v46 = vld [vmem:[%s0 + $0x8] sm:$0xff]
  %v47 = vld [vmem:[%s0 + $0x10] sm:$0xff]
  %v48 = vld [vmem:[%s0 + $0x18] sm:$0xf]
  %v49 = vld [vmem:[%s0 + $0x20] sm:$0xff]
  %v50 = vld [vmem:[%s0 + $0x28] sm:$0xff]
  %v51 = vld [vmem:[%s0 + $0x30] sm:$0xff]
  %v52 = vld [vmem:[%s0 + $0x38] sm:$0xf]
  %v53 = vld [vmem:[%s0 + $0x40] sm:$0xff]
  %v54 = vld [vmem:[%s0 + $0x48] sm:$0xff]
  %v55 = vld [vmem:[%s0 + $0x50] sm:$0xff]
  %v56 = vld [vmem:[%s0 + $0x58] sm:$0xf]
  %v57 = vld [vmem:[%s0 + $0x60] sm:$0xff]
  %v58 = vld [vmem:[%s0 + $0x68] sm:$0xff]
  %v59 = vld [vmem:[%s0 + $0x70] sm:$0xff]
  %v60 = vld [vmem:[%s0 + $0x78] sm:$0xf]
  %v61 = vld [vmem:[%s0 + $0x80] sm:$0xff]
  %v62 = vld [vmem:[%s0 + $0x88] sm:$0xff]
  %v63 = vld [vmem:[%s0 + $0x90] sm:$0xff]
  %v64 = vld [vmem:[%s0 + $0x98] sm:$0xf]
  %v65 = vld [vmem:[%s0 + $0xa0] sm:$0xff]
  %v66 = vld [vmem:[%s0 + $0xa8] sm:$0xff]
  %v67 = vld [vmem:[%s0 + $0xb0] sm:$0xff]
  %v68 = vld [vmem:[%s0 + $0xb8] sm:$0xf]
  %v69 = vld [vmem:[%s0 + $0xc0] sm:$0xff]
  %v70 = vld [vmem:[%s0 + $0xc8] sm:$0xff]
  %v71 = vld [vmem:[%s0 + $0xd0] sm:$0xff]
  %v72 = vld [vmem:[%s0 + $0xd8] sm:$0xf]
  %v73 = vld [vmem:[%s0 + $0xe0] sm:$0xff]
  %v74 = vld [vmem:[%s0 + $0xe8] sm:$0xff]
  %v75 = vld [vmem:[%s0 + $0xf0] sm:$0xff]
  %v76 = vld [vmem:[%s0 + $0xf8] sm:$0xf]
  %vm109 = vcmask 1046528
  %v110 = vrot.slane %v45, 1
  %v111 = vrot.slane %v46, 1
  %v112 = vsel %vm109, %v110, %v111
  %v113 = vrot.slane %v47, 1
  %v114 = vsel %vm109, %v111, %v113
  %v115 = vrot.slane %v48, 1
  %v116 = vsel %vm109, %v113, %v115
  %v117 = vrot.slane %v49, 1
  %v118 = vrot.slane %v50, 1
  %v119 = vsel %vm109, %v117, %v118
  %v120 = vrot.slane %v51, 1
  %v121 = vsel %vm109, %v118, %v120
  %v122 = vrot.slane %v52, 1
  %v123 = vsel %vm109, %v120, %v122
  %v124 = vrot.slane %v53, 1
  %v125 = vrot.slane %v54, 1
  %v126 = vsel %vm109, %v124, %v125
  %v127 = vrot.slane %v55, 1
  %v128 = vsel %vm109, %v125, %v127
  %v129 = vrot.slane %v56, 1
  %v130 = vsel %vm109, %v127, %v129
  %v131 = vrot.slane %v57, 1
  %v132 = vrot.slane %v58, 1
  %v133 = vsel %vm109, %v131, %v132
  %v134 = vrot.slane %v59, 1
  %v135 = vsel %vm109, %v132, %v134
  %v136 = vrot.slane %v60, 1
  %v137 = vsel %vm109, %v134, %v136
  %v138 = vrot.slane %v61, 1
  %v139 = vrot.slane %v62, 1
  %v140 = vsel %vm109, %v138, %v139
  %v141 = vrot.slane %v63, 1
  %v142 = vsel %vm109, %v139, %v141
  %v143 = vrot.slane %v64, 1
  %v144 = vsel %vm109, %v141, %v143
  %v145 = vrot.slane %v65, 1
  %v146 = vrot.slane %v66, 1
  %v147 = vsel %vm109, %v145, %v146
  %v148 = vrot.slane %v67, 1
  %v149 = vsel %vm109, %v146, %v148
  %v150 = vrot.slane %v68, 1
  %v151 = vsel %vm109, %v148, %v150
  %v152 = vrot.slane %v69, 1
  %v153 = vrot.slane %v70, 1
  %v154 = vsel %vm109, %v152, %v153
  %v155 = vrot.slane %v71, 1
  %v156 = vsel %vm109, %v153, %v155
  %v157 = vrot.slane %v72, 1
  %v158 = vsel %vm109, %v155, %v157
  %v159 = vrot.slane %v73, 1
  %v160 = vrot.slane %v74, 1
  %v161 = vsel %vm109, %v159, %v160
  %v162 = vrot.slane %v75, 1
  %v163 = vsel %vm109, %v160, %v162
  %v164 = vrot.slane %v76, 1
  %v165 = vsel %vm109, %v162, %v164
  %166 = vrot.lane.b32.xlu0 %v112, 32
  %v167 = vpop.permute.xlu0 %166
  %168 = vrot.lane.b32.xlu0 %v114, 32
  %v169 = vpop.permute.xlu0 %168
  %170 = vrot.lane.b32.xlu0 %v116, 32
  %v171 = vpop.permute.xlu0 %170
  %172 = vrot.lane.b32.xlu0 %v119, 32
  %v173 = vpop.permute.xlu0 %172
  %174 = vrot.lane.b32.xlu0 %v121, 32
  %v175 = vpop.permute.xlu0 %174
  %176 = vrot.lane.b32.xlu0 %v123, 32
  %v177 = vpop.permute.xlu0 %176
  %178 = vrot.lane.b32.xlu0 %v126, 32
  %v179 = vpop.permute.xlu0 %178
  %180 = vrot.lane.b32.xlu0 %v128, 32
  %v181 = vpop.permute.xlu0 %180
  %182 = vrot.lane.b32.xlu0 %v130, 32
  %v183 = vpop.permute.xlu0 %182
  %184 = vrot.lane.b32.xlu0 %v133, 32
  %v185 = vpop.permute.xlu0 %184
  %186 = vrot.lane.b32.xlu0 %v135, 32
  %v187 = vpop.permute.xlu0 %186
  %188 = vrot.lane.b32.xlu0 %v137, 32
  %v189 = vpop.permute.xlu0 %188
  %190 = vrot.lane.b32.xlu0 %v140, 32
  %v191 = vpop.permute.xlu0 %190
  %192 = vrot.lane.b32.xlu0 %v142, 32
  %v193 = vpop.permute.xlu0 %192
  %194 = vrot.lane.b32.xlu0 %v144, 32
  %v195 = vpop.permute.xlu0 %194
  %196 = vrot.lane.b32.xlu0 %v147, 32
  %v197 = vpop.permute.xlu0 %196
  %198 = vrot.lane.b32.xlu0 %v149, 32
  %v199 = vpop.permute.xlu0 %198
  %200 = vrot.lane.b32.xlu0 %v151, 32
  %v201 = vpop.permute.xlu0 %200
  %202 = vrot.lane.b32.xlu0 %v154, 32
  %v203 = vpop.permute.xlu0 %202
  %204 = vrot.lane.b32.xlu0 %v156, 32
  %v205 = vpop.permute.xlu0 %204
  %206 = vrot.lane.b32.xlu0 %v158, 32
  %v207 = vpop.permute.xlu0 %206
  %208 = vrot.lane.b32.xlu0 %v161, 32
  %v209 = vpop.permute.xlu0 %208
  %210 = vrot.lane.b32.xlu0 %v163, 32
  %v211 = vpop.permute.xlu0 %210
  %212 = vrot.lane.b32.xlu0 %v165, 32
  %v213 = vpop.permute.xlu0 %212
  %vm238 = vcmask 1045504
  %v239 = vrot.slane %v45, 2
  %v240 = vrot.slane %v46, 2
  %v241 = vsel %vm238, %v239, %v240
  %v242 = vrot.slane %v47, 2
  %v243 = vsel %vm238, %v240, %v242
  %v244 = vrot.slane %v48, 2
  %v245 = vsel %vm238, %v242, %v244
  %v246 = vrot.slane %v49, 2
  %v247 = vrot.slane %v50, 2
  %v248 = vsel %vm238, %v246, %v247
  %v249 = vrot.slane %v51, 2
  %v250 = vsel %vm238, %v247, %v249
  %v251 = vrot.slane %v52, 2
  %v252 = vsel %vm238, %v249, %v251
  %v253 = vrot.slane %v53, 2
  %v254 = vrot.slane %v54, 2
  %v255 = vsel %vm238, %v253, %v254
  %v256 = vrot.slane %v55, 2
  %v257 = vsel %vm238, %v254, %v256
  %v258 = vrot.slane %v56, 2
  %v259 = vsel %vm238, %v256, %v258
  %v260 = vrot.slane %v57, 2
  %v261 = vrot.slane %v58, 2
  %v262 = vsel %vm238, %v260, %v261
  %v263 = vrot.slane %v59, 2
  %v264 = vsel %vm238, %v261, %v263
  %v265 = vrot.slane %v60, 2
  %v266 = vsel %vm238, %v263, %v265
  %v267 = vrot.slane %v61, 2
  %v268 = vrot.slane %v62, 2
  %v269 = vsel %vm238, %v267, %v268
  %v270 = vrot.slane %v63, 2
  %v271 = vsel %vm238, %v268, %v270
  %v272 = vrot.slane %v64, 2
  %v273 = vsel %vm238, %v270, %v272
  %v274 = vrot.slane %v65, 2
  %v275 = vrot.slane %v66, 2
  %v276 = vsel %vm238, %v274, %v275
  %v277 = vrot.slane %v67, 2
  %v278 = vsel %vm238, %v275, %v277
  %v279 = vrot.slane %v68, 2
  %v280 = vsel %vm238, %v277, %v279
  %v281 = vrot.slane %v69, 2
  %v282 = vrot.slane %v70, 2
  %v283 = vsel %vm238, %v281, %v282
  %v284 = vrot.slane %v71, 2
  %v285 = vsel %vm238, %v282, %v284
  %v286 = vrot.slane %v72, 2
  %v287 = vsel %vm238, %v284, %v286
  %v288 = vrot.slane %v73, 2
  %v289 = vrot.slane %v74, 2
  %v290 = vsel %vm238, %v288, %v289
  %v291 = vrot.slane %v75, 2
  %v292 = vsel %vm238, %v289, %v291
  %v293 = vrot.slane %v76, 2
  %v294 = vsel %vm238, %v291, %v293
  %295 = vrot.lane.b32.xlu0 %v241, 64
  %v296 = vpop.permute.xlu0 %295
  %297 = vrot.lane.b32.xlu0 %v243, 64
  %v298 = vpop.permute.xlu0 %297
  %299 = vrot.lane.b32.xlu0 %v245, 64
  %v300 = vpop.permute.xlu0 %299
  %301 = vrot.lane.b32.xlu0 %v248, 64
  %v302 = vpop.permute.xlu0 %301
  %303 = vrot.lane.b32.xlu0 %v250, 64
  %v304 = vpop.permute.xlu0 %303
  %305 = vrot.lane.b32.xlu0 %v252, 64
  %v306 = vpop.permute.xlu0 %305
  %307 = vrot.lane.b32.xlu0 %v255, 64
  %v308 = vpop.permute.xlu0 %307
  %309 = vrot.lane.b32.xlu0 %v257, 64
  %v310 = vpop.permute.xlu0 %309
  %311 = vrot.lane.b32.xlu0 %v259, 64
  %v312 = vpop.permute.xlu0 %311
  %313 = vrot.lane.b32.xlu0 %v262, 64
  %v314 = vpop.permute.xlu0 %313
  %315 = vrot.lane.b32.xlu0 %v264, 64
  %v316 = vpop.permute.xlu0 %315
  %317 = vrot.lane.b32.xlu0 %v266, 64
  %v318 = vpop.permute.xlu0 %317
  %319 = vrot.lane.b32.xlu0 %v269, 64
  %v320 = vpop.permute.xlu0 %319
  %321 = vrot.lane.b32.xlu0 %v271, 64
  %v322 = vpop.permute.xlu0 %321
  %323 = vrot.lane.b32.xlu0 %v273, 64
  %v324 = vpop.permute.xlu0 %323
  %325 = vrot.lane.b32.xlu0 %v276, 64
  %v326 = vpop.permute.xlu0 %325
  %327 = vrot.lane.b32.xlu0 %v278, 64
  %v328 = vpop.permute.xlu0 %327
  %329 = vrot.lane.b32.xlu0 %v280, 64
  %v330 = vpop.permute.xlu0 %329
  %331 = vrot.lane.b32.xlu0 %v283, 64
  %v332 = vpop.permute.xlu0 %331
  %333 = vrot.lane.b32.xlu0 %v285, 64
  %v334 = vpop.permute.xlu0 %333
  %335 = vrot.lane.b32.xlu0 %v287, 64
  %v336 = vpop.permute.xlu0 %335
  %337 = vrot.lane.b32.xlu0 %v290, 64
  %v338 = vpop.permute.xlu0 %337
  %339 = vrot.lane.b32.xlu0 %v292, 64
  %v340 = vpop.permute.xlu0 %339
  %341 = vrot.lane.b32.xlu0 %v294, 64
  %v342 = vpop.permute.xlu0 %341
  %vm367 = vcmask 1044480
  %v368 = vrot.slane %v45, 3
  %v369 = vrot.slane %v46, 3
  %v370 = vsel %vm367, %v368, %v369
  %v371 = vrot.slane %v47, 3
  %v372 = vsel %vm367, %v369, %v371
  %v373 = vrot.slane %v48, 3
  %v374 = vsel %vm367, %v371, %v373
  %v375 = vrot.slane %v49, 3
  %v376 = vrot.slane %v50, 3
  %v377 = vsel %vm367, %v375, %v376
  %v378 = vrot.slane %v51, 3
  %v379 = vsel %vm367, %v376, %v378
  %v380 = vrot.slane %v52, 3
  %v381 = vsel %vm367, %v378, %v380
  %v382 = vrot.slane %v53, 3
  %v383 = vrot.slane %v54, 3
  %v384 = vsel %vm367, %v382, %v383
  %v385 = vrot.slane %v55, 3
  %v386 = vsel %vm367, %v383, %v385
  %v387 = vrot.slane %v56, 3
  %v388 = vsel %vm367, %v385, %v387
  %v389 = vrot.slane %v57, 3
  %v390 = vrot.slane %v58, 3
  %v391 = vsel %vm367, %v389, %v390
  %v392 = vrot.slane %v59, 3
  %v393 = vsel %vm367, %v390, %v392
  %v394 = vrot.slane %v60, 3
  %v395 = vsel %vm367, %v392, %v394
  %v396 = vrot.slane %v61, 3
  %v397 = vrot.slane %v62, 3
  %v398 = vsel %vm367, %v396, %v397
  %v399 = vrot.slane %v63, 3
  %v400 = vsel %vm367, %v397, %v399
  %v401 = vrot.slane %v64, 3
  %v402 = vsel %vm367, %v399, %v401
  %v403 = vrot.slane %v65, 3
  %v404 = vrot.slane %v66, 3
  %v405 = vsel %vm367, %v403, %v404
  %v406 = vrot.slane %v67, 3
  %v407 = vsel %vm367, %v404, %v406
  %v408 = vrot.slane %v68, 3
  %v409 = vsel %vm367, %v406, %v408
  %v410 = vrot.slane %v69, 3
  %v411 = vrot.slane %v70, 3
  %v412 = vsel %vm367, %v410, %v411
  %v413 = vrot.slane %v71, 3
  %v414 = vsel %vm367, %v411, %v413
  %v415 = vrot.slane %v72, 3
  %v416 = vsel %vm367, %v413, %v415
  %v417 = vrot.slane %v73, 3
  %v418 = vrot.slane %v74, 3
  %v419 = vsel %vm367, %v417, %v418
  %v420 = vrot.slane %v75, 3
  %v421 = vsel %vm367, %v418, %v420
  %v422 = vrot.slane %v76, 3
  %v423 = vsel %vm367, %v420, %v422
  %424 = vrot.lane.b32.xlu0 %v370, 96
  %v425 = vpop.permute.xlu0 %424
  %426 = vrot.lane.b32.xlu0 %v372, 96
  %v427 = vpop.permute.xlu0 %426
  %428 = vrot.lane.b32.xlu0 %v374, 96
  %v429 = vpop.permute.xlu0 %428
  %430 = vrot.lane.b32.xlu0 %v377, 96
  %v431 = vpop.permute.xlu0 %430
  %432 = vrot.lane.b32.xlu0 %v379, 96
  %v433 = vpop.permute.xlu0 %432
  %434 = vrot.lane.b32.xlu0 %v381, 96
  %v435 = vpop.permute.xlu0 %434
  %436 = vrot.lane.b32.xlu0 %v384, 96
  %v437 = vpop.permute.xlu0 %436
  %438 = vrot.lane.b32.xlu0 %v386, 96
  %v439 = vpop.permute.xlu0 %438
  %440 = vrot.lane.b32.xlu0 %v388, 96
  %v441 = vpop.permute.xlu0 %440
  %442 = vrot.lane.b32.xlu0 %v391, 96
  %v443 = vpop.permute.xlu0 %442
  %444 = vrot.lane.b32.xlu0 %v393, 96
  %v445 = vpop.permute.xlu0 %444
  %446 = vrot.lane.b32.xlu0 %v395, 96
  %v447 = vpop.permute.xlu0 %446
  %448 = vrot.lane.b32.xlu0 %v398, 96
  %v449 = vpop.permute.xlu0 %448
  %450 = vrot.lane.b32.xlu0 %v400, 96
  %v451 = vpop.permute.xlu0 %450
  %452 = vrot.lane.b32.xlu0 %v402, 96
  %v453 = vpop.permute.xlu0 %452
  %454 = vrot.lane.b32.xlu0 %v405, 96
  %v455 = vpop.permute.xlu0 %454
  %456 = vrot.lane.b32.xlu0 %v407, 96
  %v457 = vpop.permute.xlu0 %456
  %458 = vrot.lane.b32.xlu0 %v409, 96
  %v459 = vpop.permute.xlu0 %458
  %460 = vrot.lane.b32.xlu0 %v412, 96
  %v461 = vpop.permute.xlu0 %460
  %462 = vrot.lane.b32.xlu0 %v414, 96
  %v463 = vpop.permute.xlu0 %462
  %464 = vrot.lane.b32.xlu0 %v416, 96
  %v465 = vpop.permute.xlu0 %464
  %466 = vrot.lane.b32.xlu0 %v419, 96
  %v467 = vpop.permute.xlu0 %466
  %468 = vrot.lane.b32.xlu0 %v421, 96
  %v469 = vpop.permute.xlu0 %468
  %470 = vrot.lane.b32.xlu0 %v423, 96
  %v471 = vpop.permute.xlu0 %470
  %vm496 = vcmask 1043456
  %v497 = vrot.slane %v45, 4
  %v498 = vrot.slane %v46, 4
  %v499 = vsel %vm496, %v497, %v498
  %v500 = vrot.slane %v47, 4
  %v501 = vsel %vm496, %v498, %v500
  %v502 = vrot.slane %v48, 4
  %v503 = vsel %vm496, %v500, %v502
  %v504 = vrot.slane %v49, 4
  %v505 = vrot.slane %v50, 4
  %v506 = vsel %vm496, %v504, %v505
  %v507 = vrot.slane %v51, 4
  %v508 = vsel %vm496, %v505, %v507
  %v509 = vrot.slane %v52, 4
  %v510 = vsel %vm496, %v507, %v509
  %v511 = vrot.slane %v53, 4
  %v512 = vrot.slane %v54, 4
  %v513 = vsel %vm496, %v511, %v512
  %v514 = vrot.slane %v55, 4
  %v515 = vsel %vm496, %v512, %v514
  %v516 = vrot.slane %v56, 4
  %v517 = vsel %vm496, %v514, %v516
  %v518 = vrot.slane %v57, 4
  %v519 = vrot.slane %v58, 4
  %v520 = vsel %vm496, %v518, %v519
  %v521 = vrot.slane %v59, 4
  %v522 = vsel %vm496, %v519, %v521
  %v523 = vrot.slane %v60, 4
  %v524 = vsel %vm496, %v521, %v523
  %v525 = vrot.slane %v61, 4
  %v526 = vrot.slane %v62, 4
  %v527 = vsel %vm496, %v525, %v526
  %v528 = vrot.slane %v63, 4
  %v529 = vsel %vm496, %v526, %v528
  %v530 = vrot.slane %v64, 4
  %v531 = vsel %vm496, %v528, %v530
  %v532 = vrot.slane %v65, 4
  %v533 = vrot.slane %v66, 4
  %v534 = vsel %vm496, %v532, %v533
  %v535 = vrot.slane %v67, 4
  %v536 = vsel %vm496, %v533, %v535
  %v537 = vrot.slane %v68, 4
  %v538 = vsel %vm496, %v535, %v537
  %v539 = vrot.slane %v69, 4
  %v540 = vrot.slane %v70, 4
  %v541 = vsel %vm496, %v539, %v540
  %v542 = vrot.slane %v71, 4
  %v543 = vsel %vm496, %v540, %v542
  %v544 = vrot.slane %v72, 4
  %v545 = vsel %vm496, %v542, %v544
  %v546 = vrot.slane %v73, 4
  %v547 = vrot.slane %v74, 4
  %v548 = vsel %vm496, %v546, %v547
  %v549 = vrot.slane %v75, 4
  %v550 = vsel %vm496, %v547, %v549
  %v551 = vrot.slane %v76, 4
  %v552 = vsel %vm496, %v549, %v551
  %vm577 = vcmask 261120
  %v578 = vsel %vm577, %v45, %v167
  %v579 = vsel %vm577, %v46, %v169
  %v580 = vsel %vm577, %v47, %v171
  %v581 = vsel %vm577, %v49, %v173
  %v582 = vsel %vm577, %v50, %v175
  %v583 = vsel %vm577, %v51, %v177
  %v584 = vsel %vm577, %v53, %v179
  %v585 = vsel %vm577, %v54, %v181
  %v586 = vsel %vm577, %v55, %v183
  %v587 = vsel %vm577, %v57, %v185
  %v588 = vsel %vm577, %v58, %v187
  %v589 = vsel %vm577, %v59, %v189
  %v590 = vsel %vm577, %v61, %v191
  %v591 = vsel %vm577, %v62, %v193
  %v592 = vsel %vm577, %v63, %v195
  %v593 = vsel %vm577, %v65, %v197
  %v594 = vsel %vm577, %v66, %v199
  %v595 = vsel %vm577, %v67, %v201
  %v596 = vsel %vm577, %v69, %v203
  %v597 = vsel %vm577, %v70, %v205
  %v598 = vsel %vm577, %v71, %v207
  %v599 = vsel %vm577, %v73, %v209
  %v600 = vsel %vm577, %v74, %v211
  %v601 = vsel %vm577, %v75, %v213
  %vm602 = vcmask 523264
  %v603 = vsel %vm602, %v578, %v296
  %v604 = vsel %vm602, %v579, %v298
  %v605 = vsel %vm602, %v580, %v300
  %v606 = vsel %vm602, %v581, %v302
  %v607 = vsel %vm602, %v582, %v304
  %v608 = vsel %vm602, %v583, %v306
  %v609 = vsel %vm602, %v584, %v308
  %v610 = vsel %vm602, %v585, %v310
  %v611 = vsel %vm602, %v586, %v312
  %v612 = vsel %vm602, %v587, %v314
  %v613 = vsel %vm602, %v588, %v316
  %v614 = vsel %vm602, %v589, %v318
  %v615 = vsel %vm602, %v590, %v320
  %v616 = vsel %vm602, %v591, %v322
  %v617 = vsel %vm602, %v592, %v324
  %v618 = vsel %vm602, %v593, %v326
  %v619 = vsel %vm602, %v594, %v328
  %v620 = vsel %vm602, %v595, %v330
  %v621 = vsel %vm602, %v596, %v332
  %v622 = vsel %vm602, %v597, %v334
  %v623 = vsel %vm602, %v598, %v336
  %v624 = vsel %vm602, %v599, %v338
  %v625 = vsel %vm602, %v600, %v340
  %v626 = vsel %vm602, %v601, %v342
  %vm627 = vcmask 785408
  %v628 = vsel %vm627, %v603, %v425
  %v629 = vsel %vm627, %v604, %v427
  %v630 = vsel %vm627, %v605, %v429
  %v631 = vsel %vm627, %v606, %v431
  %v632 = vsel %vm627, %v607, %v433
  %v633 = vsel %vm627, %v608, %v435
  %v634 = vsel %vm627, %v609, %v437
  %v635 = vsel %vm627, %v610, %v439
  %v636 = vsel %vm627, %v611, %v441
  %v637 = vsel %vm627, %v612, %v443
  %v638 = vsel %vm627, %v613, %v445
  %v639 = vsel %vm627, %v614, %v447
  %v640 = vsel %vm627, %v615, %v449
  %v641 = vsel %vm627, %v616, %v451
  %v642 = vsel %vm627, %v617, %v453
  %v643 = vsel %vm627, %v618, %v455
  %v644 = vsel %vm627, %v619, %v457
  %v645 = vsel %vm627, %v620, %v459
  %v646 = vsel %vm627, %v621, %v461
  %v647 = vsel %vm627, %v622, %v463
  %v648 = vsel %vm627, %v623, %v465
  %v649 = vsel %vm627, %v624, %v467
  %v650 = vsel %vm627, %v625, %v469
  %v651 = vsel %vm627, %v626, %v471
  %v652 = vpack.c.bf16 %v629, %v628
  %v653 = vpack.c.bf16 %v501, %v499
  %v654 = vpack.c.bf16 %v631, %v630
  %v655 = vpack.c.bf16 %v506, %v503
  %v656 = vpack.c.bf16 %v633, %v632
  %v657 = vpack.c.bf16 %v510, %v508
  %v658 = vpack.c.bf16 %v635, %v634
  %v659 = vpack.c.bf16 %v515, %v513
  %v660 = vpack.c.bf16 %v637, %v636
  %v661 = vpack.c.bf16 %v520, %v517
  %v662 = vpack.c.bf16 %v639, %v638
  %v663 = vpack.c.bf16 %v524, %v522
  %v664 = vpack.c.bf16 %v641, %v640
  %v665 = vpack.c.bf16 %v529, %v527
  %v666 = vpack.c.bf16 %v643, %v642
  %v667 = vpack.c.bf16 %v534, %v531
  %v668 = vpack.c.bf16 %v645, %v644
  %v669 = vpack.c.bf16 %v538, %v536
  %v670 = vpack.c.bf16 %v647, %v646
  %v671 = vpack.c.bf16 %v543, %v541
  %v672 = vpack.c.bf16 %v649, %v648
  %v673 = vpack.c.bf16 %v548, %v545
  %v674 = vpack.c.bf16 %v651, %v650
  %v675 = vpack.c.bf16 %v552, %v550
  %v676 = vld [vmem:[%s1] sm:$0xff]
  %v677 = vld [vmem:[%s1 + $0x8] sm:$0xff]
  %v678 = vld [vmem:[%s1 + $0x10] sm:$0xff]
  %v679 = vld [vmem:[%s1 + $0x18] sm:$0xff]
  %v680 = vld [vmem:[%s1 + $0x20] sm:$0xff]
  %v681 = vld [vmem:[%s1 + $0x28] sm:$0xff]
  %v682 = vld [vmem:[%s1 + $0x30] sm:$0xff]
  %v683 = vld [vmem:[%s1 + $0x38] sm:$0xff]
  %v684 = vld [vmem:[%s1 + $0x40] sm:$0xff]
  %v685 = vld [vmem:[%s1 + $0x48] sm:$0xff]
  %v686 = vld [vmem:[%s1 + $0x50] sm:$0xff]
  %v687 = vld [vmem:[%s1 + $0x58] sm:$0xff]
  %v688 = vld [vmem:[%s1 + $0x60] sm:$0xff]
  %v689 = vld [vmem:[%s1 + $0x68] sm:$0xff]
  %v690 = vld [vmem:[%s1 + $0x70] sm:$0xff]
  %v691 = vld [vmem:[%s1 + $0x78] sm:$0xff]
  %v692 = vld [vmem:[%s1 + $0x80] sm:$0xff]
  %v693 = vld [vmem:[%s1 + $0x88] sm:$0xff]
  %v694 = vld [vmem:[%s1 + $0x90] sm:$0xff]
  %v695 = vld [vmem:[%s1 + $0x98] sm:$0xff]
  %v696 = vld [vmem:[%s2] sm:$0x3]
  %v698 = vlaneseq
  %v699 = vshrl.u32 %v698, 7
  %v700 = vsub.s32 0, %v699
  %v701 = vrot.slane %v696, %v700
  %v702 = vlaneseq
  %v703 = vshrl.u32 %v702, 7
  %v704 = vsub.s32 1, %v703
  %v705 = vrot.slane %v696, %v704
  %v728 = vunpack.c.l.b16 %v676
  %v729 = vunpack.c.h.b16 %v676
  %v730 = vunpack.c.l.b16 %v677
  %v731 = vunpack.c.h.b16 %v677
  %v732 = vunpack.c.l.b16 %v678
  %v733 = vunpack.c.h.b16 %v678
  %v734 = vunpack.c.l.b16 %v679
  %v735 = vunpack.c.h.b16 %v679
  %v736 = vunpack.c.l.b16 %v680
  %v737 = vunpack.c.h.b16 %v680
  %v738 = vunpack.c.l.b16 %v681
  %v739 = vunpack.c.h.b16 %v681
  %v740 = vunpack.c.l.b16 %v682
  %v741 = vunpack.c.h.b16 %v682
  %v742 = vunpack.c.l.b16 %v683
  %v743 = vunpack.c.h.b16 %v683
  %v744 = vunpack.c.l.b16 %v684
  %v745 = vunpack.c.h.b16 %v684
  %v746 = vunpack.c.l.b16 %v685
  %v747 = vunpack.c.h.b16 %v685
  %v748 = vunpack.c.l.b16 %v686
  %v749 = vunpack.c.h.b16 %v686
  %v750 = vunpack.c.l.b16 %v687
  %v751 = vunpack.c.h.b16 %v687
  %v752 = vunpack.c.l.b16 %v688
  %v753 = vunpack.c.h.b16 %v688
  %v754 = vunpack.c.l.b16 %v689
  %v755 = vunpack.c.h.b16 %v689
  %v756 = vunpack.c.l.b16 %v690
  %v757 = vunpack.c.h.b16 %v690
  %v758 = vunpack.c.l.b16 %v691
  %v759 = vunpack.c.h.b16 %v691
  %v760 = vunpack.c.l.b16 %v692
  %v761 = vunpack.c.h.b16 %v692
  %v762 = vunpack.c.l.b16 %v693
  %v763 = vunpack.c.h.b16 %v693
  %v764 = vunpack.c.l.b16 %v694
  %v765 = vunpack.c.h.b16 %v694
  %v766 = vunpack.c.l.b16 %v695
  %v767 = vunpack.c.h.b16 %v695
  %v768 = vpack.c.b16 %v730, %v728
  %v769 = vpack.c.b16 %v731, %v729
  %v770 = vpack.c.b16 %v734, %v732
  %v771 = vpack.c.b16 %v735, %v733
  %v772 = vpack.c.b16 %v738, %v736
  %v773 = vpack.c.b16 %v739, %v737
  %v774 = vpack.c.b16 %v742, %v740
  %v775 = vpack.c.b16 %v743, %v741
  %v776 = vpack.c.b16 %v746, %v744
  %v777 = vpack.c.b16 %v747, %v745
  %v778 = vpack.c.b16 %v750, %v748
  %v779 = vpack.c.b16 %v751, %v749
  %v780 = vpack.c.b16 %v754, %v752
  %v781 = vpack.c.b16 %v755, %v753
  %v782 = vpack.c.b16 %v758, %v756
  %v783 = vpack.c.b16 %v759, %v757
  %v784 = vpack.c.b16 %v762, %v760
  %v785 = vpack.c.b16 %v763, %v761
  %v786 = vpack.c.b16 %v766, %v764
  %v787 = vpack.c.b16 %v767, %v765
  %v809 = vsel %vm577, %v653, 0
  %v812 = vsel %vm577, %v655, 0
  %v815 = vsel %vm577, %v657, 0
  %v818 = vsel %vm577, %v659, 0
  %v821 = vsel %vm577, %v661, 0
  %v824 = vsel %vm577, %v663, 0
  %v827 = vsel %vm577, %v665, 0
  %v830 = vsel %vm577, %v667, 0
  %v833 = vsel %vm577, %v669, 0
  %v836 = vsel %vm577, %v671, 0
  %v839 = vsel %vm577, %v673, 0
  %v842 = vsel %vm577, %v675, 0
  %844 = vmatprep.subr.bf16.mxu0 %v769
  %845 = vmatpush1.bf16.msra.mxu0 %v768
  %846 = vmatprep.subr.bf16.mxu0 %v771
  %847 = vmatpush1.bf16.msra.mxu0 %v770
  %848 = vmatprep.subr.bf16.mxu0 %v773
  %849 = vmatpush1.bf16.msra.mxu0 %v772
  %850 = vmatprep.subr.bf16.mxu0 %v775
  %851 = vmatpush1.bf16.msra.mxu0 %v774
  %852 = vmatprep.subr.bf16.mxu0 %v777
  %853 = vmatpush1.bf16.msra.mxu0 %v776
  %854 = vmatprep.subr.bf16.mxu0 %v779
  %855 = vmatpush1.bf16.msra.mxu0 %v778
  %856 = vmatprep.subr.bf16.mxu0 %v781
  %857 = vmatpush1.bf16.msra.mxu0 %v780
  %858 = vmatprep.subr.bf16.mxu0 %v783
  %859 = vmatpush1.bf16.msra.mxu0 %v782
  %860 = vmatprep.subr.bf16.mxu0 %v785
  %861 = vmatpush1.bf16.msra.mxu0 %v784
  %862 = vmatprep.subr.bf16.mxu0 %v787
  %863 = vmatpush1.bf16.msra.mxu0 %v786
  %864 = vmatprep.subr.bf16.mxu0 0
  %865 = vmatpush1.bf16.msra.mxu0 0
  %866 = vmatprep.subr.bf16.mxu0 0
  %867 = vmatpush1.bf16.msra.mxu0 0
  %868 = vmatprep.subr.bf16.mxu0 0
  %869 = vmatpush1.bf16.msra.mxu0 0
  %870 = vmatprep.subr.bf16.mxu0 0
  %871 = vmatpush1.bf16.msra.mxu0 0
  %872 = vmatprep.subr.bf16.mxu0 0
  %873 = vmatpush1.bf16.msra.mxu0 0
  %874 = vmatprep.subr.bf16.mxu0 0
  %875 = vmatpush1.bf16.msra.mxu0 0
  %876 = vmatprep.mubr.bf16.mxu0 %v809
  %877 = vmatmul.mubr.bf16.gmra.mrb[0].mxu0 %v652
  %v878 = vpop.f32.mrb[0].mxu0
  %v879 = vadd.f32 %v701, %v878
  %v880 = vpop.f32.mrb[0].mxu0
  %v881 = vadd.f32 %v705, %v880
  %v882 = vpop.f32.mrb[0].mxu0
  %v883 = vadd.f32 %v701, %v882
  %v884 = vpop.f32.mrb[0].mxu0
  %v885 = vadd.f32 %v705, %v884
  %886 = vmatprep.mubr.bf16.mxu0 %v812
  %887 = vmatmul.mubr.bf16.gmra.mrb[0].mxu0 %v654
  %v888 = vpop.f32.mrb[0].mxu0
  %v889 = vadd.f32 %v701, %v888
  %v890 = vpop.f32.mrb[0].mxu0
  %v891 = vadd.f32 %v705, %v890
  %v892 = vpop.f32.mrb[0].mxu0
  %v893 = vadd.f32 %v701, %v892
  %v894 = vpop.f32.mrb[0].mxu0
  %v895 = vadd.f32 %v705, %v894
  %896 = vmatprep.mubr.bf16.mxu0 %v815
  %897 = vmatmul.mubr.bf16.gmra.mrb[0].mxu0 %v656
  %v898 = vpop.f32.mrb[0].mxu0
  %v899 = vadd.f32 %v701, %v898
  %v900 = vpop.f32.mrb[0].mxu0
  %v901 = vadd.f32 %v705, %v900
  %v902 = vpop.f32.mrb[0].mxu0
  %v903 = vadd.f32 %v701, %v902
  %v904 = vpop.f32.mrb[0].mxu0
  %v905 = vadd.f32 %v705, %v904
  %906 = vmatprep.mubr.bf16.mxu0 %v818
  %907 = vmatmul.mubr.bf16.gmra.mrb[0].mxu0 %v658
  %v908 = vpop.f32.mrb[0].mxu0
  %v909 = vadd.f32 %v701, %v908
  %v910 = vpop.f32.mrb[0].mxu0
  %v911 = vadd.f32 %v705, %v910
  %v912 = vpop.f32.mrb[0].mxu0
  %v913 = vadd.f32 %v701, %v912
  %v914 = vpop.f32.mrb[0].mxu0
  %v915 = vadd.f32 %v705, %v914
  %916 = vmatprep.mubr.bf16.mxu0 %v821
  %917 = vmatmul.mubr.bf16.gmra.mrb[0].mxu0 %v660
  %v918 = vpop.f32.mrb[0].mxu0
  %v919 = vadd.f32 %v701, %v918
  %v920 = vpop.f32.mrb[0].mxu0
  %v921 = vadd.f32 %v705, %v920
  %v922 = vpop.f32.mrb[0].mxu0
  %v923 = vadd.f32 %v701, %v922
  %v924 = vpop.f32.mrb[0].mxu0
  %v925 = vadd.f32 %v705, %v924
  %926 = vmatprep.mubr.bf16.mxu0 %v824
  %927 = vmatmul.mubr.bf16.gmra.mrb[0].mxu0 %v662
  %v928 = vpop.f32.mrb[0].mxu0
  %v929 = vadd.f32 %v701, %v928
  %v930 = vpop.f32.mrb[0].mxu0
  %v931 = vadd.f32 %v705, %v930
  %v932 = vpop.f32.mrb[0].mxu0
  %v933 = vadd.f32 %v701, %v932
  %v934 = vpop.f32.mrb[0].mxu0
  %v935 = vadd.f32 %v705, %v934
  %936 = vmatprep.mubr.bf16.mxu0 %v827
  %937 = vmatmul.mubr.bf16.gmra.mrb[0].mxu0 %v664
  %v938 = vpop.f32.mrb[0].mxu0
  %v939 = vadd.f32 %v701, %v938
  %v940 = vpop.f32.mrb[0].mxu0
  %v941 = vadd.f32 %v705, %v940
  %v942 = vpop.f32.mrb[0].mxu0
  %v943 = vadd.f32 %v701, %v942
  %v944 = vpop.f32.mrb[0].mxu0
  %v945 = vadd.f32 %v705, %v944
  %946 = vmatprep.mubr.bf16.mxu0 %v830
  %947 = vmatmul.mubr.bf16.gmra.mrb[0].mxu0 %v666
  %v948 = vpop.f32.mrb[0].mxu0
  %v949 = vadd.f32 %v701, %v948
  %v950 = vpop.f32.mrb[0].mxu0
  %v951 = vadd.f32 %v705, %v950
  %v952 = vpop.f32.mrb[0].mxu0
  %v953 = vadd.f32 %v701, %v952
  %v954 = vpop.f32.mrb[0].mxu0
  %v955 = vadd.f32 %v705, %v954
  %956 = vmatprep.mubr.bf16.mxu0 %v833
  %957 = vmatmul.mubr.bf16.gmra.mrb[0].mxu0 %v668
  %v958 = vpop.f32.mrb[0].mxu0
  %v959 = vadd.f32 %v701, %v958
  %v960 = vpop.f32.mrb[0].mxu0
  %v961 = vadd.f32 %v705, %v960
  %v962 = vpop.f32.mrb[0].mxu0
  %v963 = vadd.f32 %v701, %v962
  %v964 = vpop.f32.mrb[0].mxu0
  %v965 = vadd.f32 %v705, %v964
  %966 = vmatprep.mubr.bf16.mxu0 %v836
  %967 = vmatmul.mubr.bf16.gmra.mrb[0].mxu0 %v670
  %v968 = vpop.f32.mrb[0].mxu0
  %v969 = vadd.f32 %v701, %v968
  %v970 = vpop.f32.mrb[0].mxu0
  %v971 = vadd.f32 %v705, %v970
  %v972 = vpop.f32.mrb[0].mxu0
  %v973 = vadd.f32 %v701, %v972
  %v974 = vpop.f32.mrb[0].mxu0
  %v975 = vadd.f32 %v705, %v974
  %976 = vmatprep.mubr.bf16.mxu0 %v839
  %977 = vmatmul.mubr.bf16.gmra.mrb[0].mxu0 %v672
  %v978 = vpop.f32.mrb[0].mxu0
  %v979 = vadd.f32 %v701, %v978
  %v980 = vpop.f32.mrb[0].mxu0
  %v981 = vadd.f32 %v705, %v980
  %v982 = vpop.f32.mrb[0].mxu0
  %v983 = vadd.f32 %v701, %v982
  %v984 = vpop.f32.mrb[0].mxu0
  %v985 = vadd.f32 %v705, %v984
  %986 = vmatprep.mubr.bf16.mxu0 %v842
  %987 = vmatmul.mubr.bf16.gmra.mrb[0].mxu0 %v674
  %v988 = vpop.f32.mrb[0].mxu0
  %v989 = vadd.f32 %v701, %v988
  %v990 = vpop.f32.mrb[0].mxu0
  %v991 = vadd.f32 %v705, %v990
  %v992 = vpop.f32.mrb[0].mxu0
  %v993 = vadd.f32 %v701, %v992
  %v994 = vpop.f32.mrb[0].mxu0
  %v995 = vadd.f32 %v705, %v994
  %996 = vdwg.mxu0
  %v997 = vmax.f32 %v879, 0.0
  %v998 = vmax.f32 %v881, 0.0
  %v999 = vmax.f32 %v883, 0.0
  %v1000 = vmax.f32 %v885, 0.0
  %v1001 = vmax.f32 %v889, 0.0
  %v1002 = vmax.f32 %v891, 0.0
  %v1003 = vmax.f32 %v893, 0.0
  %v1004 = vmax.f32 %v895, 0.0
  %v1005 = vmax.f32 %v899, 0.0
  %v1006 = vmax.f32 %v901, 0.0
  %v1007 = vmax.f32 %v903, 0.0
  %v1008 = vmax.f32 %v905, 0.0
  %v1009 = vmax.f32 %v909, 0.0
  %v1010 = vmax.f32 %v911, 0.0
  %v1011 = vmax.f32 %v913, 0.0
  %v1012 = vmax.f32 %v915, 0.0
  %v1013 = vmax.f32 %v919, 0.0
  %v1014 = vmax.f32 %v921, 0.0
  %v1015 = vmax.f32 %v923, 0.0
  %v1016 = vmax.f32 %v925, 0.0
  %v1017 = vmax.f32 %v929, 0.0
  %v1018 = vmax.f32 %v931, 0.0
  %v1019 = vmax.f32 %v933, 0.0
  %v1020 = vmax.f32 %v935, 0.0
  %v1021 = vmax.f32 %v939, 0.0
  %v1022 = vmax.f32 %v941, 0.0
  %v1023 = vmax.f32 %v943, 0.0
  %v1024 = vmax.f32 %v945, 0.0
  %v1025 = vmax.f32 %v949, 0.0
  %v1026 = vmax.f32 %v951, 0.0
  %v1027 = vmax.f32 %v953, 0.0
  %v1028 = vmax.f32 %v955, 0.0
  %v1029 = vmax.f32 %v959, 0.0
  %v1030 = vmax.f32 %v961, 0.0
  %v1031 = vmax.f32 %v963, 0.0
  %v1032 = vmax.f32 %v965, 0.0
  %v1033 = vmax.f32 %v969, 0.0
  %v1034 = vmax.f32 %v971, 0.0
  %v1035 = vmax.f32 %v973, 0.0
  %v1036 = vmax.f32 %v975, 0.0
  %v1037 = vmax.f32 %v979, 0.0
  %v1038 = vmax.f32 %v981, 0.0
  %v1039 = vmax.f32 %v983, 0.0
  %v1040 = vmax.f32 %v985, 0.0
  %v1041 = vmax.f32 %v989, 0.0
  %v1042 = vmax.f32 %v991, 0.0
  %v1043 = vmax.f32 %v993, 0.0
  %v1044 = vmax.f32 %v995, 0.0
  %1045 = vrot.lane.b32.xlu0 %v997, 3
  %v1046 = vpop.permute.xlu0 %1045
  %1047 = vrot.lane.b32.xlu0 %v999, 3
  %v1048 = vpop.permute.xlu0 %1047
  %1049 = vrot.lane.b32.xlu0 %v1001, 3
  %v1050 = vpop.permute.xlu0 %1049
  %1051 = vrot.lane.b32.xlu0 %v1003, 3
  %v1052 = vpop.permute.xlu0 %1051
  %1053 = vrot.lane.b32.xlu0 %v1005, 3
  %v1054 = vpop.permute.xlu0 %1053
  %1055 = vrot.lane.b32.xlu0 %v1007, 3
  %v1056 = vpop.permute.xlu0 %1055
  %1057 = vrot.lane.b32.xlu0 %v1009, 3
  %v1058 = vpop.permute.xlu0 %1057
  %1059 = vrot.lane.b32.xlu0 %v1011, 3
  %v1060 = vpop.permute.xlu0 %1059
  %1061 = vrot.lane.b32.xlu0 %v1013, 3
  %v1062 = vpop.permute.xlu0 %1061
  %1063 = vrot.lane.b32.xlu0 %v1015, 3
  %v1064 = vpop.permute.xlu0 %1063
  %1065 = vrot.lane.b32.xlu0 %v1017, 3
  %v1066 = vpop.permute.xlu0 %1065
  %1067 = vrot.lane.b32.xlu0 %v1019, 3
  %v1068 = vpop.permute.xlu0 %1067
  %1069 = vrot.lane.b32.xlu0 %v1021, 3
  %v1070 = vpop.permute.xlu0 %1069
  %1071 = vrot.lane.b32.xlu0 %v1023, 3
  %v1072 = vpop.permute.xlu0 %1071
  %1073 = vrot.lane.b32.xlu0 %v1025, 3
  %v1074 = vpop.permute.xlu0 %1073
  %1075 = vrot.lane.b32.xlu0 %v1027, 3
  %v1076 = vpop.permute.xlu0 %1075
  %1077 = vrot.lane.b32.xlu0 %v1029, 3
  %v1078 = vpop.permute.xlu0 %1077
  %1079 = vrot.lane.b32.xlu0 %v1031, 3
  %v1080 = vpop.permute.xlu0 %1079
  %1081 = vrot.lane.b32.xlu0 %v1033, 3
  %v1082 = vpop.permute.xlu0 %1081
  %1083 = vrot.lane.b32.xlu0 %v1035, 3
  %v1084 = vpop.permute.xlu0 %1083
  %1085 = vrot.lane.b32.xlu0 %v1037, 3
  %v1086 = vpop.permute.xlu0 %1085
  %1087 = vrot.lane.b32.xlu0 %v1039, 3
  %v1088 = vpop.permute.xlu0 %1087
  %1089 = vrot.lane.b32.xlu0 %v1041, 3
  %v1090 = vpop.permute.xlu0 %1089
  %1091 = vrot.lane.b32.xlu0 %v1043, 3
  %v1092 = vpop.permute.xlu0 %1091
  %1093 = vrot.lane.b32.xlu0 %v998, 3
  %v1094 = vpop.permute.xlu0 %1093
  %1095 = vrot.lane.b32.xlu0 %v1000, 3
  %v1096 = vpop.permute.xlu0 %1095
  %1097 = vrot.lane.b32.xlu0 %v1002, 3
  %v1098 = vpop.permute.xlu0 %1097
  %1099 = vrot.lane.b32.xlu0 %v1004, 3
  %v1100 = vpop.permute.xlu0 %1099
  %1101 = vrot.lane.b32.xlu0 %v1006, 3
  %v1102 = vpop.permute.xlu0 %1101
  %1103 = vrot.lane.b32.xlu0 %v1008, 3
  %v1104 = vpop.permute.xlu0 %1103
  %1105 = vrot.lane.b32.xlu0 %v1010, 3
  %v1106 = vpop.permute.xlu0 %1105
  %1107 = vrot.lane.b32.xlu0 %v1012, 3
  %v1108 = vpop.permute.xlu0 %1107
  %1109 = vrot.lane.b32.xlu0 %v1014, 3
  %v1110 = vpop.permute.xlu0 %1109
  %1111 = vrot.lane.b32.xlu0 %v1016, 3
  %v1112 = vpop.permute.xlu0 %1111
  %1113 = vrot.lane.b32.xlu0 %v1018, 3
  %v1114 = vpop.permute.xlu0 %1113
  %1115 = vrot.lane.b32.xlu0 %v1020, 3
  %v1116 = vpop.permute.xlu0 %1115
  %1117 = vrot.lane.b32.xlu0 %v1022, 3
  %v1118 = vpop.permute.xlu0 %1117
  %1119 = vrot.lane.b32.xlu0 %v1024, 3
  %v1120 = vpop.permute.xlu0 %1119
  %1121 = vrot.lane.b32.xlu0 %v1026, 3
  %v1122 = vpop.permute.xlu0 %1121
  %1123 = vrot.lane.b32.xlu0 %v1028, 3
  %v1124 = vpop.permute.xlu0 %1123
  %1125 = vrot.lane.b32.xlu0 %v1030, 3
  %v1126 = vpop.permute.xlu0 %1125
  %1127 = vrot.lane.b32.xlu0 %v1032, 3
  %v1128 = vpop.permute.xlu0 %1127
  %1129 = vrot.lane.b32.xlu0 %v1034, 3
  %v1130 = vpop.permute.xlu0 %1129
  %1131 = vrot.lane.b32.xlu0 %v1036, 3
  %v1132 = vpop.permute.xlu0 %1131
  %1133 = vrot.lane.b32.xlu0 %v1038, 3
  %v1134 = vpop.permute.xlu0 %1133
  %1135 = vrot.lane.b32.xlu0 %v1040, 3
  %v1136 = vpop.permute.xlu0 %1135
  %1137 = vrot.lane.b32.xlu0 %v1042, 3
  %v1138 = vpop.permute.xlu0 %1137
  %1139 = vrot.lane.b32.xlu0 %v1044, 3
  %v1140 = vpop.permute.xlu0 %1139
  %v1141 = vlaneseq
  %v1142 = vand.u32 %v1141, 127
  %vm1143 = vcmp.lt.s32.totalorder %v1142, 3
  %v1144 = vsel %vm1143, %v1046, %v1094
  %v1145 = vsel %vm1143, %v1048, %v1096
  %v1146 = vsel %vm1143, %v1050, %v1098
  %v1147 = vsel %vm1143, %v1052, %v1100
  %v1148 = vsel %vm1143, %v1054, %v1102
  %v1149 = vsel %vm1143, %v1056, %v1104
  %v1150 = vsel %vm1143, %v1058, %v1106
  %v1151 = vsel %vm1143, %v1060, %v1108
  %v1152 = vsel %vm1143, %v1062, %v1110
  %v1153 = vsel %vm1143, %v1064, %v1112
  %v1154 = vsel %vm1143, %v1066, %v1114
  %v1155 = vsel %vm1143, %v1068, %v1116
  %v1156 = vsel %vm1143, %v1070, %v1118
  %v1157 = vsel %vm1143, %v1072, %v1120
  %v1158 = vsel %vm1143, %v1074, %v1122
  %v1159 = vsel %vm1143, %v1076, %v1124
  %v1160 = vsel %vm1143, %v1078, %v1126
  %v1161 = vsel %vm1143, %v1080, %v1128
  %v1162 = vsel %vm1143, %v1082, %v1130
  %v1163 = vsel %vm1143, %v1084, %v1132
  %v1164 = vsel %vm1143, %v1086, %v1134
  %v1165 = vsel %vm1143, %v1088, %v1136
  %v1166 = vsel %vm1143, %v1090, %v1138
  %v1167 = vsel %vm1143, %v1092, %v1140
  %v1168 = vsel %vm1143, %v1094, %v1046
  %v1169 = vsel %vm1143, %v1096, %v1048
  %v1170 = vsel %vm1143, %v1098, %v1050
  %v1171 = vsel %vm1143, %v1100, %v1052
  %v1172 = vsel %vm1143, %v1102, %v1054
  %v1173 = vsel %vm1143, %v1104, %v1056
  %v1174 = vsel %vm1143, %v1106, %v1058
  %v1175 = vsel %vm1143, %v1108, %v1060
  %v1176 = vsel %vm1143, %v1110, %v1062
  %v1177 = vsel %vm1143, %v1112, %v1064
  %v1178 = vsel %vm1143, %v1114, %v1066
  %v1179 = vsel %vm1143, %v1116, %v1068
  %v1180 = vsel %vm1143, %v1118, %v1070
  %v1181 = vsel %vm1143, %v1120, %v1072
  %v1182 = vsel %vm1143, %v1122, %v1074
  %v1183 = vsel %vm1143, %v1124, %v1076
  %v1184 = vsel %vm1143, %v1126, %v1078
  %v1185 = vsel %vm1143, %v1128, %v1080
  %v1186 = vsel %vm1143, %v1130, %v1082
  %v1187 = vsel %vm1143, %v1132, %v1084
  %v1188 = vsel %vm1143, %v1134, %v1086
  %v1189 = vsel %vm1143, %v1136, %v1088
  %v1190 = vsel %vm1143, %v1138, %v1090
  %v1191 = vsel %vm1143, %v1140, %v1092
  %1192 = vrot.lane.b32.xlu0 %v997, 125
  %v1193 = vpop.permute.xlu0 %1192
  %1194 = vrot.lane.b32.xlu0 %v999, 125
  %v1195 = vpop.permute.xlu0 %1194
  %1196 = vrot.lane.b32.xlu0 %v1001, 125
  %v1197 = vpop.permute.xlu0 %1196
  %1198 = vrot.lane.b32.xlu0 %v1003, 125
  %v1199 = vpop.permute.xlu0 %1198
  %1200 = vrot.lane.b32.xlu0 %v1005, 125
  %v1201 = vpop.permute.xlu0 %1200
  %1202 = vrot.lane.b32.xlu0 %v1007, 125
  %v1203 = vpop.permute.xlu0 %1202
  %1204 = vrot.lane.b32.xlu0 %v1009, 125
  %v1205 = vpop.permute.xlu0 %1204
  %1206 = vrot.lane.b32.xlu0 %v1011, 125
  %v1207 = vpop.permute.xlu0 %1206
  %1208 = vrot.lane.b32.xlu0 %v1013, 125
  %v1209 = vpop.permute.xlu0 %1208
  %1210 = vrot.lane.b32.xlu0 %v1015, 125
  %v1211 = vpop.permute.xlu0 %1210
  %1212 = vrot.lane.b32.xlu0 %v1017, 125
  %v1213 = vpop.permute.xlu0 %1212
  %1214 = vrot.lane.b32.xlu0 %v1019, 125
  %v1215 = vpop.permute.xlu0 %1214
  %1216 = vrot.lane.b32.xlu0 %v1021, 125
  %v1217 = vpop.permute.xlu0 %1216
  %1218 = vrot.lane.b32.xlu0 %v1023, 125
  %v1219 = vpop.permute.xlu0 %1218
  %1220 = vrot.lane.b32.xlu0 %v1025, 125
  %v1221 = vpop.permute.xlu0 %1220
  %1222 = vrot.lane.b32.xlu0 %v1027, 125
  %v1223 = vpop.permute.xlu0 %1222
  %1224 = vrot.lane.b32.xlu0 %v1029, 125
  %v1225 = vpop.permute.xlu0 %1224
  %1226 = vrot.lane.b32.xlu0 %v1031, 125
  %v1227 = vpop.permute.xlu0 %1226
  %1228 = vrot.lane.b32.xlu0 %v1033, 125
  %v1229 = vpop.permute.xlu0 %1228
  %1230 = vrot.lane.b32.xlu0 %v1035, 125
  %v1231 = vpop.permute.xlu0 %1230
  %1232 = vrot.lane.b32.xlu0 %v1037, 125
  %v1233 = vpop.permute.xlu0 %1232
  %1234 = vrot.lane.b32.xlu0 %v1039, 125
  %v1235 = vpop.permute.xlu0 %1234
  %1236 = vrot.lane.b32.xlu0 %v1041, 125
  %v1237 = vpop.permute.xlu0 %1236
  %1238 = vrot.lane.b32.xlu0 %v1043, 125
  %v1239 = vpop.permute.xlu0 %1238
  %1240 = vrot.lane.b32.xlu0 %v998, 125
  %v1241 = vpop.permute.xlu0 %1240
  %1242 = vrot.lane.b32.xlu0 %v1000, 125
  %v1243 = vpop.permute.xlu0 %1242
  %1244 = vrot.lane.b32.xlu0 %v1002, 125
  %v1245 = vpop.permute.xlu0 %1244
  %1246 = vrot.lane.b32.xlu0 %v1004, 125
  %v1247 = vpop.permute.xlu0 %1246
  %1248 = vrot.lane.b32.xlu0 %v1006, 125
  %v1249 = vpop.permute.xlu0 %1248
  %1250 = vrot.lane.b32.xlu0 %v1008, 125
  %v1251 = vpop.permute.xlu0 %1250
  %1252 = vrot.lane.b32.xlu0 %v1010, 125
  %v1253 = vpop.permute.xlu0 %1252
  %1254 = vrot.lane.b32.xlu0 %v1012, 125
  %v1255 = vpop.permute.xlu0 %1254
  %1256 = vrot.lane.b32.xlu0 %v1014, 125
  %v1257 = vpop.permute.xlu0 %1256
  %1258 = vrot.lane.b32.xlu0 %v1016, 125
  %v1259 = vpop.permute.xlu0 %1258
  %1260 = vrot.lane.b32.xlu0 %v1018, 125
  %v1261 = vpop.permute.xlu0 %1260
  %1262 = vrot.lane.b32.xlu0 %v1020, 125
  %v1263 = vpop.permute.xlu0 %1262
  %1264 = vrot.lane.b32.xlu0 %v1022, 125
  %v1265 = vpop.permute.xlu0 %1264
  %1266 = vrot.lane.b32.xlu0 %v1024, 125
  %v1267 = vpop.permute.xlu0 %1266
  %1268 = vrot.lane.b32.xlu0 %v1026, 125
  %v1269 = vpop.permute.xlu0 %1268
  %1270 = vrot.lane.b32.xlu0 %v1028, 125
  %v1271 = vpop.permute.xlu0 %1270
  %1272 = vrot.lane.b32.xlu0 %v1030, 125
  %v1273 = vpop.permute.xlu0 %1272
  %1274 = vrot.lane.b32.xlu0 %v1032, 125
  %v1275 = vpop.permute.xlu0 %1274
  %1276 = vrot.lane.b32.xlu0 %v1034, 125
  %v1277 = vpop.permute.xlu0 %1276
  %1278 = vrot.lane.b32.xlu0 %v1036, 125
  %v1279 = vpop.permute.xlu0 %1278
  %1280 = vrot.lane.b32.xlu0 %v1038, 125
  %v1281 = vpop.permute.xlu0 %1280
  %1282 = vrot.lane.b32.xlu0 %v1040, 125
  %v1283 = vpop.permute.xlu0 %1282
  %1284 = vrot.lane.b32.xlu0 %v1042, 125
  %v1285 = vpop.permute.xlu0 %1284
  %1286 = vrot.lane.b32.xlu0 %v1044, 125
  %v1287 = vpop.permute.xlu0 %1286
  %vm1288 = vcmp.lt.s32.totalorder %v1142, 125
  %v1289 = vsel %vm1288, %v1193, %v1241
  %v1290 = vsel %vm1288, %v1195, %v1243
  %v1291 = vsel %vm1288, %v1197, %v1245
  %v1292 = vsel %vm1288, %v1199, %v1247
  %v1293 = vsel %vm1288, %v1201, %v1249
  %v1294 = vsel %vm1288, %v1203, %v1251
  %v1295 = vsel %vm1288, %v1205, %v1253
  %v1296 = vsel %vm1288, %v1207, %v1255
  %v1297 = vsel %vm1288, %v1209, %v1257
  %v1298 = vsel %vm1288, %v1211, %v1259
  %v1299 = vsel %vm1288, %v1213, %v1261
  %v1300 = vsel %vm1288, %v1215, %v1263
  %v1301 = vsel %vm1288, %v1217, %v1265
  %v1302 = vsel %vm1288, %v1219, %v1267
  %v1303 = vsel %vm1288, %v1221, %v1269
  %v1304 = vsel %vm1288, %v1223, %v1271
  %v1305 = vsel %vm1288, %v1225, %v1273
  %v1306 = vsel %vm1288, %v1227, %v1275
  %v1307 = vsel %vm1288, %v1229, %v1277
  %v1308 = vsel %vm1288, %v1231, %v1279
  %v1309 = vsel %vm1288, %v1233, %v1281
  %v1310 = vsel %vm1288, %v1235, %v1283
  %v1311 = vsel %vm1288, %v1237, %v1285
  %v1312 = vsel %vm1288, %v1239, %v1287
  %v1313 = vsel %vm1288, %v1241, %v1193
  %v1314 = vsel %vm1288, %v1243, %v1195
  %v1315 = vsel %vm1288, %v1245, %v1197
  %v1316 = vsel %vm1288, %v1247, %v1199
  %v1317 = vsel %vm1288, %v1249, %v1201
  %v1318 = vsel %vm1288, %v1251, %v1203
  %v1319 = vsel %vm1288, %v1253, %v1205
  %v1320 = vsel %vm1288, %v1255, %v1207
  %v1321 = vsel %vm1288, %v1257, %v1209
  %v1322 = vsel %vm1288, %v1259, %v1211
  %v1323 = vsel %vm1288, %v1261, %v1213
  %v1324 = vsel %vm1288, %v1263, %v1215
  %v1325 = vsel %vm1288, %v1265, %v1217
  %v1326 = vsel %vm1288, %v1267, %v1219
  %v1327 = vsel %vm1288, %v1269, %v1221
  %v1328 = vsel %vm1288, %v1271, %v1223
  %v1329 = vsel %vm1288, %v1273, %v1225
  %v1330 = vsel %vm1288, %v1275, %v1227
  %v1331 = vsel %vm1288, %v1277, %v1229
  %v1332 = vsel %vm1288, %v1279, %v1231
  %v1333 = vsel %vm1288, %v1281, %v1233
  %v1334 = vsel %vm1288, %v1283, %v1235
  %v1335 = vsel %vm1288, %v1285, %v1237
  %v1336 = vsel %vm1288, %v1287, %v1239
  %v1337 = vmax.f32 %v1168, %v1289
  %v1338 = vmax.f32 %v1144, %v1313
  %v1339 = vmax.f32 %v1169, %v1290
  %v1340 = vmax.f32 %v1145, %v1314
  %v1341 = vmax.f32 %v1170, %v1291
  %v1342 = vmax.f32 %v1146, %v1315
  %v1343 = vmax.f32 %v1171, %v1292
  %v1344 = vmax.f32 %v1147, %v1316
  %v1345 = vmax.f32 %v1172, %v1293
  %v1346 = vmax.f32 %v1148, %v1317
  %v1347 = vmax.f32 %v1173, %v1294
  %v1348 = vmax.f32 %v1149, %v1318
  %v1349 = vmax.f32 %v1174, %v1295
  %v1350 = vmax.f32 %v1150, %v1319
  %v1351 = vmax.f32 %v1175, %v1296
  %v1352 = vmax.f32 %v1151, %v1320
  %v1353 = vmax.f32 %v1176, %v1297
  %v1354 = vmax.f32 %v1152, %v1321
  %v1355 = vmax.f32 %v1177, %v1298
  %v1356 = vmax.f32 %v1153, %v1322
  %v1357 = vmax.f32 %v1178, %v1299
  %v1358 = vmax.f32 %v1154, %v1323
  %v1359 = vmax.f32 %v1179, %v1300
  %v1360 = vmax.f32 %v1155, %v1324
  %v1361 = vmax.f32 %v1180, %v1301
  %v1362 = vmax.f32 %v1156, %v1325
  %v1363 = vmax.f32 %v1181, %v1302
  %v1364 = vmax.f32 %v1157, %v1326
  %v1365 = vmax.f32 %v1182, %v1303
  %v1366 = vmax.f32 %v1158, %v1327
  %v1367 = vmax.f32 %v1183, %v1304
  %v1368 = vmax.f32 %v1159, %v1328
  %v1369 = vmax.f32 %v1184, %v1305
  %v1370 = vmax.f32 %v1160, %v1329
  %v1371 = vmax.f32 %v1185, %v1306
  %v1372 = vmax.f32 %v1161, %v1330
  %v1373 = vmax.f32 %v1186, %v1307
  %v1374 = vmax.f32 %v1162, %v1331
  %v1375 = vmax.f32 %v1187, %v1308
  %v1376 = vmax.f32 %v1163, %v1332
  %v1377 = vmax.f32 %v1188, %v1309
  %v1378 = vmax.f32 %v1164, %v1333
  %v1379 = vmax.f32 %v1189, %v1310
  %v1380 = vmax.f32 %v1165, %v1334
  %v1381 = vmax.f32 %v1190, %v1311
  %v1382 = vmax.f32 %v1166, %v1335
  %v1383 = vmax.f32 %v1191, %v1312
  %v1384 = vmax.f32 %v1167, %v1336
  %v1385 = vpack.c.bf16 %v1339, %v1337
  %v1386 = vpack.c.bf16 %v1340, %v1338
  %v1387 = vpack.c.bf16 %v1343, %v1341
  %v1388 = vpack.c.bf16 %v1344, %v1342
  %v1389 = vpack.c.bf16 %v1347, %v1345
  %v1390 = vpack.c.bf16 %v1348, %v1346
  %v1391 = vpack.c.bf16 %v1351, %v1349
  %v1392 = vpack.c.bf16 %v1352, %v1350
  %v1393 = vpack.c.bf16 %v1355, %v1353
  %v1394 = vpack.c.bf16 %v1356, %v1354
  %v1395 = vpack.c.bf16 %v1359, %v1357
  %v1396 = vpack.c.bf16 %v1360, %v1358
  %v1397 = vpack.c.bf16 %v1363, %v1361
  %v1398 = vpack.c.bf16 %v1364, %v1362
  %v1399 = vpack.c.bf16 %v1367, %v1365
  %v1400 = vpack.c.bf16 %v1368, %v1366
  %v1401 = vpack.c.bf16 %v1371, %v1369
  %v1402 = vpack.c.bf16 %v1372, %v1370
  %v1403 = vpack.c.bf16 %v1375, %v1373
  %v1404 = vpack.c.bf16 %v1376, %v1374
  %v1405 = vpack.c.bf16 %v1379, %v1377
  %v1406 = vpack.c.bf16 %v1380, %v1378
  %v1407 = vpack.c.bf16 %v1383, %v1381
  %v1408 = vpack.c.bf16 %v1384, %v1382
  %v1409 = vld [vmem:[%s3] sm:$0xf]
  %v1410 = vld [vmem:[%s3 + $0x4] sm:$0xf]
  %v1411 = vld [vmem:[%s3 + $0x8] sm:$0xf]
  %v1412 = vld [vmem:[%s3 + $0xc] sm:$0xf]
  %v1413 = vld [vmem:[%s3 + $0x10] sm:$0xf]
  %v1414 = vld [vmem:[%s3 + $0x14] sm:$0xf]
  %v1415 = vld [vmem:[%s3 + $0x18] sm:$0xf]
  %v1416 = vld [vmem:[%s3 + $0x1c] sm:$0xf]
  %v1417 = vld [vmem:[%s3 + $0x20] sm:$0xf]
  %v1418 = vld [vmem:[%s3 + $0x24] sm:$0xf]
  %v1419 = vld [vmem:[%s3 + $0x28] sm:$0xf]
  %v1420 = vld [vmem:[%s3 + $0x2c] sm:$0xf]
  %v1421 = vld [vmem:[%s3 + $0x30] sm:$0xf]
  %v1422 = vld [vmem:[%s3 + $0x34] sm:$0xf]
  %v1423 = vld [vmem:[%s3 + $0x38] sm:$0xf]
  %v1424 = vld [vmem:[%s3 + $0x3c] sm:$0xf]
  %v1425 = vld [vmem:[%s3 + $0x40] sm:$0xf]
  %v1426 = vld [vmem:[%s3 + $0x44] sm:$0xf]
  %v1427 = vld [vmem:[%s3 + $0x48] sm:$0xf]
  %v1428 = vld [vmem:[%s3 + $0x4c] sm:$0xf]
  %v1429 = vld [vmem:[%s3 + $0x50] sm:$0xf]
  %v1430 = vld [vmem:[%s3 + $0x54] sm:$0xf]
  %v1431 = vld [vmem:[%s3 + $0x58] sm:$0xf]
  %v1432 = vld [vmem:[%s3 + $0x5c] sm:$0xf]
  %v1433 = vld [vmem:[%s3 + $0x60] sm:$0xf]
  %v1434 = vld [vmem:[%s3 + $0x64] sm:$0xf]
  %v1435 = vld [vmem:[%s3 + $0x68] sm:$0xf]
  %v1436 = vld [vmem:[%s3 + $0x6c] sm:$0xf]
  %v1437 = vld [vmem:[%s3 + $0x70] sm:$0xf]
  %v1438 = vld [vmem:[%s3 + $0x74] sm:$0xf]
  %v1439 = vld [vmem:[%s3 + $0x78] sm:$0xf]
  %v1440 = vld [vmem:[%s3 + $0x7c] sm:$0xf]
  %v1473 = vunpack.c.l.b16 %v1409
  %v1474 = vunpack.c.l.b16 %v1410
  %v1475 = vunpack.c.l.b16 %v1411
  %v1476 = vunpack.c.l.b16 %v1412
  %v1477 = vunpack.c.l.b16 %v1413
  %v1478 = vunpack.c.l.b16 %v1414
  %v1479 = vunpack.c.l.b16 %v1415
  %v1480 = vunpack.c.l.b16 %v1416
  %v1481 = vunpack.c.l.b16 %v1417
  %v1482 = vunpack.c.l.b16 %v1418
  %v1483 = vunpack.c.l.b16 %v1419
  %v1484 = vunpack.c.l.b16 %v1420
  %v1485 = vunpack.c.l.b16 %v1421
  %v1486 = vunpack.c.l.b16 %v1422
  %v1487 = vunpack.c.l.b16 %v1423
  %v1488 = vunpack.c.l.b16 %v1424
  %v1489 = vunpack.c.l.b16 %v1425
  %v1490 = vunpack.c.l.b16 %v1426
  %v1491 = vunpack.c.l.b16 %v1427
  %v1492 = vunpack.c.l.b16 %v1428
  %v1493 = vunpack.c.l.b16 %v1429
  %v1494 = vunpack.c.l.b16 %v1430
  %v1495 = vunpack.c.l.b16 %v1431
  %v1496 = vunpack.c.l.b16 %v1432
  %v1497 = vunpack.c.l.b16 %v1433
  %v1498 = vunpack.c.l.b16 %v1434
  %v1499 = vunpack.c.l.b16 %v1435
  %v1500 = vunpack.c.l.b16 %v1436
  %v1501 = vunpack.c.l.b16 %v1437
  %v1502 = vunpack.c.l.b16 %v1438
  %v1503 = vunpack.c.l.b16 %v1439
  %v1504 = vunpack.c.l.b16 %v1440
  %v1505 = vpack.c.b16 %v1474, %v1473
  %v1506 = vpack.c.b16 %v1476, %v1475
  %v1507 = vpack.c.b16 %v1478, %v1477
  %v1508 = vpack.c.b16 %v1480, %v1479
  %v1509 = vpack.c.b16 %v1482, %v1481
  %v1510 = vpack.c.b16 %v1484, %v1483
  %v1511 = vpack.c.b16 %v1486, %v1485
  %v1512 = vpack.c.b16 %v1488, %v1487
  %v1513 = vpack.c.b16 %v1490, %v1489
  %v1514 = vpack.c.b16 %v1492, %v1491
  %v1515 = vpack.c.b16 %v1494, %v1493
  %v1516 = vpack.c.b16 %v1496, %v1495
  %v1517 = vpack.c.b16 %v1498, %v1497
  %v1518 = vpack.c.b16 %v1500, %v1499
  %v1519 = vpack.c.b16 %v1502, %v1501
  %v1520 = vpack.c.b16 %v1504, %v1503
  %1537 = vmatprep.subr.bf16.mxu0 0
  %1538 = vmatpush1.bf16.msra.mxu0 %v1505
  %1539 = vmatprep.subr.bf16.mxu0 0
  %1540 = vmatpush1.bf16.msra.mxu0 %v1506
  %1541 = vmatprep.subr.bf16.mxu0 0
  %1542 = vmatpush1.bf16.msra.mxu0 %v1507
  %1543 = vmatprep.subr.bf16.mxu0 0
  %1544 = vmatpush1.bf16.msra.mxu0 %v1508
  %1545 = vmatprep.subr.bf16.mxu0 0
  %1546 = vmatpush1.bf16.msra.mxu0 %v1509
  %1547 = vmatprep.subr.bf16.mxu0 0
  %1548 = vmatpush1.bf16.msra.mxu0 %v1510
  %1549 = vmatprep.subr.bf16.mxu0 0
  %1550 = vmatpush1.bf16.msra.mxu0 %v1511
  %1551 = vmatprep.subr.bf16.mxu0 0
  %1552 = vmatpush1.bf16.msra.mxu0 %v1512
  %1553 = vmatprep.subr.bf16.mxu0 0
  %1554 = vmatpush1.bf16.msra.mxu0 %v1513
  %1555 = vmatprep.subr.bf16.mxu0 0
  %1556 = vmatpush1.bf16.msra.mxu0 %v1514
  %1557 = vmatprep.subr.bf16.mxu0 0
  %1558 = vmatpush1.bf16.msra.mxu0 %v1515
  %1559 = vmatprep.subr.bf16.mxu0 0
  %1560 = vmatpush1.bf16.msra.mxu0 %v1516
  %1561 = vmatprep.subr.bf16.mxu0 0
  %1562 = vmatpush1.bf16.msra.mxu0 %v1517
  %1563 = vmatprep.subr.bf16.mxu0 0
  %1564 = vmatpush1.bf16.msra.mxu0 %v1518
  %1565 = vmatprep.subr.bf16.mxu0 0
  %1566 = vmatpush1.bf16.msra.mxu0 %v1519
  %1567 = vmatprep.subr.bf16.mxu0 0
  %1568 = vmatpush1.bf16.msra.mxu0 %v1520
  %1569 = vmatprep.mubr.bf16.mxu0 %v1386
  %1570 = vmatmul.mubr.bf16.gmra.mrb[0].mxu0 %v1385
  %v1571 = vpop.f32.mrb[0].mxu0
  %v1572 = vadd.f32 0.0, %v1571
  %v1573 = vpop.f32.mrb[0].mxu0
  %v1574 = vpop.f32.mrb[0].mxu0
  %v1575 = vadd.f32 0.0, %v1574
  %v1576 = vpop.f32.mrb[0].mxu0
  %1577 = vmatprep.mubr.bf16.mxu0 %v1388
  %1578 = vmatmul.mubr.bf16.gmra.mrb[0].mxu0 %v1387
  %v1579 = vpop.f32.mrb[0].mxu0
  %v1580 = vadd.f32 0.0, %v1579
  %v1581 = vpop.f32.mrb[0].mxu0
  %v1582 = vpop.f32.mrb[0].mxu0
  %v1583 = vadd.f32 0.0, %v1582
  %v1584 = vpop.f32.mrb[0].mxu0
  %1585 = vmatprep.mubr.bf16.mxu0 %v1390
  %1586 = vmatmul.mubr.bf16.gmra.mrb[0].mxu0 %v1389
  %v1587 = vpop.f32.mrb[0].mxu0
  %v1588 = vadd.f32 0.0, %v1587
  %v1589 = vpop.f32.mrb[0].mxu0
  %v1590 = vpop.f32.mrb[0].mxu0
  %v1591 = vadd.f32 0.0, %v1590
  %v1592 = vpop.f32.mrb[0].mxu0
  %1593 = vmatprep.mubr.bf16.mxu0 %v1392
  %1594 = vmatmul.mubr.bf16.gmra.mrb[0].mxu0 %v1391
  %v1595 = vpop.f32.mrb[0].mxu0
  %v1596 = vadd.f32 0.0, %v1595
  %v1597 = vpop.f32.mrb[0].mxu0
  %v1598 = vpop.f32.mrb[0].mxu0
  %v1599 = vadd.f32 0.0, %v1598
  %v1600 = vpop.f32.mrb[0].mxu0
  %1601 = vmatprep.mubr.bf16.mxu0 %v1394
  %1602 = vmatmul.mubr.bf16.gmra.mrb[0].mxu0 %v1393
  %v1603 = vpop.f32.mrb[0].mxu0
  %v1604 = vadd.f32 0.0, %v1603
  %v1605 = vpop.f32.mrb[0].mxu0
  %v1606 = vpop.f32.mrb[0].mxu0
  %v1607 = vadd.f32 0.0, %v1606
  %v1608 = vpop.f32.mrb[0].mxu0
  %1609 = vmatprep.mubr.bf16.mxu0 %v1396
  %1610 = vmatmul.mubr.bf16.gmra.mrb[0].mxu0 %v1395
  %v1611 = vpop.f32.mrb[0].mxu0
  %v1612 = vadd.f32 0.0, %v1611
  %v1613 = vpop.f32.mrb[0].mxu0
  %v1614 = vpop.f32.mrb[0].mxu0
  %v1615 = vadd.f32 0.0, %v1614
  %v1616 = vpop.f32.mrb[0].mxu0
  %1617 = vmatprep.mubr.bf16.mxu0 %v1398
  %1618 = vmatmul.mubr.bf16.gmra.mrb[0].mxu0 %v1397
  %v1619 = vpop.f32.mrb[0].mxu0
  %v1620 = vadd.f32 0.0, %v1619
  %v1621 = vpop.f32.mrb[0].mxu0
  %v1622 = vpop.f32.mrb[0].mxu0
  %v1623 = vadd.f32 0.0, %v1622
  %v1624 = vpop.f32.mrb[0].mxu0
  %1625 = vmatprep.mubr.bf16.mxu0 %v1400
  %1626 = vmatmul.mubr.bf16.gmra.mrb[0].mxu0 %v1399
  %v1627 = vpop.f32.mrb[0].mxu0
  %v1628 = vadd.f32 0.0, %v1627
  %v1629 = vpop.f32.mrb[0].mxu0
  %v1630 = vpop.f32.mrb[0].mxu0
  %v1631 = vadd.f32 0.0, %v1630
  %v1632 = vpop.f32.mrb[0].mxu0
  %1633 = vmatprep.mubr.bf16.mxu0 %v1402
  %1634 = vmatmul.mubr.bf16.gmra.mrb[0].mxu0 %v1401
  %v1635 = vpop.f32.mrb[0].mxu0
  %v1636 = vadd.f32 0.0, %v1635
  %v1637 = vpop.f32.mrb[0].mxu0
  %v1638 = vpop.f32.mrb[0].mxu0
  %v1639 = vadd.f32 0.0, %v1638
  %v1640 = vpop.f32.mrb[0].mxu0
  %1641 = vmatprep.mubr.bf16.mxu0 %v1404
  %1642 = vmatmul.mubr.bf16.gmra.mrb[0].mxu0 %v1403
  %v1643 = vpop.f32.mrb[0].mxu0
  %v1644 = vadd.f32 0.0, %v1643
  %v1645 = vpop.f32.mrb[0].mxu0
  %v1646 = vpop.f32.mrb[0].mxu0
  %v1647 = vadd.f32 0.0, %v1646
  %v1648 = vpop.f32.mrb[0].mxu0
  %1649 = vmatprep.mubr.bf16.mxu0 %v1406
  %1650 = vmatmul.mubr.bf16.gmra.mrb[0].mxu0 %v1405
  %v1651 = vpop.f32.mrb[0].mxu0
  %v1652 = vadd.f32 0.0, %v1651
  %v1653 = vpop.f32.mrb[0].mxu0
  %v1654 = vpop.f32.mrb[0].mxu0
  %v1655 = vadd.f32 0.0, %v1654
  %v1656 = vpop.f32.mrb[0].mxu0
  %1657 = vmatprep.mubr.bf16.mxu0 %v1408
  %1658 = vmatmul.mubr.bf16.gmra.mrb[0].mxu0 %v1407
  %v1659 = vpop.f32.mrb[0].mxu0
  %v1660 = vadd.f32 0.0, %v1659
  %v1661 = vpop.f32.mrb[0].mxu0
  %v1662 = vpop.f32.mrb[0].mxu0
  %v1663 = vadd.f32 0.0, %v1662
  %v1664 = vpop.f32.mrb[0].mxu0
  %1665 = vdwg.mxu0
  %v1674 = vrot.slane %v1572, 1
  %v1675 = vrot.slane %v1583, 1
  %v1676 = vrot.slane %v1596, 1
  %v1677 = vrot.slane %v1607, 1
  %v1678 = vrot.slane %v1620, 1
  %v1679 = vrot.slane %v1631, 1
  %v1680 = vrot.slane %v1644, 1
  %v1681 = vrot.slane %v1655, 1
  %v1690 = vmax.f32 %v1572, %v1674
  %v1691 = vmax.f32 %v1583, %v1675
  %v1692 = vmax.f32 %v1596, %v1676
  %v1693 = vmax.f32 %v1607, %v1677
  %v1694 = vmax.f32 %v1620, %v1678
  %v1695 = vmax.f32 %v1631, %v1679
  %v1696 = vmax.f32 %v1644, %v1680
  %v1697 = vmax.f32 %v1655, %v1681
  %v1706 = vrot.slane %v1575, 1
  %v1707 = vrot.slane %v1588, 1
  %v1708 = vrot.slane %v1599, 1
  %v1709 = vrot.slane %v1612, 1
  %v1710 = vrot.slane %v1623, 1
  %v1711 = vrot.slane %v1636, 1
  %v1712 = vrot.slane %v1647, 1
  %v1713 = vrot.slane %v1660, 1
  %v1722 = vmax.f32 %v1575, %v1706
  %v1723 = vmax.f32 %v1588, %v1707
  %v1724 = vmax.f32 %v1599, %v1708
  %v1725 = vmax.f32 %v1612, %v1709
  %v1726 = vmax.f32 %v1623, %v1710
  %v1727 = vmax.f32 %v1636, %v1711
  %v1728 = vmax.f32 %v1647, %v1712
  %v1729 = vmax.f32 %v1660, %v1713
  %v1738 = vrot.slane %v1580, 1
  %v1739 = vrot.slane %v1591, 1
  %v1740 = vrot.slane %v1604, 1
  %v1741 = vrot.slane %v1615, 1
  %v1742 = vrot.slane %v1628, 1
  %v1743 = vrot.slane %v1639, 1
  %v1744 = vrot.slane %v1652, 1
  %v1745 = vrot.slane %v1663, 1
  %v1754 = vmax.f32 %v1580, %v1738
  %v1755 = vmax.f32 %v1591, %v1739
  %v1756 = vmax.f32 %v1604, %v1740
  %v1757 = vmax.f32 %v1615, %v1741
  %v1758 = vmax.f32 %v1628, %v1742
  %v1759 = vmax.f32 %v1639, %v1743
  %v1760 = vmax.f32 %v1652, %v1744
  %v1761 = vmax.f32 %v1663, %v1745
  %v1770 = vrot.slane %v1690, 1
  %v1771 = vrot.slane %v1691, 1
  %v1772 = vrot.slane %v1692, 1
  %v1773 = vrot.slane %v1693, 1
  %v1774 = vrot.slane %v1694, 1
  %v1775 = vrot.slane %v1695, 1
  %v1776 = vrot.slane %v1696, 1
  %v1777 = vrot.slane %v1697, 1
  %v1786 = vrot.slane %v1690, 2
  %v1787 = vrot.slane %v1691, 2
  %v1788 = vrot.slane %v1692, 2
  %v1789 = vrot.slane %v1693, 2
  %v1790 = vrot.slane %v1694, 2
  %v1791 = vrot.slane %v1695, 2
  %v1792 = vrot.slane %v1696, 2
  %v1793 = vrot.slane %v1697, 2
  %v1802 = vrot.slane %v1690, 3
  %v1803 = vrot.slane %v1691, 3
  %v1804 = vrot.slane %v1692, 3
  %v1805 = vrot.slane %v1693, 3
  %v1806 = vrot.slane %v1694, 3
  %v1807 = vrot.slane %v1695, 3
  %v1808 = vrot.slane %v1696, 3
  %v1809 = vrot.slane %v1697, 3
  %v1826 = vrot.slane %v1722, 4
  %v1827 = vrot.slane %v1723, 4
  %v1828 = vrot.slane %v1724, 4
  %v1829 = vrot.slane %v1725, 4
  %v1830 = vrot.slane %v1726, 4
  %v1831 = vrot.slane %v1727, 4
  %v1832 = vrot.slane %v1728, 4
  %v1833 = vrot.slane %v1729, 4
  %v1842 = vrot.slane %v1722, 5
  %v1843 = vrot.slane %v1723, 5
  %v1844 = vrot.slane %v1724, 5
  %v1845 = vrot.slane %v1725, 5
  %v1846 = vrot.slane %v1726, 5
  %v1847 = vrot.slane %v1727, 5
  %v1848 = vrot.slane %v1728, 5
  %v1849 = vrot.slane %v1729, 5
  %v1858 = vrot.slane %v1722, 6
  %v1859 = vrot.slane %v1723, 6
  %v1860 = vrot.slane %v1724, 6
  %v1861 = vrot.slane %v1725, 6
  %v1862 = vrot.slane %v1726, 6
  %v1863 = vrot.slane %v1727, 6
  %v1864 = vrot.slane %v1728, 6
  %v1865 = vrot.slane %v1729, 6
  %v1874 = vrot.slane %v1722, 7
  %v1875 = vrot.slane %v1723, 7
  %v1876 = vrot.slane %v1724, 7
  %v1877 = vrot.slane %v1725, 7
  %v1878 = vrot.slane %v1726, 7
  %v1879 = vrot.slane %v1727, 7
  %v1880 = vrot.slane %v1728, 7
  %v1881 = vrot.slane %v1729, 7
  %v1898 = vrot.slane %v1754, 1
  %v1899 = vrot.slane %v1755, 1
  %v1900 = vrot.slane %v1756, 1
  %v1901 = vrot.slane %v1757, 1
  %v1902 = vrot.slane %v1758, 1
  %v1903 = vrot.slane %v1759, 1
  %v1904 = vrot.slane %v1760, 1
  %v1905 = vrot.slane %v1761, 1
  %v1914 = vrot.slane %v1754, 2
  %v1915 = vrot.slane %v1755, 2
  %v1916 = vrot.slane %v1756, 2
  %v1917 = vrot.slane %v1757, 2
  %v1918 = vrot.slane %v1758, 2
  %v1919 = vrot.slane %v1759, 2
  %v1920 = vrot.slane %v1760, 2
  %v1921 = vrot.slane %v1761, 2
  %v1930 = vrot.slane %v1754, 3
  %v1931 = vrot.slane %v1755, 3
  %v1932 = vrot.slane %v1756, 3
  %v1933 = vrot.slane %v1757, 3
  %v1934 = vrot.slane %v1758, 3
  %v1935 = vrot.slane %v1759, 3
  %v1936 = vrot.slane %v1760, 3
  %v1937 = vrot.slane %v1761, 3
  %vm1946 = vcmask 1040384
  %v1947 = vsel %vm1946, %v1690, %v1770
  %v1948 = vsel %vm1946, %v1691, %v1771
  %v1949 = vsel %vm1946, %v1692, %v1772
  %v1950 = vsel %vm1946, %v1693, %v1773
  %v1951 = vsel %vm1946, %v1694, %v1774
  %v1952 = vsel %vm1946, %v1695, %v1775
  %v1953 = vsel %vm1946, %v1696, %v1776
  %v1954 = vsel %vm1946, %v1697, %v1777
  %vm1955 = vcmask 1041408
  %v1956 = vsel %vm1955, %v1947, %v1786
  %v1957 = vsel %vm1955, %v1948, %v1787
  %v1958 = vsel %vm1955, %v1949, %v1788
  %v1959 = vsel %vm1955, %v1950, %v1789
  %v1960 = vsel %vm1955, %v1951, %v1790
  %v1961 = vsel %vm1955, %v1952, %v1791
  %v1962 = vsel %vm1955, %v1953, %v1792
  %v1963 = vsel %vm1955, %v1954, %v1793
  %vm1964 = vcmask 1042432
  %v1965 = vsel %vm1964, %v1956, %v1802
  %v1966 = vsel %vm1964, %v1957, %v1803
  %v1967 = vsel %vm1964, %v1958, %v1804
  %v1968 = vsel %vm1964, %v1959, %v1805
  %v1969 = vsel %vm1964, %v1960, %v1806
  %v1970 = vsel %vm1964, %v1961, %v1807
  %v1971 = vsel %vm1964, %v1962, %v1808
  %v1972 = vsel %vm1964, %v1963, %v1809
  %v1973 = vsel %vm496, %v1965, %v1826
  %v1974 = vsel %vm496, %v1966, %v1827
  %v1975 = vsel %vm496, %v1967, %v1828
  %v1976 = vsel %vm496, %v1968, %v1829
  %v1977 = vsel %vm496, %v1969, %v1830
  %v1978 = vsel %vm496, %v1970, %v1831
  %v1979 = vsel %vm496, %v1971, %v1832
  %v1980 = vsel %vm496, %v1972, %v1833
  %v1981 = vsel %vm367, %v1973, %v1842
  %v1982 = vsel %vm367, %v1974, %v1843
  %v1983 = vsel %vm367, %v1975, %v1844
  %v1984 = vsel %vm367, %v1976, %v1845
  %v1985 = vsel %vm367, %v1977, %v1846
  %v1986 = vsel %vm367, %v1978, %v1847
  %v1987 = vsel %vm367, %v1979, %v1848
  %v1988 = vsel %vm367, %v1980, %v1849
  %v1989 = vsel %vm238, %v1981, %v1858
  %v1990 = vsel %vm238, %v1982, %v1859
  %v1991 = vsel %vm238, %v1983, %v1860
  %v1992 = vsel %vm238, %v1984, %v1861
  %v1993 = vsel %vm238, %v1985, %v1862
  %v1994 = vsel %vm238, %v1986, %v1863
  %v1995 = vsel %vm238, %v1987, %v1864
  %v1996 = vsel %vm238, %v1988, %v1865
  %v1997 = vsel %vm109, %v1989, %v1874
  %v1998 = vsel %vm109, %v1990, %v1875
  %v1999 = vsel %vm109, %v1991, %v1876
  %v2000 = vsel %vm109, %v1992, %v1877
  %v2001 = vsel %vm109, %v1993, %v1878
  %v2002 = vsel %vm109, %v1994, %v1879
  %v2003 = vsel %vm109, %v1995, %v1880
  %v2004 = vsel %vm109, %v1996, %v1881
  %v2005 = vsel %vm1946, %v1754, %v1898
  %v2006 = vsel %vm1946, %v1755, %v1899
  %v2007 = vsel %vm1946, %v1756, %v1900
  %v2008 = vsel %vm1946, %v1757, %v1901
  %v2009 = vsel %vm1946, %v1758, %v1902
  %v2010 = vsel %vm1946, %v1759, %v1903
  %v2011 = vsel %vm1946, %v1760, %v1904
  %v2012 = vsel %vm1946, %v1761, %v1905
  %v2013 = vsel %vm1955, %v2005, %v1914
  %v2014 = vsel %vm1955, %v2006, %v1915
  %v2015 = vsel %vm1955, %v2007, %v1916
  %v2016 = vsel %vm1955, %v2008, %v1917
  %v2017 = vsel %vm1955, %v2009, %v1918
  %v2018 = vsel %vm1955, %v2010, %v1919
  %v2019 = vsel %vm1955, %v2011, %v1920
  %v2020 = vsel %vm1955, %v2012, %v1921
  %v2021 = vsel %vm1964, %v2013, %v1930
  %v2022 = vsel %vm1964, %v2014, %v1931
  %v2023 = vsel %vm1964, %v2015, %v1932
  %v2024 = vsel %vm1964, %v2016, %v1933
  %v2025 = vsel %vm1964, %v2017, %v1934
  %v2026 = vsel %vm1964, %v2018, %v1935
  %v2027 = vsel %vm1964, %v2019, %v1936
  %v2028 = vsel %vm1964, %v2020, %v1937
  %v2045 = vrot.slane %v1997, 1
  %v2046 = vrot.slane %v2021, 1
  %v2047 = vsel %vm109, %v2045, %v2046
  %v2048 = vrot.slane %v1998, 1
  %v2049 = vrot.slane %v2022, 1
  %v2050 = vsel %vm109, %v2048, %v2049
  %v2051 = vrot.slane %v1999, 1
  %v2052 = vrot.slane %v2023, 1
  %v2053 = vsel %vm109, %v2051, %v2052
  %v2054 = vrot.slane %v2000, 1
  %v2055 = vrot.slane %v2024, 1
  %v2056 = vsel %vm109, %v2054, %v2055
  %v2057 = vrot.slane %v2001, 1
  %v2058 = vrot.slane %v2025, 1
  %v2059 = vsel %vm109, %v2057, %v2058
  %v2060 = vrot.slane %v2002, 1
  %v2061 = vrot.slane %v2026, 1
  %v2062 = vsel %vm109, %v2060, %v2061
  %v2063 = vrot.slane %v2003, 1
  %v2064 = vrot.slane %v2027, 1
  %v2065 = vsel %vm109, %v2063, %v2064
  %v2066 = vrot.slane %v2004, 1
  %v2067 = vrot.slane %v2028, 1
  %v2068 = vsel %vm109, %v2066, %v2067
  %2069 = vrot.lane.b32.xlu0 %v2047, 80
  %v2070 = vpop.permute.xlu0 %2069
  %2071 = vrot.lane.b32.xlu0 %v2050, 80
  %v2072 = vpop.permute.xlu0 %2071
  %2073 = vrot.lane.b32.xlu0 %v2053, 80
  %v2074 = vpop.permute.xlu0 %2073
  %2075 = vrot.lane.b32.xlu0 %v2056, 80
  %v2076 = vpop.permute.xlu0 %2075
  %2077 = vrot.lane.b32.xlu0 %v2059, 80
  %v2078 = vpop.permute.xlu0 %2077
  %2079 = vrot.lane.b32.xlu0 %v2062, 80
  %v2080 = vpop.permute.xlu0 %2079
  %2081 = vrot.lane.b32.xlu0 %v2065, 80
  %v2082 = vpop.permute.xlu0 %2081
  %2083 = vrot.lane.b32.xlu0 %v2068, 80
  %v2084 = vpop.permute.xlu0 %2083
  %v2093 = vrot.slane %v1997, 2
  %v2094 = vrot.slane %v2021, 2
  %v2095 = vsel %vm238, %v2093, %v2094
  %v2096 = vrot.slane %v1998, 2
  %v2097 = vrot.slane %v2022, 2
  %v2098 = vsel %vm238, %v2096, %v2097
  %v2099 = vrot.slane %v1999, 2
  %v2100 = vrot.slane %v2023, 2
  %v2101 = vsel %vm238, %v2099, %v2100
  %v2102 = vrot.slane %v2000, 2
  %v2103 = vrot.slane %v2024, 2
  %v2104 = vsel %vm238, %v2102, %v2103
  %v2105 = vrot.slane %v2001, 2
  %v2106 = vrot.slane %v2025, 2
  %v2107 = vsel %vm238, %v2105, %v2106
  %v2108 = vrot.slane %v2002, 2
  %v2109 = vrot.slane %v2026, 2
  %v2110 = vsel %vm238, %v2108, %v2109
  %v2111 = vrot.slane %v2003, 2
  %v2112 = vrot.slane %v2027, 2
  %v2113 = vsel %vm238, %v2111, %v2112
  %v2114 = vrot.slane %v2004, 2
  %v2115 = vrot.slane %v2028, 2
  %v2116 = vsel %vm238, %v2114, %v2115
  %2117 = vrot.lane.b32.xlu0 %v2095, 32
  %v2118 = vpop.permute.xlu0 %2117
  %2119 = vrot.lane.b32.xlu0 %v2098, 32
  %v2120 = vpop.permute.xlu0 %2119
  %2121 = vrot.lane.b32.xlu0 %v2101, 32
  %v2122 = vpop.permute.xlu0 %2121
  %2123 = vrot.lane.b32.xlu0 %v2104, 32
  %v2124 = vpop.permute.xlu0 %2123
  %2125 = vrot.lane.b32.xlu0 %v2107, 32
  %v2126 = vpop.permute.xlu0 %2125
  %2127 = vrot.lane.b32.xlu0 %v2110, 32
  %v2128 = vpop.permute.xlu0 %2127
  %2129 = vrot.lane.b32.xlu0 %v2113, 32
  %v2130 = vpop.permute.xlu0 %2129
  %2131 = vrot.lane.b32.xlu0 %v2116, 32
  %v2132 = vpop.permute.xlu0 %2131
  %v2141 = vrot.slane %v1997, 3
  %v2142 = vrot.slane %v2021, 3
  %v2143 = vsel %vm367, %v2141, %v2142
  %v2144 = vrot.slane %v1998, 3
  %v2145 = vrot.slane %v2022, 3
  %v2146 = vsel %vm367, %v2144, %v2145
  %v2147 = vrot.slane %v1999, 3
  %v2148 = vrot.slane %v2023, 3
  %v2149 = vsel %vm367, %v2147, %v2148
  %v2150 = vrot.slane %v2000, 3
  %v2151 = vrot.slane %v2024, 3
  %v2152 = vsel %vm367, %v2150, %v2151
  %v2153 = vrot.slane %v2001, 3
  %v2154 = vrot.slane %v2025, 3
  %v2155 = vsel %vm367, %v2153, %v2154
  %v2156 = vrot.slane %v2002, 3
  %v2157 = vrot.slane %v2026, 3
  %v2158 = vsel %vm367, %v2156, %v2157
  %v2159 = vrot.slane %v2003, 3
  %v2160 = vrot.slane %v2027, 3
  %v2161 = vsel %vm367, %v2159, %v2160
  %v2162 = vrot.slane %v2004, 3
  %v2163 = vrot.slane %v2028, 3
  %v2164 = vsel %vm367, %v2162, %v2163
  %2165 = vrot.lane.b32.xlu0 %v2143, 112
  %v2166 = vpop.permute.xlu0 %2165
  %2167 = vrot.lane.b32.xlu0 %v2146, 112
  %v2168 = vpop.permute.xlu0 %2167
  %2169 = vrot.lane.b32.xlu0 %v2149, 112
  %v2170 = vpop.permute.xlu0 %2169
  %2171 = vrot.lane.b32.xlu0 %v2152, 112
  %v2172 = vpop.permute.xlu0 %2171
  %2173 = vrot.lane.b32.xlu0 %v2155, 112
  %v2174 = vpop.permute.xlu0 %2173
  %2175 = vrot.lane.b32.xlu0 %v2158, 112
  %v2176 = vpop.permute.xlu0 %2175
  %2177 = vrot.lane.b32.xlu0 %v2161, 112
  %v2178 = vpop.permute.xlu0 %2177
  %2179 = vrot.lane.b32.xlu0 %v2164, 112
  %v2180 = vpop.permute.xlu0 %2179
  %v2189 = vrot.slane %v1997, 4
  %v2190 = vrot.slane %v2021, 4
  %v2191 = vsel %vm496, %v2189, %v2190
  %v2192 = vrot.slane %v1998, 4
  %v2193 = vrot.slane %v2022, 4
  %v2194 = vsel %vm496, %v2192, %v2193
  %v2195 = vrot.slane %v1999, 4
  %v2196 = vrot.slane %v2023, 4
  %v2197 = vsel %vm496, %v2195, %v2196
  %v2198 = vrot.slane %v2000, 4
  %v2199 = vrot.slane %v2024, 4
  %v2200 = vsel %vm496, %v2198, %v2199
  %v2201 = vrot.slane %v2001, 4
  %v2202 = vrot.slane %v2025, 4
  %v2203 = vsel %vm496, %v2201, %v2202
  %v2204 = vrot.slane %v2002, 4
  %v2205 = vrot.slane %v2026, 4
  %v2206 = vsel %vm496, %v2204, %v2205
  %v2207 = vrot.slane %v2003, 4
  %v2208 = vrot.slane %v2027, 4
  %v2209 = vsel %vm496, %v2207, %v2208
  %v2210 = vrot.slane %v2004, 4
  %v2211 = vrot.slane %v2028, 4
  %v2212 = vsel %vm496, %v2210, %v2211
  %2213 = vrot.lane.b32.xlu0 %v2191, 64
  %v2214 = vpop.permute.xlu0 %2213
  %2215 = vrot.lane.b32.xlu0 %v2194, 64
  %v2216 = vpop.permute.xlu0 %2215
  %2217 = vrot.lane.b32.xlu0 %v2197, 64
  %v2218 = vpop.permute.xlu0 %2217
  %2219 = vrot.lane.b32.xlu0 %v2200, 64
  %v2220 = vpop.permute.xlu0 %2219
  %2221 = vrot.lane.b32.xlu0 %v2203, 64
  %v2222 = vpop.permute.xlu0 %2221
  %2223 = vrot.lane.b32.xlu0 %v2206, 64
  %v2224 = vpop.permute.xlu0 %2223
  %2225 = vrot.lane.b32.xlu0 %v2209, 64
  %v2226 = vpop.permute.xlu0 %2225
  %2227 = vrot.lane.b32.xlu0 %v2212, 64
  %v2228 = vpop.permute.xlu0 %2227
  %vm2237 = vcmask 654336
  %v2238 = vsel %vm2237, %v1997, %v2070
  %v2239 = vsel %vm2237, %v1998, %v2072
  %v2240 = vsel %vm2237, %v1999, %v2074
  %v2241 = vsel %vm2237, %v2000, %v2076
  %v2242 = vsel %vm2237, %v2001, %v2078
  %v2243 = vsel %vm2237, %v2002, %v2080
  %v2244 = vsel %vm2237, %v2003, %v2082
  %v2245 = vsel %vm2237, %v2004, %v2084
  %v2246 = vsel %vm577, %v2070, %v2118
  %v2247 = vsel %vm577, %v2072, %v2120
  %v2248 = vsel %vm577, %v2074, %v2122
  %v2249 = vsel %vm577, %v2076, %v2124
  %v2250 = vsel %vm577, %v2078, %v2126
  %v2251 = vsel %vm577, %v2080, %v2128
  %v2252 = vsel %vm577, %v2082, %v2130
  %v2253 = vsel %vm577, %v2084, %v2132
  %vm2254 = vcmask 916480
  %v2255 = vsel %vm2254, %v2246, %v2166
  %v2256 = vsel %vm2254, %v2247, %v2168
  %v2257 = vsel %vm2254, %v2248, %v2170
  %v2258 = vsel %vm2254, %v2249, %v2172
  %v2259 = vsel %vm2254, %v2250, %v2174
  %v2260 = vsel %vm2254, %v2251, %v2176
  %v2261 = vsel %vm2254, %v2252, %v2178
  %v2262 = vsel %vm2254, %v2253, %v2180
  %v2263 = vsel %vm602, %v2166, %v2214
  %v2264 = vsel %vm602, %v2168, %v2216
  %v2265 = vsel %vm602, %v2170, %v2218
  %v2266 = vsel %vm602, %v2172, %v2220
  %v2267 = vsel %vm602, %v2174, %v2222
  %v2268 = vsel %vm602, %v2176, %v2224
  %v2269 = vsel %vm602, %v2178, %v2226
  %v2270 = vsel %vm602, %v2180, %v2228
  %v2271 = vpack.c.bf16 %v2239, %v2238
  %v2272 = vpack.c.bf16 %v2256, %v2255
  %v2273 = vpack.c.bf16 %v2264, %v2263
  %v2274 = vpack.c.bf16 %v2216, %v2214
  %v2275 = vpack.c.bf16 %v2241, %v2240
  %v2276 = vpack.c.bf16 %v2258, %v2257
  %v2277 = vpack.c.bf16 %v2266, %v2265
  %v2278 = vpack.c.bf16 %v2220, %v2218
  %v2279 = vpack.c.bf16 %v2243, %v2242
  %v2280 = vpack.c.bf16 %v2260, %v2259
  %v2281 = vpack.c.bf16 %v2268, %v2267
  %v2282 = vpack.c.bf16 %v2224, %v2222
  %v2283 = vpack.c.bf16 %v2245, %v2244
  %v2284 = vpack.c.bf16 %v2262, %v2261
  %v2285 = vpack.c.bf16 %v2270, %v2269
  %v2286 = vpack.c.bf16 %v2228, %v2226
  %v2287 = vld [vmem:[%s4] sm:$0xf]
  %v2288 = vld [vmem:[%s4 + $0x4] sm:$0xf]
  %v2289 = vld [vmem:[%s4 + $0x8] sm:$0xf]
  %v2290 = vld [vmem:[%s4 + $0xc] sm:$0xf]
  %v2291 = vld [vmem:[%s4 + $0x10] sm:$0xf]
  %v2292 = vld [vmem:[%s4 + $0x14] sm:$0xf]
  %v2293 = vld [vmem:[%s4 + $0x18] sm:$0xf]
  %v2294 = vld [vmem:[%s4 + $0x1c] sm:$0xf]
  %v2295 = vld [vmem:[%s4 + $0x20] sm:$0xf]
  %v2296 = vld [vmem:[%s4 + $0x24] sm:$0xf]
  %v2297 = vld [vmem:[%s4 + $0x28] sm:$0xf]
  %v2298 = vld [vmem:[%s4 + $0x2c] sm:$0xf]
  %v2299 = vld [vmem:[%s4 + $0x30] sm:$0xf]
  %v2300 = vld [vmem:[%s4 + $0x34] sm:$0xf]
  %v2301 = vld [vmem:[%s4 + $0x38] sm:$0xf]
  %v2302 = vld [vmem:[%s4 + $0x3c] sm:$0xf]
  %v2303 = vld [vmem:[%s4 + $0x40] sm:$0xf]
  %v2304 = vld [vmem:[%s4 + $0x44] sm:$0xf]
  %v2305 = vld [vmem:[%s4 + $0x48] sm:$0xf]
  %v2306 = vld [vmem:[%s4 + $0x4c] sm:$0xf]
  %v2307 = vld [vmem:[%s4 + $0x50] sm:$0xf]
  %v2308 = vld [vmem:[%s4 + $0x54] sm:$0xf]
  %v2309 = vld [vmem:[%s4 + $0x58] sm:$0xf]
  %v2310 = vld [vmem:[%s4 + $0x5c] sm:$0xf]
  %v2311 = vld [vmem:[%s4 + $0x60] sm:$0xf]
  %v2312 = vld [vmem:[%s4 + $0x64] sm:$0xf]
  %v2313 = vld [vmem:[%s4 + $0x68] sm:$0xf]
  %v2314 = vld [vmem:[%s4 + $0x6c] sm:$0xf]
  %v2315 = vld [vmem:[%s4 + $0x70] sm:$0xf]
  %v2316 = vld [vmem:[%s4 + $0x74] sm:$0xf]
  %v2317 = vld [vmem:[%s4 + $0x78] sm:$0xf]
  %v2318 = vld [vmem:[%s4 + $0x7c] sm:$0xf]
  %v2319 = vld [vmem:[%s4 + $0x80] sm:$0xf]
  %v2320 = vld [vmem:[%s4 + $0x84] sm:$0xf]
  %v2321 = vld [vmem:[%s4 + $0x88] sm:$0xf]
  %v2322 = vld [vmem:[%s4 + $0x8c] sm:$0xf]
  %v2323 = vld [vmem:[%s4 + $0x90] sm:$0xf]
  %v2324 = vld [vmem:[%s4 + $0x94] sm:$0xf]
  %v2325 = vld [vmem:[%s4 + $0x98] sm:$0xf]
  %v2326 = vld [vmem:[%s4 + $0x9c] sm:$0xf]
  %v2327 = vld [vmem:[%s4 + $0xa0] sm:$0xf]
  %v2328 = vld [vmem:[%s4 + $0xa4] sm:$0xf]
  %v2329 = vld [vmem:[%s4 + $0xa8] sm:$0xf]
  %v2330 = vld [vmem:[%s4 + $0xac] sm:$0xf]
  %v2331 = vld [vmem:[%s4 + $0xb0] sm:$0xf]
  %v2332 = vld [vmem:[%s4 + $0xb4] sm:$0xf]
  %v2333 = vld [vmem:[%s4 + $0xb8] sm:$0xf]
  %v2334 = vld [vmem:[%s4 + $0xbc] sm:$0xf]
  %v2335 = vld [vmem:[%s4 + $0xc0] sm:$0xf]
  %v2336 = vld [vmem:[%s4 + $0xc4] sm:$0xf]
  %v2337 = vld [vmem:[%s5] sm:$0x1]
  %v2339 = vlaneseq
  %v2340 = vshrl.u32 %v2339, 7
  %v2341 = vsub.s32 0, %v2340
  %v2342 = vrot.slane %v2337, %v2341
  %v2394 = vunpack.c.l.b16 %v2287
  %v2395 = vunpack.c.l.b16 %v2288
  %v2396 = vunpack.c.l.b16 %v2289
  %v2397 = vunpack.c.l.b16 %v2290
  %v2398 = vunpack.c.l.b16 %v2291
  %v2399 = vunpack.c.l.b16 %v2292
  %v2400 = vunpack.c.l.b16 %v2293
  %v2401 = vunpack.c.l.b16 %v2294
  %v2402 = vunpack.c.l.b16 %v2295
  %v2403 = vunpack.c.l.b16 %v2296
  %v2404 = vunpack.c.l.b16 %v2297
  %v2405 = vunpack.c.l.b16 %v2298
  %v2406 = vunpack.c.l.b16 %v2299
  %v2407 = vunpack.c.l.b16 %v2300
  %v2408 = vunpack.c.l.b16 %v2301
  %v2409 = vunpack.c.l.b16 %v2302
  %v2410 = vunpack.c.l.b16 %v2303
  %v2411 = vunpack.c.l.b16 %v2304
  %v2412 = vunpack.c.l.b16 %v2305
  %v2413 = vunpack.c.l.b16 %v2306
  %v2414 = vunpack.c.l.b16 %v2307
  %v2415 = vunpack.c.l.b16 %v2308
  %v2416 = vunpack.c.l.b16 %v2309
  %v2417 = vunpack.c.l.b16 %v2310
  %v2418 = vunpack.c.l.b16 %v2311
  %v2419 = vunpack.c.l.b16 %v2312
  %v2420 = vunpack.c.l.b16 %v2313
  %v2421 = vunpack.c.l.b16 %v2314
  %v2422 = vunpack.c.l.b16 %v2315
  %v2423 = vunpack.c.l.b16 %v2316
  %v2424 = vunpack.c.l.b16 %v2317
  %v2425 = vunpack.c.l.b16 %v2318
  %v2426 = vunpack.c.l.b16 %v2319
  %v2427 = vunpack.c.l.b16 %v2320
  %v2428 = vunpack.c.l.b16 %v2321
  %v2429 = vunpack.c.l.b16 %v2322
  %v2430 = vunpack.c.l.b16 %v2323
  %v2431 = vunpack.c.l.b16 %v2324
  %v2432 = vunpack.c.l.b16 %v2325
  %v2433 = vunpack.c.l.b16 %v2326
  %v2434 = vunpack.c.l.b16 %v2327
  %v2435 = vunpack.c.l.b16 %v2328
  %v2436 = vunpack.c.l.b16 %v2329
  %v2437 = vunpack.c.l.b16 %v2330
  %v2438 = vunpack.c.l.b16 %v2331
  %v2439 = vunpack.c.l.b16 %v2332
  %v2440 = vunpack.c.l.b16 %v2333
  %v2441 = vunpack.c.l.b16 %v2334
  %v2442 = vunpack.c.l.b16 %v2335
  %v2443 = vunpack.c.l.b16 %v2336
  %v2444 = vpack.c.b16 %v2395, %v2394
  %v2445 = vpack.c.b16 %v2397, %v2396
  %v2446 = vpack.c.b16 %v2399, %v2398
  %v2447 = vpack.c.b16 %v2401, %v2400
  %v2448 = vpack.c.b16 %v2403, %v2402
  %v2449 = vpack.c.b16 %v2405, %v2404
  %v2450 = vpack.c.b16 %v2407, %v2406
  %v2451 = vpack.c.b16 %v2409, %v2408
  %v2452 = vpack.c.b16 %v2411, %v2410
  %v2453 = vpack.c.b16 %v2413, %v2412
  %v2454 = vpack.c.b16 %v2415, %v2414
  %v2455 = vpack.c.b16 %v2417, %v2416
  %v2456 = vpack.c.b16 %v2419, %v2418
  %v2457 = vpack.c.b16 %v2421, %v2420
  %v2458 = vpack.c.b16 %v2423, %v2422
  %v2459 = vpack.c.b16 %v2425, %v2424
  %v2460 = vpack.c.b16 %v2427, %v2426
  %v2461 = vpack.c.b16 %v2429, %v2428
  %v2462 = vpack.c.b16 %v2431, %v2430
  %v2463 = vpack.c.b16 %v2433, %v2432
  %v2464 = vpack.c.b16 %v2435, %v2434
  %v2465 = vpack.c.b16 %v2437, %v2436
  %v2466 = vpack.c.b16 %v2439, %v2438
  %v2467 = vpack.c.b16 %v2441, %v2440
  %v2468 = vpack.c.b16 %v2443, %v2442
  %vm2494 = vcmask 130048
  %v2496 = vsel %vm2494, %v2274, 0
  %v2499 = vsel %vm2494, %v2278, 0
  %v2502 = vsel %vm2494, %v2282, 0
  %v2505 = vsel %vm2494, %v2286, 0
  %2507 = vmatprep.subr.bf16.mxu0 0
  %2508 = vmatpush1.bf16.msra.mxu0 %v2444
  %2509 = vmatprep.subr.bf16.mxu0 0
  %2510 = vmatpush1.bf16.msra.mxu0 %v2445
  %2511 = vmatprep.subr.bf16.mxu0 0
  %2512 = vmatpush1.bf16.msra.mxu0 %v2446
  %2513 = vmatprep.subr.bf16.mxu0 0
  %2514 = vmatpush1.bf16.msra.mxu0 %v2447
  %2515 = vmatprep.subr.bf16.mxu0 0
  %2516 = vmatpush1.bf16.msra.mxu0 %v2448
  %2517 = vmatprep.subr.bf16.mxu0 0
  %2518 = vmatpush1.bf16.msra.mxu0 %v2449
  %2519 = vmatprep.subr.bf16.mxu0 0
  %2520 = vmatpush1.bf16.msra.mxu0 %v2450
  %2521 = vmatprep.subr.bf16.mxu0 0
  %2522 = vmatpush1.bf16.msra.mxu0 %v2451
  %2523 = vmatprep.subr.bf16.mxu0 0
  %2524 = vmatpush1.bf16.msra.mxu0 %v2452
  %2525 = vmatprep.subr.bf16.mxu0 0
  %2526 = vmatpush1.bf16.msra.mxu0 %v2453
  %2527 = vmatprep.subr.bf16.mxu0 0
  %2528 = vmatpush1.bf16.msra.mxu0 %v2454
  %2529 = vmatprep.subr.bf16.mxu0 0
  %2530 = vmatpush1.bf16.msra.mxu0 %v2455
  %2531 = vmatprep.subr.bf16.mxu0 0
  %2532 = vmatpush1.bf16.msra.mxu0 %v2456
  %2533 = vmatprep.subr.bf16.mxu0 0
  %2534 = vmatpush1.bf16.msra.mxu0 %v2457
  %2535 = vmatprep.subr.bf16.mxu0 0
  %2536 = vmatpush1.bf16.msra.mxu0 %v2458
  %2537 = vmatprep.subr.bf16.mxu0 0
  %2538 = vmatpush1.bf16.msra.mxu0 %v2459
  %2539 = vmatprep.mubr.bf16.mxu0 %v2272
  %2540 = vmatmul.mubr.bf16.gmra.mrb[0].mxu0 %v2271
  %v2541 = vpop.f32.mrb[0].mxu0
  %v2542 = vadd.f32 %v2342, %v2541
  %v2543 = vpop.f32.mrb[0].mxu0
  %v2544 = vpop.f32.mrb[0].mxu0
  %v2545 = vadd.f32 %v2342, %v2544
  %v2546 = vpop.f32.mrb[0].mxu0
  %2547 = vmatprep.mubr.bf16.mxu0 %v2276
  %2548 = vmatmul.mubr.bf16.gmra.mrb[0].mxu0 %v2275
  %v2549 = vpop.f32.mrb[0].mxu0
  %v2550 = vadd.f32 %v2342, %v2549
  %v2551 = vpop.f32.mrb[0].mxu0
  %v2552 = vpop.f32.mrb[0].mxu0
  %v2553 = vadd.f32 %v2342, %v2552
  %v2554 = vpop.f32.mrb[0].mxu0
  %2555 = vmatprep.mubr.bf16.mxu0 %v2280
  %2556 = vmatmul.mubr.bf16.gmra.mrb[0].mxu0 %v2279
  %v2557 = vpop.f32.mrb[0].mxu0
  %v2558 = vadd.f32 %v2342, %v2557
  %v2559 = vpop.f32.mrb[0].mxu0
  %v2560 = vpop.f32.mrb[0].mxu0
  %v2561 = vadd.f32 %v2342, %v2560
  %v2562 = vpop.f32.mrb[0].mxu0
  %2563 = vmatprep.mubr.bf16.mxu0 %v2284
  %2564 = vmatmul.mubr.bf16.gmra.mrb[0].mxu0 %v2283
  %v2565 = vpop.f32.mrb[0].mxu0
  %v2566 = vadd.f32 %v2342, %v2565
  %v2567 = vpop.f32.mrb[0].mxu0
  %v2568 = vpop.f32.mrb[0].mxu0
  %v2569 = vadd.f32 %v2342, %v2568
  %v2570 = vpop.f32.mrb[0].mxu0
  %2571 = vdwg.mxu0
  %2572 = vmatprep.subr.bf16.mxu0 0
  %2573 = vmatpush1.bf16.msra.mxu0 %v2460
  %2574 = vmatprep.subr.bf16.mxu0 0
  %2575 = vmatpush1.bf16.msra.mxu0 %v2461
  %2576 = vmatprep.subr.bf16.mxu0 0
  %2577 = vmatpush1.bf16.msra.mxu0 %v2462
  %2578 = vmatprep.subr.bf16.mxu0 0
  %2579 = vmatpush1.bf16.msra.mxu0 %v2463
  %2580 = vmatprep.subr.bf16.mxu0 0
  %2581 = vmatpush1.bf16.msra.mxu0 %v2464
  %2582 = vmatprep.subr.bf16.mxu0 0
  %2583 = vmatpush1.bf16.msra.mxu0 %v2465
  %2584 = vmatprep.subr.bf16.mxu0 0
  %2585 = vmatpush1.bf16.msra.mxu0 %v2466
  %2586 = vmatprep.subr.bf16.mxu0 0
  %2587 = vmatpush1.bf16.msra.mxu0 %v2467
  %2588 = vmatprep.subr.bf16.mxu0 0
  %2589 = vmatpush1.bf16.msra.mxu0 %v2468
  %2590 = vmatprep.subr.bf16.mxu0 0
  %2591 = vmatpush1.bf16.msra.mxu0 0
  %2592 = vmatprep.subr.bf16.mxu0 0
  %2593 = vmatpush1.bf16.msra.mxu0 0
  %2594 = vmatprep.subr.bf16.mxu0 0
  %2595 = vmatpush1.bf16.msra.mxu0 0
  %2596 = vmatprep.subr.bf16.mxu0 0
  %2597 = vmatpush1.bf16.msra.mxu0 0
  %2598 = vmatprep.subr.bf16.mxu0 0
  %2599 = vmatpush1.bf16.msra.mxu0 0
  %2600 = vmatprep.subr.bf16.mxu0 0
  %2601 = vmatpush1.bf16.msra.mxu0 0
  %2602 = vmatprep.subr.bf16.mxu0 0
  %2603 = vmatpush1.bf16.msra.mxu0 0
  %2604 = vmatprep.mubr.bf16.mxu0 %v2496
  %2605 = vmatmul.mubr.bf16.gmra.mrb[0].mxu0 %v2273
  %v2606 = vpop.f32.mrb[0].mxu0
  %v2607 = vadd.f32 %v2542, %v2606
  %v2608 = vpop.f32.mrb[0].mxu0
  %v2609 = vpop.f32.mrb[0].mxu0
  %v2610 = vadd.f32 %v2545, %v2609
  %v2611 = vpop.f32.mrb[0].mxu0
  %2612 = vmatprep.mubr.bf16.mxu0 %v2499
  %2613 = vmatmul.mubr.bf16.gmra.mrb[0].mxu0 %v2277
  %v2614 = vpop.f32.mrb[0].mxu0
  %v2615 = vadd.f32 %v2550, %v2614
  %v2616 = vpop.f32.mrb[0].mxu0
  %v2617 = vpop.f32.mrb[0].mxu0
  %v2618 = vadd.f32 %v2553, %v2617
  %v2619 = vpop.f32.mrb[0].mxu0
  %2620 = vmatprep.mubr.bf16.mxu0 %v2502
  %2621 = vmatmul.mubr.bf16.gmra.mrb[0].mxu0 %v2281
  %v2622 = vpop.f32.mrb[0].mxu0
  %v2623 = vadd.f32 %v2558, %v2622
  %v2624 = vpop.f32.mrb[0].mxu0
  %v2625 = vpop.f32.mrb[0].mxu0
  %v2626 = vadd.f32 %v2561, %v2625
  %v2627 = vpop.f32.mrb[0].mxu0
  %2628 = vmatprep.mubr.bf16.mxu0 %v2505
  %2629 = vmatmul.mubr.bf16.gmra.mrb[0].mxu0 %v2285
  %v2630 = vpop.f32.mrb[0].mxu0
  %v2631 = vadd.f32 %v2566, %v2630
  %v2632 = vpop.f32.mrb[0].mxu0
  %v2633 = vpop.f32.mrb[0].mxu0
  %v2634 = vadd.f32 %v2569, %v2633
  %v2635 = vpop.f32.mrb[0].mxu0
  %2636 = vdwg.mxu0
  %v2637 = vmax.f32 %v2607, 0.0
  %v2638 = vmax.f32 %v2610, 0.0
  %v2639 = vmax.f32 %v2615, 0.0
  %v2640 = vmax.f32 %v2618, 0.0
  %v2641 = vmax.f32 %v2623, 0.0
  %v2642 = vmax.f32 %v2626, 0.0
  %v2643 = vmax.f32 %v2631, 0.0
  %v2644 = vmax.f32 %v2634, 0.0
  %2645 = vrot.lane.b32.xlu0 %v2637, 8
  %v2646 = vpop.permute.xlu0 %2645
  %2647 = vrot.lane.b32.xlu0 %v2638, 8
  %v2648 = vpop.permute.xlu0 %2647
  %2649 = vrot.lane.b32.xlu0 %v2639, 8
  %v2650 = vpop.permute.xlu0 %2649
  %2651 = vrot.lane.b32.xlu0 %v2640, 8
  %v2652 = vpop.permute.xlu0 %2651
  %2653 = vrot.lane.b32.xlu0 %v2641, 8
  %v2654 = vpop.permute.xlu0 %2653
  %2655 = vrot.lane.b32.xlu0 %v2642, 8
  %v2656 = vpop.permute.xlu0 %2655
  %2657 = vrot.lane.b32.xlu0 %v2643, 8
  %v2658 = vpop.permute.xlu0 %2657
  %2659 = vrot.lane.b32.xlu0 %v2644, 8
  %v2660 = vpop.permute.xlu0 %2659
  %2661 = vrot.lane.b32.xlu0 %v2637, 120
  %v2662 = vpop.permute.xlu0 %2661
  %2663 = vrot.lane.b32.xlu0 %v2638, 120
  %v2664 = vpop.permute.xlu0 %2663
  %2665 = vrot.lane.b32.xlu0 %v2639, 120
  %v2666 = vpop.permute.xlu0 %2665
  %2667 = vrot.lane.b32.xlu0 %v2640, 120
  %v2668 = vpop.permute.xlu0 %2667
  %2669 = vrot.lane.b32.xlu0 %v2641, 120
  %v2670 = vpop.permute.xlu0 %2669
  %2671 = vrot.lane.b32.xlu0 %v2642, 120
  %v2672 = vpop.permute.xlu0 %2671
  %2673 = vrot.lane.b32.xlu0 %v2643, 120
  %v2674 = vpop.permute.xlu0 %2673
  %2675 = vrot.lane.b32.xlu0 %v2644, 120
  %v2676 = vpop.permute.xlu0 %2675
  %v2677 = vmax.f32 %v2646, %v2662
  %v2678 = vmax.f32 %v2648, %v2664
  %v2679 = vmax.f32 %v2650, %v2666
  %v2680 = vmax.f32 %v2652, %v2668
  %v2681 = vmax.f32 %v2654, %v2670
  %v2682 = vmax.f32 %v2656, %v2672
  %v2683 = vmax.f32 %v2658, %v2674
  %v2684 = vmax.f32 %v2660, %v2676
  %v2685 = vpack.c.bf16 %v2678, %v2677
  %v2686 = vpack.c.bf16 %v2680, %v2679
  %v2687 = vpack.c.bf16 %v2682, %v2681
  %v2688 = vpack.c.bf16 %v2684, %v2683
  %v2689 = vld [vmem:[%s6] sm:$0xf]
  %v2690 = vld [vmem:[%s6 + $0x4] sm:$0xf]
  %v2691 = vld [vmem:[%s6 + $0x8] sm:$0xf]
  %v2692 = vld [vmem:[%s6 + $0xc] sm:$0xf]
  %v2693 = vld [vmem:[%s6 + $0x10] sm:$0xf]
  %v2694 = vld [vmem:[%s6 + $0x14] sm:$0xf]
  %v2695 = vld [vmem:[%s6 + $0x18] sm:$0xf]
  %v2696 = vld [vmem:[%s6 + $0x1c] sm:$0xf]
  %v2697 = vld [vmem:[%s6 + $0x20] sm:$0xf]
  %v2698 = vld [vmem:[%s6 + $0x24] sm:$0xf]
  %v2699 = vld [vmem:[%s6 + $0x28] sm:$0xf]
  %v2700 = vld [vmem:[%s6 + $0x2c] sm:$0xf]
  %v2701 = vld [vmem:[%s6 + $0x30] sm:$0xf]
  %v2702 = vld [vmem:[%s6 + $0x34] sm:$0xf]
  %v2703 = vld [vmem:[%s6 + $0x38] sm:$0xf]
  %v2704 = vld [vmem:[%s6 + $0x3c] sm:$0xf]
  %v2721 = vunpack.c.l.b16 %v2689
  %v2722 = vunpack.c.l.b16 %v2690
  %v2723 = vunpack.c.l.b16 %v2691
  %v2724 = vunpack.c.l.b16 %v2692
  %v2725 = vunpack.c.l.b16 %v2693
  %v2726 = vunpack.c.l.b16 %v2694
  %v2727 = vunpack.c.l.b16 %v2695
  %v2728 = vunpack.c.l.b16 %v2696
  %v2729 = vunpack.c.l.b16 %v2697
  %v2730 = vunpack.c.l.b16 %v2698
  %v2731 = vunpack.c.l.b16 %v2699
  %v2732 = vunpack.c.l.b16 %v2700
  %v2733 = vunpack.c.l.b16 %v2701
  %v2734 = vunpack.c.l.b16 %v2702
  %v2735 = vunpack.c.l.b16 %v2703
  %v2736 = vunpack.c.l.b16 %v2704
  %v2737 = vpack.c.b16 %v2722, %v2721
  %v2738 = vpack.c.b16 %v2724, %v2723
  %v2739 = vpack.c.b16 %v2726, %v2725
  %v2740 = vpack.c.b16 %v2728, %v2727
  %v2741 = vpack.c.b16 %v2730, %v2729
  %v2742 = vpack.c.b16 %v2732, %v2731
  %v2743 = vpack.c.b16 %v2734, %v2733
  %v2744 = vpack.c.b16 %v2736, %v2735
  %2753 = vmatprep.subr.bf16.mxu0 0
  %2754 = vmatpush1.bf16.msra.mxu0 %v2737
  %2755 = vmatprep.subr.bf16.mxu0 0
  %2756 = vmatpush1.bf16.msra.mxu0 %v2738
  %2757 = vmatprep.subr.bf16.mxu0 0
  %2758 = vmatpush1.bf16.msra.mxu0 %v2739
  %2759 = vmatprep.subr.bf16.mxu0 0
  %2760 = vmatpush1.bf16.msra.mxu0 %v2740
  %2761 = vmatprep.subr.bf16.mxu0 0
  %2762 = vmatpush1.bf16.msra.mxu0 %v2741
  %2763 = vmatprep.subr.bf16.mxu0 0
  %2764 = vmatpush1.bf16.msra.mxu0 %v2742
  %2765 = vmatprep.subr.bf16.mxu0 0
  %2766 = vmatpush1.bf16.msra.mxu0 %v2743
  %2767 = vmatprep.subr.bf16.mxu0 0
  %2768 = vmatpush1.bf16.msra.mxu0 %v2744
  %2769 = vmatprep.subr.bf16.mxu0 0
  %2770 = vmatpush1.bf16.msra.mxu0 0
  %2771 = vmatprep.subr.bf16.mxu0 0
  %2772 = vmatpush1.bf16.msra.mxu0 0
  %2773 = vmatprep.subr.bf16.mxu0 0
  %2774 = vmatpush1.bf16.msra.mxu0 0
  %2775 = vmatprep.subr.bf16.mxu0 0
  %2776 = vmatpush1.bf16.msra.mxu0 0
  %2777 = vmatprep.subr.bf16.mxu0 0
  %2778 = vmatpush1.bf16.msra.mxu0 0
  %2779 = vmatprep.subr.bf16.mxu0 0
  %2780 = vmatpush1.bf16.msra.mxu0 0
  %2781 = vmatprep.subr.bf16.mxu0 0
  %2782 = vmatpush1.bf16.msra.mxu0 0
  %2783 = vmatprep.subr.bf16.mxu0 0
  %2784 = vmatpush1.bf16.msra.mxu0 0
  %2785 = vmatprep.mubr.bf16.mxu0 0
  %2786 = vmatmul.mubr.bf16.gmra.mrb[0].mxu0 %v2685
  %v2787 = vpop.f32.mrb[0].mxu0
  %v2788 = vadd.f32 0.0, %v2787
  %v2789 = vpop.f32.mrb[0].mxu0
  %v2790 = vpop.f32.mrb[0].mxu0
  %v2791 = vadd.f32 0.0, %v2790
  %v2792 = vpop.f32.mrb[0].mxu0
  %2793 = vmatprep.mubr.bf16.mxu0 0
  %2794 = vmatmul.mubr.bf16.gmra.mrb[0].mxu0 %v2686
  %v2795 = vpop.f32.mrb[0].mxu0
  %v2796 = vadd.f32 0.0, %v2795
  %v2797 = vpop.f32.mrb[0].mxu0
  %v2798 = vpop.f32.mrb[0].mxu0
  %v2799 = vadd.f32 0.0, %v2798
  %v2800 = vpop.f32.mrb[0].mxu0
  %2801 = vmatprep.mubr.bf16.mxu0 0
  %2802 = vmatmul.mubr.bf16.gmra.mrb[0].mxu0 %v2687
  %v2803 = vpop.f32.mrb[0].mxu0
  %v2804 = vadd.f32 0.0, %v2803
  %v2805 = vpop.f32.mrb[0].mxu0
  %v2806 = vpop.f32.mrb[0].mxu0
  %v2807 = vadd.f32 0.0, %v2806
  %v2808 = vpop.f32.mrb[0].mxu0
  %2809 = vmatprep.mubr.bf16.mxu0 0
  %2810 = vmatmul.mubr.bf16.gmra.mrb[0].mxu0 %v2688
  %v2811 = vpop.f32.mrb[0].mxu0
  %v2812 = vadd.f32 0.0, %v2811
  %v2813 = vpop.f32.mrb[0].mxu0
  %v2814 = vpop.f32.mrb[0].mxu0
  %v2815 = vadd.f32 0.0, %v2814
  %v2816 = vpop.f32.mrb[0].mxu0
  %2817 = vdwg.mxu0
  %v2826 = vrot.slane %v2788, 1
  %v2827 = vrot.slane %v2791, 1
  %v2828 = vrot.slane %v2796, 1
  %v2829 = vrot.slane %v2799, 1
  %v2830 = vrot.slane %v2804, 1
  %v2831 = vrot.slane %v2807, 1
  %v2832 = vrot.slane %v2812, 1
  %v2833 = vrot.slane %v2815, 1
  %v2842 = vmax.f32 %v2788, %v2826
  %v2843 = vmax.f32 %v2791, %v2827
  %v2844 = vmax.f32 %v2796, %v2828
  %v2845 = vmax.f32 %v2799, %v2829
  %v2846 = vmax.f32 %v2804, %v2830
  %v2847 = vmax.f32 %v2807, %v2831
  %v2848 = vmax.f32 %v2812, %v2832
  %v2849 = vmax.f32 %v2815, %v2833
  %v2858 = vrot.slane %v2842, 2
  %v2859 = vrot.slane %v2843, 2
  %v2860 = vrot.slane %v2844, 2
  %v2861 = vrot.slane %v2845, 2
  %v2862 = vrot.slane %v2846, 2
  %v2863 = vrot.slane %v2847, 2
  %v2864 = vrot.slane %v2848, 2
  %v2865 = vrot.slane %v2849, 2
  %2866 = vrot.lane.b32.xlu0 %v2858, 64
  %v2867 = vpop.permute.xlu0 %2866
  %2868 = vrot.lane.b32.xlu0 %v2859, 64
  %v2869 = vpop.permute.xlu0 %2868
  %2870 = vrot.lane.b32.xlu0 %v2860, 64
  %v2871 = vpop.permute.xlu0 %2870
  %2872 = vrot.lane.b32.xlu0 %v2861, 64
  %v2873 = vpop.permute.xlu0 %2872
  %2874 = vrot.lane.b32.xlu0 %v2862, 64
  %v2875 = vpop.permute.xlu0 %2874
  %2876 = vrot.lane.b32.xlu0 %v2863, 64
  %v2877 = vpop.permute.xlu0 %2876
  %2878 = vrot.lane.b32.xlu0 %v2864, 64
  %v2879 = vpop.permute.xlu0 %2878
  %2880 = vrot.lane.b32.xlu0 %v2865, 64
  %v2881 = vpop.permute.xlu0 %2880
  %v2890 = vrot.slane %v2842, 4
  %v2891 = vrot.slane %v2843, 4
  %v2892 = vrot.slane %v2844, 4
  %v2893 = vrot.slane %v2845, 4
  %v2894 = vrot.slane %v2846, 4
  %v2895 = vrot.slane %v2847, 4
  %v2896 = vrot.slane %v2848, 4
  %v2897 = vrot.slane %v2849, 4
  %v2906 = vrot.slane %v2842, 6
  %v2907 = vrot.slane %v2843, 6
  %v2908 = vrot.slane %v2844, 6
  %v2909 = vrot.slane %v2845, 6
  %v2910 = vrot.slane %v2846, 6
  %v2911 = vrot.slane %v2847, 6
  %v2912 = vrot.slane %v2848, 6
  %v2913 = vrot.slane %v2849, 6
  %2914 = vrot.lane.b32.xlu0 %v2906, 64
  %v2915 = vpop.permute.xlu0 %2914
  %2916 = vrot.lane.b32.xlu0 %v2907, 64
  %v2917 = vpop.permute.xlu0 %2916
  %2918 = vrot.lane.b32.xlu0 %v2908, 64
  %v2919 = vpop.permute.xlu0 %2918
  %2920 = vrot.lane.b32.xlu0 %v2909, 64
  %v2921 = vpop.permute.xlu0 %2920
  %2922 = vrot.lane.b32.xlu0 %v2910, 64
  %v2923 = vpop.permute.xlu0 %2922
  %2924 = vrot.lane.b32.xlu0 %v2911, 64
  %v2925 = vpop.permute.xlu0 %2924
  %2926 = vrot.lane.b32.xlu0 %v2912, 64
  %v2927 = vpop.permute.xlu0 %2926
  %2928 = vrot.lane.b32.xlu0 %v2913, 64
  %v2929 = vpop.permute.xlu0 %2928
  %v2938 = vsel %vm602, %v2842, %v2867
  %v2939 = vsel %vm602, %v2843, %v2869
  %v2940 = vsel %vm602, %v2844, %v2871
  %v2941 = vsel %vm602, %v2845, %v2873
  %v2942 = vsel %vm602, %v2846, %v2875
  %v2943 = vsel %vm602, %v2847, %v2877
  %v2944 = vsel %vm602, %v2848, %v2879
  %v2945 = vsel %vm602, %v2849, %v2881
  %v2946 = vsel %vm602, %v2890, %v2915
  %v2947 = vsel %vm602, %v2891, %v2917
  %v2948 = vsel %vm602, %v2892, %v2919
  %v2949 = vsel %vm602, %v2893, %v2921
  %v2950 = vsel %vm602, %v2894, %v2923
  %v2951 = vsel %vm602, %v2895, %v2925
  %v2952 = vsel %vm602, %v2896, %v2927
  %v2953 = vsel %vm602, %v2897, %v2929
  %v2954 = vpack.c.bf16 %v2938, %v2938
  %v2955 = vpack.c.bf16 %v2946, %v2946
  %v2956 = vpack.c.bf16 %v2939, %v2939
  %v2957 = vpack.c.bf16 %v2947, %v2947
  %v2958 = vpack.c.bf16 %v2940, %v2940
  %v2959 = vpack.c.bf16 %v2948, %v2948
  %v2960 = vpack.c.bf16 %v2941, %v2941
  %v2961 = vpack.c.bf16 %v2949, %v2949
  %v2962 = vpack.c.bf16 %v2942, %v2942
  %v2963 = vpack.c.bf16 %v2950, %v2950
  %v2964 = vpack.c.bf16 %v2943, %v2943
  %v2965 = vpack.c.bf16 %v2951, %v2951
  %v2966 = vpack.c.bf16 %v2944, %v2944
  %v2967 = vpack.c.bf16 %v2952, %v2952
  %v2968 = vpack.c.bf16 %v2945, %v2945
  %v2969 = vpack.c.bf16 %v2953, %v2953
  %v2970 = vld [vmem:[%s7] sm:$0xf]
  %v2971 = vld [vmem:[%s7 + $0x4] sm:$0xf]
  %v2972 = vld [vmem:[%s7 + $0x8] sm:$0xf]
  %v2973 = vld [vmem:[%s7 + $0xc] sm:$0xf]
  %v2974 = vld [vmem:[%s7 + $0x10] sm:$0xf]
  %v2975 = vld [vmem:[%s7 + $0x14] sm:$0xf]
  %v2976 = vld [vmem:[%s7 + $0x18] sm:$0xf]
  %v2977 = vld [vmem:[%s7 + $0x1c] sm:$0xf]
  %v2978 = vld [vmem:[%s7 + $0x20] sm:$0xf]
  %v2979 = vld [vmem:[%s7 + $0x24] sm:$0xf]
  %v2980 = vld [vmem:[%s7 + $0x28] sm:$0xf]
  %v2981 = vld [vmem:[%s7 + $0x2c] sm:$0xf]
  %v2982 = vld [vmem:[%s7 + $0x30] sm:$0xf]
  %v2983 = vld [vmem:[%s7 + $0x34] sm:$0xf]
  %v2984 = vld [vmem:[%s7 + $0x38] sm:$0xf]
  %v2985 = vld [vmem:[%s7 + $0x3c] sm:$0xf]
  %v2986 = vld [vmem:[%s7 + $0x40] sm:$0xf]
  %v2987 = vld [vmem:[%s7 + $0x44] sm:$0xf]
  %v2988 = vld [vmem:[%s7 + $0x48] sm:$0xf]
  %v2989 = vld [vmem:[%s7 + $0x4c] sm:$0xf]
  %v2990 = vld [vmem:[%s7 + $0x50] sm:$0xf]
  %v2991 = vld [vmem:[%s7 + $0x54] sm:$0xf]
  %v2992 = vld [vmem:[%s7 + $0x58] sm:$0xf]
  %v2993 = vld [vmem:[%s7 + $0x5c] sm:$0xf]
  %v2994 = vld [vmem:[%s7 + $0x60] sm:$0xf]
  %v2995 = vld [vmem:[%s7 + $0x64] sm:$0xf]
  %v2996 = vld [vmem:[%s7 + $0x68] sm:$0xf]
  %v2997 = vld [vmem:[%s7 + $0x6c] sm:$0xf]
  %v2998 = vld [vmem:[%s7 + $0x70] sm:$0xf]
  %v2999 = vld [vmem:[%s7 + $0x74] sm:$0xf]
  %v3000 = vld [vmem:[%s7 + $0x78] sm:$0xf]
  %v3001 = vld [vmem:[%s7 + $0x7c] sm:$0xf]
  %v3002 = vld [vmem:[%s8] sm:$0x1]
  %v3004 = vlaneseq
  %v3005 = vshrl.u32 %v3004, 7
  %v3006 = vsub.s32 0, %v3005
  %v3007 = vrot.slane %v3002, %v3006
  %v3025 = vunpack.c.l.b16 %v2954
  %v3026 = vunpack.c.l.b16 %v2955
  %v3027 = vunpack.c.l.b16 %v2956
  %v3028 = vunpack.c.l.b16 %v2957
  %v3029 = vunpack.c.l.b16 %v2958
  %v3030 = vunpack.c.l.b16 %v2959
  %v3031 = vunpack.c.l.b16 %v2960
  %v3032 = vunpack.c.l.b16 %v2961
  %v3033 = vunpack.c.l.b16 %v2962
  %v3034 = vunpack.c.l.b16 %v2963
  %v3035 = vunpack.c.l.b16 %v2964
  %v3036 = vunpack.c.l.b16 %v2965
  %v3037 = vunpack.c.l.b16 %v2966
  %v3038 = vunpack.c.l.b16 %v2967
  %v3039 = vunpack.c.l.b16 %v2968
  %v3040 = vunpack.c.l.b16 %v2969
  %v3041 = vrot.slane %v3027, 7
  %vm3042 = vcmask 1041409
  %v3043 = vsel %vm3042, %v3041, %v3025
  %v3044 = vrot.slane %v3029, 6
  %vm3045 = vcmask 1042434
  %v3046 = vsel %vm3045, %v3044, %v3043
  %v3047 = vrot.slane %v3031, 5
  %vm3048 = vcmask 1043459
  %v3049 = vsel %vm3048, %v3047, %v3046
  %v3050 = vrot.slane %v3033, 4
  %vm3051 = vcmask 1044484
  %v3052 = vsel %vm3051, %v3050, %v3049
  %v3053 = vrot.slane %v3035, 3
  %vm3054 = vcmask 1045509
  %v3055 = vsel %vm3054, %v3053, %v3052
  %v3056 = vrot.slane %v3037, 2
  %vm3057 = vcmask 1046534
  %v3058 = vsel %vm3057, %v3056, %v3055
  %v3059 = vrot.slane %v3039, 1
  %vm3060 = vcmask 1047559
  %v3061 = vsel %vm3060, %v3059, %v3058
  %v3062 = vrot.slane %v3028, 7
  %v3063 = vsel %vm3042, %v3062, %v3026
  %v3064 = vrot.slane %v3030, 6
  %v3065 = vsel %vm3045, %v3064, %v3063
  %v3066 = vrot.slane %v3032, 5
  %v3067 = vsel %vm3048, %v3066, %v3065
  %v3068 = vrot.slane %v3034, 4
  %v3069 = vsel %vm3051, %v3068, %v3067
  %v3070 = vrot.slane %v3036, 3
  %v3071 = vsel %vm3054, %v3070, %v3069
  %v3072 = vrot.slane %v3038, 2
  %v3073 = vsel %vm3057, %v3072, %v3071
  %v3074 = vrot.slane %v3040, 1
  %v3075 = vsel %vm3060, %v3074, %v3073
  %v3076 = vpack.c.b16 %v3061, %v3061
  %v3077 = vpack.c.b16 %v3075, %v3075
  %v3112 = vunpack.c.l.b16 %v2970
  %v3113 = vunpack.c.l.b16 %v2971
  %v3114 = vunpack.c.l.b16 %v2972
  %v3115 = vunpack.c.l.b16 %v2973
  %v3116 = vunpack.c.l.b16 %v2974
  %v3117 = vunpack.c.l.b16 %v2975
  %v3118 = vunpack.c.l.b16 %v2976
  %v3119 = vunpack.c.l.b16 %v2977
  %v3120 = vunpack.c.l.b16 %v2978
  %v3121 = vunpack.c.l.b16 %v2979
  %v3122 = vunpack.c.l.b16 %v2980
  %v3123 = vunpack.c.l.b16 %v2981
  %v3124 = vunpack.c.l.b16 %v2982
  %v3125 = vunpack.c.l.b16 %v2983
  %v3126 = vunpack.c.l.b16 %v2984
  %v3127 = vunpack.c.l.b16 %v2985
  %v3128 = vunpack.c.l.b16 %v2986
  %v3129 = vunpack.c.l.b16 %v2987
  %v3130 = vunpack.c.l.b16 %v2988
  %v3131 = vunpack.c.l.b16 %v2989
  %v3132 = vunpack.c.l.b16 %v2990
  %v3133 = vunpack.c.l.b16 %v2991
  %v3134 = vunpack.c.l.b16 %v2992
  %v3135 = vunpack.c.l.b16 %v2993
  %v3136 = vunpack.c.l.b16 %v2994
  %v3137 = vunpack.c.l.b16 %v2995
  %v3138 = vunpack.c.l.b16 %v2996
  %v3139 = vunpack.c.l.b16 %v2997
  %v3140 = vunpack.c.l.b16 %v2998
  %v3141 = vunpack.c.l.b16 %v2999
  %v3142 = vunpack.c.l.b16 %v3000
  %v3143 = vunpack.c.l.b16 %v3001
  %v3144 = vpack.c.b16 %v3113, %v3112
  %v3145 = vpack.c.b16 %v3115, %v3114
  %v3146 = vpack.c.b16 %v3117, %v3116
  %v3147 = vpack.c.b16 %v3119, %v3118
  %v3148 = vpack.c.b16 %v3121, %v3120
  %v3149 = vpack.c.b16 %v3123, %v3122
  %v3150 = vpack.c.b16 %v3125, %v3124
  %v3151 = vpack.c.b16 %v3127, %v3126
  %v3152 = vpack.c.b16 %v3129, %v3128
  %v3153 = vpack.c.b16 %v3131, %v3130
  %v3154 = vpack.c.b16 %v3133, %v3132
  %v3155 = vpack.c.b16 %v3135, %v3134
  %v3156 = vpack.c.b16 %v3137, %v3136
  %v3157 = vpack.c.b16 %v3139, %v3138
  %v3158 = vpack.c.b16 %v3141, %v3140
  %v3159 = vpack.c.b16 %v3143, %v3142
  %3176 = vmatprep.subr.bf16.mxu0 0
  %3177 = vmatpush1.bf16.msra.mxu0 %v3144
  %3178 = vmatprep.subr.bf16.mxu0 0
  %3179 = vmatpush1.bf16.msra.mxu0 %v3145
  %3180 = vmatprep.subr.bf16.mxu0 0
  %3181 = vmatpush1.bf16.msra.mxu0 %v3146
  %3182 = vmatprep.subr.bf16.mxu0 0
  %3183 = vmatpush1.bf16.msra.mxu0 %v3147
  %3184 = vmatprep.subr.bf16.mxu0 0
  %3185 = vmatpush1.bf16.msra.mxu0 %v3148
  %3186 = vmatprep.subr.bf16.mxu0 0
  %3187 = vmatpush1.bf16.msra.mxu0 %v3149
  %3188 = vmatprep.subr.bf16.mxu0 0
  %3189 = vmatpush1.bf16.msra.mxu0 %v3150
  %3190 = vmatprep.subr.bf16.mxu0 0
  %3191 = vmatpush1.bf16.msra.mxu0 %v3151
  %3192 = vmatprep.subr.bf16.mxu0 0
  %3193 = vmatpush1.bf16.msra.mxu0 %v3152
  %3194 = vmatprep.subr.bf16.mxu0 0
  %3195 = vmatpush1.bf16.msra.mxu0 %v3153
  %3196 = vmatprep.subr.bf16.mxu0 0
  %3197 = vmatpush1.bf16.msra.mxu0 %v3154
  %3198 = vmatprep.subr.bf16.mxu0 0
  %3199 = vmatpush1.bf16.msra.mxu0 %v3155
  %3200 = vmatprep.subr.bf16.mxu0 0
  %3201 = vmatpush1.bf16.msra.mxu0 %v3156
  %3202 = vmatprep.subr.bf16.mxu0 0
  %3203 = vmatpush1.bf16.msra.mxu0 %v3157
  %3204 = vmatprep.subr.bf16.mxu0 0
  %3205 = vmatpush1.bf16.msra.mxu0 %v3158
  %3206 = vmatprep.subr.bf16.mxu0 0
  %3207 = vmatpush1.bf16.msra.mxu0 %v3159
  %3208 = vmatprep.mubr.bf16.mxu0 %v3077
  %3209 = vmatmul.mubr.bf16.gmra.mrb[0].mxu0 %v3076
  %v3210 = vpop.f32.mrb[0].mxu0
  %v3211 = vadd.f32 %v3007, %v3210
  %v3212 = vpop.f32.mrb[0].mxu0
  %v3213 = vpop.f32.mrb[0].mxu0
  %v3214 = vpop.f32.mrb[0].mxu0
  %3215 = vdwg.mxu0
  %v3216 = vmax.f32 %v3211, 0.0
  %v3217 = vpack.c.bf16 %v3216, %v3216
  %v3218 = vld [vmem:[%s9] sm:$0xf]
  %v3219 = vld [vmem:[%s9 + $0x4] sm:$0xf]
  %v3220 = vld [vmem:[%s9 + $0x8] sm:$0xf]
  %v3221 = vld [vmem:[%s9 + $0xc] sm:$0xf]
  %v3222 = vld [vmem:[%s9 + $0x10] sm:$0xf]
  %v3223 = vld [vmem:[%s9 + $0x14] sm:$0xf]
  %v3224 = vld [vmem:[%s9 + $0x18] sm:$0xf]
  %v3225 = vld [vmem:[%s9 + $0x1c] sm:$0xf]
  %v3226 = vld [vmem:[%s9 + $0x20] sm:$0xf]
  %v3227 = vld [vmem:[%s9 + $0x24] sm:$0xf]
  %v3228 = vld [vmem:[%s9 + $0x28] sm:$0xf]
  %v3229 = vld [vmem:[%s9 + $0x2c] sm:$0xf]
  %v3230 = vld [vmem:[%s9 + $0x30] sm:$0xf]
  %v3231 = vld [vmem:[%s9 + $0x34] sm:$0xf]
  %v3232 = vld [vmem:[%s9 + $0x38] sm:$0xf]
  %v3233 = vld [vmem:[%s9 + $0x3c] sm:$0xf]
  %v3234 = vld [vmem:[%s10] sm:$0x1]
  %v3236 = vlaneseq
  %v3237 = vshrl.u32 %v3236, 7
  %v3238 = vsub.s32 0, %v3237
  %v3239 = vrot.slane %v3234, %v3238
  %v3257 = vunpack.c.l.b16 %v3218
  %v3258 = vunpack.c.l.b16 %v3219
  %v3259 = vunpack.c.l.b16 %v3220
  %v3260 = vunpack.c.l.b16 %v3221
  %v3261 = vunpack.c.l.b16 %v3222
  %v3262 = vunpack.c.l.b16 %v3223
  %v3263 = vunpack.c.l.b16 %v3224
  %v3264 = vunpack.c.l.b16 %v3225
  %v3265 = vunpack.c.l.b16 %v3226
  %v3266 = vunpack.c.l.b16 %v3227
  %v3267 = vunpack.c.l.b16 %v3228
  %v3268 = vunpack.c.l.b16 %v3229
  %v3269 = vunpack.c.l.b16 %v3230
  %v3270 = vunpack.c.l.b16 %v3231
  %v3271 = vunpack.c.l.b16 %v3232
  %v3272 = vunpack.c.l.b16 %v3233
  %v3273 = vpack.c.b16 %v3258, %v3257
  %v3274 = vpack.c.b16 %v3260, %v3259
  %v3275 = vpack.c.b16 %v3262, %v3261
  %v3276 = vpack.c.b16 %v3264, %v3263
  %v3277 = vpack.c.b16 %v3266, %v3265
  %v3278 = vpack.c.b16 %v3268, %v3267
  %v3279 = vpack.c.b16 %v3270, %v3269
  %v3280 = vpack.c.b16 %v3272, %v3271
  %3289 = vmatprep.subr.bf16.mxu0 0
  %3290 = vmatpush1.bf16.msra.mxu0 %v3273
  %3291 = vmatprep.subr.bf16.mxu0 0
  %3292 = vmatpush1.bf16.msra.mxu0 %v3274
  %3293 = vmatprep.subr.bf16.mxu0 0
  %3294 = vmatpush1.bf16.msra.mxu0 %v3275
  %3295 = vmatprep.subr.bf16.mxu0 0
  %3296 = vmatpush1.bf16.msra.mxu0 %v3276
  %3297 = vmatprep.subr.bf16.mxu0 0
  %3298 = vmatpush1.bf16.msra.mxu0 %v3277
  %3299 = vmatprep.subr.bf16.mxu0 0
  %3300 = vmatpush1.bf16.msra.mxu0 %v3278
  %3301 = vmatprep.subr.bf16.mxu0 0
  %3302 = vmatpush1.bf16.msra.mxu0 %v3279
  %3303 = vmatprep.subr.bf16.mxu0 0
  %3304 = vmatpush1.bf16.msra.mxu0 %v3280
  %3305 = vmatprep.subr.bf16.mxu0 0
  %3306 = vmatpush1.bf16.msra.mxu0 0
  %3307 = vmatprep.subr.bf16.mxu0 0
  %3308 = vmatpush1.bf16.msra.mxu0 0
  %3309 = vmatprep.subr.bf16.mxu0 0
  %3310 = vmatpush1.bf16.msra.mxu0 0
  %3311 = vmatprep.subr.bf16.mxu0 0
  %3312 = vmatpush1.bf16.msra.mxu0 0
  %3313 = vmatprep.subr.bf16.mxu0 0
  %3314 = vmatpush1.bf16.msra.mxu0 0
  %3315 = vmatprep.subr.bf16.mxu0 0
  %3316 = vmatpush1.bf16.msra.mxu0 0
  %3317 = vmatprep.subr.bf16.mxu0 0
  %3318 = vmatpush1.bf16.msra.mxu0 0
  %3319 = vmatprep.subr.bf16.mxu0 0
  %3320 = vmatpush1.bf16.msra.mxu0 0
  %3321 = vmatprep.mubr.bf16.mxu0 0
  %3322 = vmatmul.mubr.bf16.gmra.mrb[0].mxu0 %v3217
  %v3323 = vpop.f32.mrb[0].mxu0
  %v3324 = vadd.f32 %v3239, %v3323
  %v3325 = vpop.f32.mrb[0].mxu0
  %v3326 = vpop.f32.mrb[0].mxu0
  %v3327 = vpop.f32.mrb[0].mxu0
  %3328 = vdwg.mxu0
  %v3329 = vmax.f32 %v3324, 0.0
  %v3330 = vpack.c.bf16 %v3329, %v3329
  %v3331 = vld [vmem:[%s11] sm:$0xf]
  %v3332 = vld [vmem:[%s11 + $0x4] sm:$0xf]
  %v3333 = vld [vmem:[%s11 + $0x8] sm:$0xf]
  %v3334 = vld [vmem:[%s11 + $0xc] sm:$0xf]
  %v3335 = vld [vmem:[%s11 + $0x10] sm:$0xf]
  %v3336 = vld [vmem:[%s11 + $0x14] sm:$0xf]
  %v3337 = vld [vmem:[%s11 + $0x18] sm:$0xf]
  %v3338 = vld [vmem:[%s11 + $0x1c] sm:$0xf]
  %v3339 = vld [vmem:[%s11 + $0x20] sm:$0xf]
  %v3340 = vld [vmem:[%s11 + $0x24] sm:$0xf]
  %v3341 = vld [vmem:[%s11 + $0x28] sm:$0xf]
  %v3342 = vld [vmem:[%s11 + $0x2c] sm:$0xf]
  %v3343 = vld [vmem:[%s11 + $0x30] sm:$0xf]
  %v3344 = vld [vmem:[%s11 + $0x34] sm:$0xf]
  %v3345 = vld [vmem:[%s11 + $0x38] sm:$0xf]
  %v3346 = vld [vmem:[%s11 + $0x3c] sm:$0xf]
  %v3347 = vld [vmem:[%s12] sm:$0x1]
  %v3349 = vlaneseq
  %v3350 = vshrl.u32 %v3349, 7
  %v3351 = vsub.s32 0, %v3350
  %v3352 = vrot.slane %v3347, %v3351
  %v3370 = vunpack.c.l.b16 %v3331
  %v3371 = vunpack.c.l.b16 %v3332
  %v3372 = vunpack.c.l.b16 %v3333
  %v3373 = vunpack.c.l.b16 %v3334
  %v3374 = vunpack.c.l.b16 %v3335
  %v3375 = vunpack.c.l.b16 %v3336
  %v3376 = vunpack.c.l.b16 %v3337
  %v3377 = vunpack.c.l.b16 %v3338
  %v3378 = vunpack.c.l.b16 %v3339
  %v3379 = vunpack.c.l.b16 %v3340
  %v3380 = vunpack.c.l.b16 %v3341
  %v3381 = vunpack.c.l.b16 %v3342
  %v3382 = vunpack.c.l.b16 %v3343
  %v3383 = vunpack.c.l.b16 %v3344
  %v3384 = vunpack.c.l.b16 %v3345
  %v3385 = vunpack.c.l.b16 %v3346
  %v3386 = vpack.c.b16 %v3371, %v3370
  %v3387 = vpack.c.b16 %v3373, %v3372
  %v3388 = vpack.c.b16 %v3375, %v3374
  %v3389 = vpack.c.b16 %v3377, %v3376
  %v3390 = vpack.c.b16 %v3379, %v3378
  %v3391 = vpack.c.b16 %v3381, %v3380
  %v3392 = vpack.c.b16 %v3383, %v3382
  %v3393 = vpack.c.b16 %v3385, %v3384
  %3402 = vmatprep.subr.bf16.mxu0 0
  %3403 = vmatpush1.bf16.msra.mxu0 %v3386
  %3404 = vmatprep.subr.bf16.mxu0 0
  %3405 = vmatpush1.bf16.msra.mxu0 %v3387
  %3406 = vmatprep.subr.bf16.mxu0 0
  %3407 = vmatpush1.bf16.msra.mxu0 %v3388
  %3408 = vmatprep.subr.bf16.mxu0 0
  %3409 = vmatpush1.bf16.msra.mxu0 %v3389
  %3410 = vmatprep.subr.bf16.mxu0 0
  %3411 = vmatpush1.bf16.msra.mxu0 %v3390
  %3412 = vmatprep.subr.bf16.mxu0 0
  %3413 = vmatpush1.bf16.msra.mxu0 %v3391
  %3414 = vmatprep.subr.bf16.mxu0 0
  %3415 = vmatpush1.bf16.msra.mxu0 %v3392
  %3416 = vmatprep.subr.bf16.mxu0 0
  %3417 = vmatpush1.bf16.msra.mxu0 %v3393
  %3418 = vmatprep.subr.bf16.mxu0 0
  %3419 = vmatpush1.bf16.msra.mxu0 0
  %3420 = vmatprep.subr.bf16.mxu0 0
  %3421 = vmatpush1.bf16.msra.mxu0 0
  %3422 = vmatprep.subr.bf16.mxu0 0
  %3423 = vmatpush1.bf16.msra.mxu0 0
  %3424 = vmatprep.subr.bf16.mxu0 0
  %3425 = vmatpush1.bf16.msra.mxu0 0
  %3426 = vmatprep.subr.bf16.mxu0 0
  %3427 = vmatpush1.bf16.msra.mxu0 0
  %3428 = vmatprep.subr.bf16.mxu0 0
  %3429 = vmatpush1.bf16.msra.mxu0 0
  %3430 = vmatprep.subr.bf16.mxu0 0
  %3431 = vmatpush1.bf16.msra.mxu0 0
  %3432 = vmatprep.subr.bf16.mxu0 0
  %3433 = vmatpush1.bf16.msra.mxu0 0
  %3434 = vmatprep.mubr.bf16.mxu0 0
  %3435 = vmatmul.mubr.bf16.gmra.mrb[0].mxu0 %v3330
  %v3436 = vpop.f32.mrb[0].mxu0
  %v3437 = vadd.f32 %v3352, %v3436
  %v3438 = vpop.f32.mrb[0].mxu0
  %v3439 = vpop.f32.mrb[0].mxu0
  %v3440 = vpop.f32.mrb[0].mxu0
  %3441 = vdwg.mxu0
  %3442 = vst [vmem:[%s13] sm:$0xff] %v3437
  // Predicated region
  $region54: #{simple_cnn_forward.1} parent=0 // pred_check
    _
  $region55: #{simple_cnn_forward.1} parent=0 // pred_check_branch
    %3444 = sbr.rel (0) target = $region57
  $region56: #{simple_cnn_forward.1} parent=0 // pred_region
    _
  $region57: #{simple_cnn_forward.1} parent=0 // pred_fallthru
    _
  // Predicated region
  $region58: #{simple_cnn_forward.1} parent=0 // pred_check
    _
  $region59: #{simple_cnn_forward.1} parent=0 // pred_check_branch
    %3446 = sbr.rel (0) target = $region61
  $region60: #{simple_cnn_forward.1} parent=0 // pred_region
    _
  $region61: #{simple_cnn_forward.1} parent=0 // pred_fallthru
    _

</llo_original>
